<compile_context>
chip_gen: v7x
topology: tpu7x:2x2x1
jax: 0.10.0
libtpu: 0.0.40
codegen_flags: <defaults>
</compile_context>

<pallas_src>
import functools

import jax
import jax.numpy as jnp
from jax.experimental import pallas as pl
from jax.experimental.pallas import tpu as pltpu

LANE = 128


def _round_up(n, m):
    return ((n + m - 1) // m) * m


def _quantize_per_channel(w):
    """Symmetric per-output-channel int8 quantization of an [in, out] weight."""
    amax = jnp.max(jnp.abs(w), axis=0, keepdims=True)            # (1, out)
    scale = jnp.maximum(amax, 1e-12) / 127.0
    q = jnp.clip(jnp.round(w / scale), -127.0, 127.0).astype(jnp.int8)
    return q, scale.astype(jnp.float32)


def _fused_mlp_kernel(x_ref,
                      w1_ref, s1_ref, b1_ref,
                      w2_ref, s2_ref, b2_ref,
                      w3_ref, s3_ref, b3_ref,
                      w4_ref, s4_ref, b4_ref,
                      w5_ref, s5_ref, b5_ref,
                      w6_ref, s6_ref, b6_ref,
                      o_ref, acc2_ref):
    """fc1 streamed over its N dim; fc2 accumulated per tile; fc3..fc6 epilogue."""
    j = pl.program_id(0)

    @pl.when(j == 0)
    def _():
        acc2_ref[...] = jnp.zeros_like(acc2_ref)

    # fc1 N-tile: finish bias + ReLU for this slice of layer-1 outputs.
    # int8 weight tile -> bf16 on the VPU; per-channel scale on the f32 result.
    h1 = jnp.dot(x_ref[...], w1_ref[...].astype(jnp.bfloat16),
                 preferred_element_type=jnp.float32)
    h1 = jnp.maximum(h1 * s1_ref[...] + b1_ref[...], 0.0)

    # fc2 partial sum: this fc1 N-tile contracts with the matching w2 row-slice.
    acc2_ref[...] += jnp.dot(h1.astype(jnp.bfloat16),
                             w2_ref[...].astype(jnp.bfloat16),
                             preferred_element_type=jnp.float32)

    @pl.when(j == pl.num_programs(0) - 1)
    def _():
        # fc2 scale + bias + ReLU.  Dropout(p=0.2) is identity in eval mode.
        h = jnp.maximum(acc2_ref[...] * s2_ref[...] + b2_ref[...], 0.0)
        # fc3..fc5: Linear + ReLU on VMEM-resident int8 weights.
        for w_ref, s_ref, b_ref in ((w3_ref, s3_ref, b3_ref),
                                    (w4_ref, s4_ref, b4_ref),
                                    (w5_ref, s5_ref, b5_ref)):
            h = jnp.dot(h.astype(jnp.bfloat16), w_ref[...].astype(jnp.bfloat16),
                        preferred_element_type=jnp.float32)
            h = jnp.maximum(h * s_ref[...] + b_ref[...], 0.0)
        # fc6: no activation (output is lane-padded; the wrapper slices it).
        out = jnp.dot(h.astype(jnp.bfloat16), w6_ref[...].astype(jnp.bfloat16),
                      preferred_element_type=jnp.float32)
        o_ref[...] = (out * s6_ref[...] + b6_ref[...]).astype(o_ref.dtype)


def linear_net_forward(x_nchw, params, num_classes, *, tn1=256):
    """Forward pass of LinearNet.  x_nchw: [B, 3, 32, 32] f32."""
    B = x_nchw.shape[0]
    x = x_nchw.reshape(B, -1).astype(jnp.bfloat16)   # == torch .view(B, -1)
    K = x.shape[1]
    assert K == 3072, K

    ((w1, s1, b1), (w2, s2, b2), (w3, s3, b3),
     (w4, s4, b4), (w5, s5, b5), (w6, s6, b6)) = params
    n1 = w1.shape[1]
    n2 = w2.shape[1]
    n_out_pad = w6.shape[1]
    assert n1 % tn1 == 0, (n1, tn1)

    def resident(arr):
        # Whole array, same block every grid step -> fetched once, VMEM-resident.
        return pl.BlockSpec(tuple(arr.shape), lambda j: (0, 0))

    out = pl.pallas_call(
        _fused_mlp_kernel,
        out_shape=jax.ShapeDtypeStruct((B, n_out_pad), jnp.float32),
        grid_spec=pltpu.PrefetchScalarGridSpec(
            num_scalar_prefetch=0,
            grid=(n1 // tn1,),                                   # fc1 N tiles
            in_specs=[
                resident(x),                                     # x, bf16 resident
                pl.BlockSpec((K, tn1), lambda j: (0, j)),        # fc1 weight N-tile
                pl.BlockSpec((1, tn1), lambda j: (0, j)),        # fc1 scale tile
                pl.BlockSpec((1, tn1), lambda j: (0, j)),        # fc1 bias tile
                pl.BlockSpec((tn1, n2), lambda j: (j, 0)),       # fc2 weight row-slice
                resident(s2), resident(b2),
                resident(w3), resident(s3), resident(b3),
                resident(w4), resident(s4), resident(b4),
                resident(w5), resident(s5), resident(b5),
                resident(w6), resident(s6), resident(b6),
            ],
            out_specs=pl.BlockSpec((B, n_out_pad), lambda j: (0, 0)),
            scratch_shapes=[pltpu.VMEM((B, n2), jnp.float32)],   # fc2 accumulator
        ),
        compiler_params=pltpu.CompilerParams(
            dimension_semantics=("arbitrary",),                  # reduction for fc2/out
            vmem_limit_bytes=32 * 1024 * 1024,                   # explicit, portable
        ),
    )(x, w1, s1, b1, w2, s2, b2, w3, s3, b3, w4, s4, b4, w5, s5, b5, w6, s6, b6)
    return out[:, :num_classes]


def init_params(key, num_classes):
    """PyTorch-style uniform(-1/sqrt(fan_in), 1/sqrt(fan_in)) init, then
    symmetric per-output-channel int8 quantization.

    Each layer is (q_int8 [in, out], scale_f32 [1, out], bias_f32 [1, out]).
    The final layer's output axis is zero-padded to lane width (128); the
    wrapper slices the result back to num_classes.
    """
    dims = [3072, 1024, 768, 512, 384, 256, num_classes]
    ncp = _round_up(max(num_classes, 1), LANE)
    params = []
    for i in range(6):
        fan_in, fan_out = dims[i], dims[i + 1]
        key, kw, kb = jax.random.split(key, 3)
        bound = float(fan_in) ** -0.5
        w = jax.random.uniform(kw, (fan_in, fan_out), jnp.float32, -bound, bound)
        b = jax.random.uniform(kb, (1, fan_out), jnp.float32, -bound, bound)
        q, s = _quantize_per_channel(w)
        if i == 5:  # pad final layer's output axis to lane width
            pad = ncp - fan_out
            q = jnp.pad(q, ((0, 0), (0, pad)))
            s = jnp.pad(s, ((0, 0), (0, pad)), constant_values=1.0)
            b = jnp.pad(b, ((0, 0), (0, pad)))
        params.append((q, s, b))
    return params


if __name__ == "__main__":
    num_classes = 10
    batch = 8  # small demo batch; larger B amortizes the weight stream further

    key = jax.random.PRNGKey(0)
    key, kx = jax.random.split(key)
    x = jax.random.normal(kx, (batch, 3, 32, 32), jnp.float32)

    params = init_params(key, num_classes)

    fwd = jax.jit(functools.partial(linear_net_forward, num_classes=num_classes))
    out = jax.block_until_ready(fwd(x, params))

    # Reference in plain JAX with identical numerics: bf16 activations / bf16
    # dequantized int8 weights into the MXU, f32 accumulation, per-channel
    # scale + bias + ReLU in f32, eval-mode dropout.
    h = x.reshape(batch, -1).astype(jnp.bfloat16)
    for i in range(5):
        q, s, b = params[i]
        a = jnp.dot(h, q.astype(jnp.bfloat16),
                    preferred_element_type=jnp.float32)
        h = jnp.maximum(a * s + b, 0.0).astype(jnp.bfloat16)
    q6, s6, b6 = params[5]
    ref = (jnp.dot(h, q6.astype(jnp.bfloat16),
                   preferred_element_type=jnp.float32) * s6 + b6)[:, :num_classes]

    assert out.shape == (batch, num_classes), out.shape
    assert jnp.allclose(out, ref, atol=2e-3, rtol=2e-3), "mismatch vs reference"

    print("KERNEL_OK")
</pallas_src>

<mosaic_0001>
module attributes {stable_mosaic.version = 11 : i64} {
  func.func @_fused_mlp_kernel(%arg0: i32, %arg1: memref<8x3072xbf16, #tpu.memory_space<vmem>>, %arg2: memref<3072x256xi8, #tpu.memory_space<vmem>>, %arg3: memref<1x256xf32, #tpu.memory_space<vmem>>, %arg4: memref<1x256xf32, #tpu.memory_space<vmem>>, %arg5: memref<256x768xi8, #tpu.memory_space<vmem>>, %arg6: memref<1x768xf32, #tpu.memory_space<vmem>>, %arg7: memref<1x768xf32, #tpu.memory_space<vmem>>, %arg8: memref<768x512xi8, #tpu.memory_space<vmem>>, %arg9: memref<1x512xf32, #tpu.memory_space<vmem>>, %arg10: memref<1x512xf32, #tpu.memory_space<vmem>>, %arg11: memref<512x384xi8, #tpu.memory_space<vmem>>, %arg12: memref<1x384xf32, #tpu.memory_space<vmem>>, %arg13: memref<1x384xf32, #tpu.memory_space<vmem>>, %arg14: memref<384x256xi8, #tpu.memory_space<vmem>>, %arg15: memref<1x256xf32, #tpu.memory_space<vmem>>, %arg16: memref<1x256xf32, #tpu.memory_space<vmem>>, %arg17: memref<256x128xi8, #tpu.memory_space<vmem>>, %arg18: memref<1x128xf32, #tpu.memory_space<vmem>>, %arg19: memref<1x128xf32, #tpu.memory_space<vmem>>, %arg20: memref<8x128xf32, #tpu.memory_space<vmem>>, %arg21: memref<8x768xf32, #tpu.memory_space<vmem>>) attributes {dimension_semantics = [#tpu.dimension_semantics<arbitrary>], iteration_bounds = array<i64: 4>, scalar_prefetch = 0 : i64, scratch_operands = 1 : i64, tpu.core_type = #tpu.core_type<tc>, window_params = [{pipeline_mode = #tpu.pipeline_mode<synchronous>, transform_indices = @transform_0, window_bounds = array<i64: 8, 3072>}, {transform_indices = @transform_1, window_bounds = array<i64: 3072, 256>}, {transform_indices = @transform_2, window_bounds = array<i64: 1, 256>}, {transform_indices = @transform_3, window_bounds = array<i64: 1, 256>}, {transform_indices = @transform_4, window_bounds = array<i64: 256, 768>}, {pipeline_mode = #tpu.pipeline_mode<synchronous>, transform_indices = @transform_5, window_bounds = array<i64: 1, 768>}, {pipeline_mode = #tpu.pipeline_mode<synchronous>, transform_indices = @transform_6, window_bounds = array<i64: 1, 768>}, {pipeline_mode = #tpu.pipeline_mode<synchronous>, transform_indices = @transform_7, window_bounds = array<i64: 768, 512>}, {pipeline_mode = #tpu.pipeline_mode<synchronous>, transform_indices = @transform_8, window_bounds = array<i64: 1, 512>}, {pipeline_mode = #tpu.pipeline_mode<synchronous>, transform_indices = @transform_9, window_bounds = array<i64: 1, 512>}, {pipeline_mode = #tpu.pipeline_mode<synchronous>, transform_indices = @transform_10, window_bounds = array<i64: 512, 384>}, {pipeline_mode = #tpu.pipeline_mode<synchronous>, transform_indices = @transform_11, window_bounds = array<i64: 1, 384>}, {pipeline_mode = #tpu.pipeline_mode<synchronous>, transform_indices = @transform_12, window_bounds = array<i64: 1, 384>}, {pipeline_mode = #tpu.pipeline_mode<synchronous>, transform_indices = @transform_13, window_bounds = array<i64: 384, 256>}, {pipeline_mode = #tpu.pipeline_mode<synchronous>, transform_indices = @transform_14, window_bounds = array<i64: 1, 256>}, {pipeline_mode = #tpu.pipeline_mode<synchronous>, transform_indices = @transform_15, window_bounds = array<i64: 1, 256>}, {pipeline_mode = #tpu.pipeline_mode<synchronous>, transform_indices = @transform_16, window_bounds = array<i64: 256, 128>}, {pipeline_mode = #tpu.pipeline_mode<synchronous>, transform_indices = @transform_17, window_bounds = array<i64: 1, 128>}, {pipeline_mode = #tpu.pipeline_mode<synchronous>, transform_indices = @transform_18, window_bounds = array<i64: 1, 128>}, {pipeline_mode = #tpu.pipeline_mode<synchronous>, transform_indices = @transform_19, window_bounds = array<i64: 8, 128>}]} {
    %c0_i32 = arith.constant 0 : i32
    %0 = arith.cmpi eq, %arg0, %c0_i32 : i32
    %1 = arith.extui %0 : i1 to i32
    %c0_i32_0 = arith.constant 0 : i32
    %2 = arith.cmpi ne, %1, %c0_i32_0 : i32
    scf.if %2 {
      %cst_17 = arith.constant 0.000000e+00 : f32
      %25 = vector.broadcast %cst_17 : f32 to vector<8x768xf32>
      %c0_18 = arith.constant 0 : index
      %c0_19 = arith.constant 0 : index
      %26 = vector.load %arg21[%c0_18, %c0_19] : memref<8x768xf32, #tpu.memory_space<vmem>>, vector<8x768xf32>
      tpu.vector_store %arg21[%c0_18, %c0_19], %25 {strides = array<i32>} : memref<8x768xf32, #tpu.memory_space<vmem>>, vector<8x768xf32>,
    } else {
    }
    %c0 = arith.constant 0 : index
    %c0_1 = arith.constant 0 : index
    %3 = vector.load %arg1[%c0, %c0_1] : memref<8x3072xbf16, #tpu.memory_space<vmem>>, vector<8x3072xbf16>
    %c0_2 = arith.constant 0 : index
    %c0_3 = arith.constant 0 : index
    %4 = vector.load %arg2[%c0_2, %c0_3] : memref<3072x256xi8, #tpu.memory_space<vmem>>, vector<3072x256xi8>
    %5 = arith.sitofp %4 : vector<3072x256xi8> to vector<3072x256xbf16>
    %cst = arith.constant dense<0.000000e+00> : vector<8x256xf32>
    %6 = tpu.matmul %3, %5, %cst {dimension_numbers = #tpu.dot_dimension_numbers<[1], [0], [0], [1], [0, 0, 1, 1], [], []>} : vector<8x3072xbf16>, vector<3072x256xbf16>, vector<8x256xf32> -> vector<8x256xf32>
    %c0_4 = arith.constant 0 : index
    %c0_5 = arith.constant 0 : index
    %7 = vector.load %arg3[%c0_4, %c0_5] : memref<1x256xf32, #tpu.memory_space<vmem>>, vector<1x256xf32>
    %8 = vector.broadcast %7 : vector<1x256xf32> to vector<8x256xf32>
    %9 = arith.mulf %6, %8 : vector<8x256xf32>
    %c0_6 = arith.constant 0 : index
    %c0_7 = arith.constant 0 : index
    %10 = vector.load %arg4[%c0_6, %c0_7] : memref<1x256xf32, #tpu.memory_space<vmem>>, vector<1x256xf32>
    %11 = vector.broadcast %10 : vector<1x256xf32> to vector<8x256xf32>
    %12 = arith.addf %9, %11 : vector<8x256xf32>
    %cst_8 = arith.constant 0.000000e+00 : f32
    %13 = vector.broadcast %cst_8 : f32 to vector<8x256xf32>
    %14 = arith.maximumf %12, %13 : vector<8x256xf32>
    %c0_9 = arith.constant 0 : index
    %c0_10 = arith.constant 0 : index
    %15 = vector.load %arg21[%c0_9, %c0_10] : memref<8x768xf32, #tpu.memory_space<vmem>>, vector<8x768xf32>
    %16 = arith.truncf %14 : vector<8x256xf32> to vector<8x256xbf16>
    %c0_11 = arith.constant 0 : index
    %c0_12 = arith.constant 0 : index
    %17 = vector.load %arg5[%c0_11, %c0_12] : memref<256x768xi8, #tpu.memory_space<vmem>>, vector<256x768xi8>
    %18 = arith.sitofp %17 : vector<256x768xi8> to vector<256x768xbf16>
    %cst_13 = arith.constant dense<0.000000e+00> : vector<8x768xf32>
    %19 = tpu.matmul %16, %18, %cst_13 {dimension_numbers = #tpu.dot_dimension_numbers<[1], [0], [0], [1], [0, 0, 1, 1], [], []>} : vector<8x256xbf16>, vector<256x768xbf16>, vector<8x768xf32> -> vector<8x768xf32>
    %20 = arith.addf %15, %19 : vector<8x768xf32>
    %c0_14 = arith.constant 0 : index
    %c0_15 = arith.constant 0 : index
    %21 = vector.load %arg21[%c0_14, %c0_15] : memref<8x768xf32, #tpu.memory_space<vmem>>, vector<8x768xf32>
    tpu.vector_store %arg21[%c0_14, %c0_15], %20 {strides = array<i32>} : memref<8x768xf32, #tpu.memory_space<vmem>>, vector<8x768xf32>,
    %c3_i32 = arith.constant 3 : i32
    %22 = arith.cmpi eq, %arg0, %c3_i32 : i32
    %23 = arith.extui %22 : i1 to i32
    %c0_i32_16 = arith.constant 0 : i32
    %24 = arith.cmpi ne, %23, %c0_i32_16 : i32
    scf.if %24 {
      %c0_17 = arith.constant 0 : index
      %c0_18 = arith.constant 0 : index
      %25 = vector.load %arg21[%c0_17, %c0_18] : memref<8x768xf32, #tpu.memory_space<vmem>>, vector<8x768xf32>
      %c0_19 = arith.constant 0 : index
      %c0_20 = arith.constant 0 : index
      %26 = vector.load %arg6[%c0_19, %c0_20] : memref<1x768xf32, #tpu.memory_space<vmem>>, vector<1x768xf32>
      %27 = vector.broadcast %26 : vector<1x768xf32> to vector<8x768xf32>
      %28 = arith.mulf %25, %27 : vector<8x768xf32>
      %c0_21 = arith.constant 0 : index
      %c0_22 = arith.constant 0 : index
      %29 = vector.load %arg7[%c0_21, %c0_22] : memref<1x768xf32, #tpu.memory_space<vmem>>, vector<1x768xf32>
      %30 = vector.broadcast %29 : vector<1x768xf32> to vector<8x768xf32>
      %31 = arith.addf %28, %30 : vector<8x768xf32>
      %cst_23 = arith.constant 0.000000e+00 : f32
      %32 = vector.broadcast %cst_23 : f32 to vector<8x768xf32>
      %33 = arith.maximumf %31, %32 : vector<8x768xf32>
      %34 = arith.truncf %33 : vector<8x768xf32> to vector<8x768xbf16>
      %c0_24 = arith.constant 0 : index
      %c0_25 = arith.constant 0 : index
      %35 = vector.load %arg8[%c0_24, %c0_25] : memref<768x512xi8, #tpu.memory_space<vmem>>, vector<768x512xi8>
      %36 = arith.sitofp %35 : vector<768x512xi8> to vector<768x512xbf16>
      %cst_26 = arith.constant dense<0.000000e+00> : vector<8x512xf32>
      %37 = tpu.matmul %34, %36, %cst_26 {dimension_numbers = #tpu.dot_dimension_numbers<[1], [0], [0], [1], [0, 0, 1, 1], [], []>} : vector<8x768xbf16>, vector<768x512xbf16>, vector<8x512xf32> -> vector<8x512xf32>
      %c0_27 = arith.constant 0 : index
      %c0_28 = arith.constant 0 : index
      %38 = vector.load %arg9[%c0_27, %c0_28] : memref<1x512xf32, #tpu.memory_space<vmem>>, vector<1x512xf32>
      %39 = vector.broadcast %38 : vector<1x512xf32> to vector<8x512xf32>
      %40 = arith.mulf %37, %39 : vector<8x512xf32>
      %c0_29 = arith.constant 0 : index
      %c0_30 = arith.constant 0 : index
      %41 = vector.load %arg10[%c0_29, %c0_30] : memref<1x512xf32, #tpu.memory_space<vmem>>, vector<1x512xf32>
      %42 = vector.broadcast %41 : vector<1x512xf32> to vector<8x512xf32>
      %43 = arith.addf %40, %42 : vector<8x512xf32>
      %cst_31 = arith.constant 0.000000e+00 : f32
      %44 = vector.broadcast %cst_31 : f32 to vector<8x512xf32>
      %45 = arith.maximumf %43, %44 : vector<8x512xf32>
      %46 = arith.truncf %45 : vector<8x512xf32> to vector<8x512xbf16>
      %c0_32 = arith.constant 0 : index
      %c0_33 = arith.constant 0 : index
      %47 = vector.load %arg11[%c0_32, %c0_33] : memref<512x384xi8, #tpu.memory_space<vmem>>, vector<512x384xi8>
      %48 = arith.sitofp %47 : vector<512x384xi8> to vector<512x384xbf16>
      %cst_34 = arith.constant dense<0.000000e+00> : vector<8x384xf32>
      %49 = tpu.matmul %46, %48, %cst_34 {dimension_numbers = #tpu.dot_dimension_numbers<[1], [0], [0], [1], [0, 0, 1, 1], [], []>} : vector<8x512xbf16>, vector<512x384xbf16>, vector<8x384xf32> -> vector<8x384xf32>
      %c0_35 = arith.constant 0 : index
      %c0_36 = arith.constant 0 : index
      %50 = vector.load %arg12[%c0_35, %c0_36] : memref<1x384xf32, #tpu.memory_space<vmem>>, vector<1x384xf32>
      %51 = vector.broadcast %50 : vector<1x384xf32> to vector<8x384xf32>
      %52 = arith.mulf %49, %51 : vector<8x384xf32>
      %c0_37 = arith.constant 0 : index
      %c0_38 = arith.constant 0 : index
      %53 = vector.load %arg13[%c0_37, %c0_38] : memref<1x384xf32, #tpu.memory_space<vmem>>, vector<1x384xf32>
      %54 = vector.broadcast %53 : vector<1x384xf32> to vector<8x384xf32>
      %55 = arith.addf %52, %54 : vector<8x384xf32>
      %cst_39 = arith.constant 0.000000e+00 : f32
      %56 = vector.broadcast %cst_39 : f32 to vector<8x384xf32>
      %57 = arith.maximumf %55, %56 : vector<8x384xf32>
      %58 = arith.truncf %57 : vector<8x384xf32> to vector<8x384xbf16>
      %c0_40 = arith.constant 0 : index
      %c0_41 = arith.constant 0 : index
      %59 = vector.load %arg14[%c0_40, %c0_41] : memref<384x256xi8, #tpu.memory_space<vmem>>, vector<384x256xi8>
      %60 = arith.sitofp %59 : vector<384x256xi8> to vector<384x256xbf16>
      %cst_42 = arith.constant dense<0.000000e+00> : vector<8x256xf32>
      %61 = tpu.matmul %58, %60, %cst_42 {dimension_numbers = #tpu.dot_dimension_numbers<[1], [0], [0], [1], [0, 0, 1, 1], [], []>} : vector<8x384xbf16>, vector<384x256xbf16>, vector<8x256xf32> -> vector<8x256xf32>
      %c0_43 = arith.constant 0 : index
      %c0_44 = arith.constant 0 : index
      %62 = vector.load %arg15[%c0_43, %c0_44] : memref<1x256xf32, #tpu.memory_space<vmem>>, vector<1x256xf32>
      %63 = vector.broadcast %62 : vector<1x256xf32> to vector<8x256xf32>
      %64 = arith.mulf %61, %63 : vector<8x256xf32>
      %c0_45 = arith.constant 0 : index
      %c0_46 = arith.constant 0 : index
      %65 = vector.load %arg16[%c0_45, %c0_46] : memref<1x256xf32, #tpu.memory_space<vmem>>, vector<1x256xf32>
      %66 = vector.broadcast %65 : vector<1x256xf32> to vector<8x256xf32>
      %67 = arith.addf %64, %66 : vector<8x256xf32>
      %cst_47 = arith.constant 0.000000e+00 : f32
      %68 = vector.broadcast %cst_47 : f32 to vector<8x256xf32>
      %69 = arith.maximumf %67, %68 : vector<8x256xf32>
      %70 = arith.truncf %69 : vector<8x256xf32> to vector<8x256xbf16>
      %c0_48 = arith.constant 0 : index
      %c0_49 = arith.constant 0 : index
      %71 = vector.load %arg17[%c0_48, %c0_49] : memref<256x128xi8, #tpu.memory_space<vmem>>, vector<256x128xi8>
      %72 = arith.sitofp %71 : vector<256x128xi8> to vector<256x128xbf16>
      %cst_50 = arith.constant dense<0.000000e+00> : vector<8x128xf32>
      %73 = tpu.matmul %70, %72, %cst_50 {dimension_numbers = #tpu.dot_dimension_numbers<[1], [0], [0], [1], [0, 0, 1, 1], [], []>} : vector<8x256xbf16>, vector<256x128xbf16>, vector<8x128xf32> -> vector<8x128xf32>
      %c0_51 = arith.constant 0 : index
      %c0_52 = arith.constant 0 : index
      %74 = vector.load %arg18[%c0_51, %c0_52] : memref<1x128xf32, #tpu.memory_space<vmem>>, vector<1x128xf32>
      %75 = vector.broadcast %74 : vector<1x128xf32> to vector<8x128xf32>
      %76 = arith.mulf %73, %75 : vector<8x128xf32>
      %c0_53 = arith.constant 0 : index
      %c0_54 = arith.constant 0 : index
      %77 = vector.load %arg19[%c0_53, %c0_54] : memref<1x128xf32, #tpu.memory_space<vmem>>, vector<1x128xf32>
      %78 = vector.broadcast %77 : vector<1x128xf32> to vector<8x128xf32>
      %79 = arith.addf %76, %78 : vector<8x128xf32>
      %c0_55 = arith.constant 0 : index
      %c0_56 = arith.constant 0 : index
      %80 = vector.load %arg20[%c0_55, %c0_56] : memref<8x128xf32, #tpu.memory_space<vmem>>, vector<8x128xf32>
      tpu.vector_store %arg20[%c0_55, %c0_56], %79 {strides = array<i32>} : memref<8x128xf32, #tpu.memory_space<vmem>>, vector<8x128xf32>,
    } else {
    }
    return
  }
  func.func @transform_0(%arg0: i32) -> (i32, i32) {
    %c0_i32 = arith.constant 0 : i32
    %c0_i32_0 = arith.constant 0 : i32
    %c0_i32_1 = arith.constant 0 : i32
    return %c0_i32, %c0_i32_0 : i32, i32
  }
  func.func @transform_1(%arg0: i32) -> (i32, i32) {
    %c0_i32 = arith.constant 0 : i32
    %c0_i32_0 = arith.constant 0 : i32
    return %c0_i32, %arg0 : i32, i32
  }
  func.func @transform_2(%arg0: i32) -> (i32, i32) {
    %c0_i32 = arith.constant 0 : i32
    %c0_i32_0 = arith.constant 0 : i32
    return %c0_i32, %arg0 : i32, i32
  }
  func.func @transform_3(%arg0: i32) -> (i32, i32) {
    %c0_i32 = arith.constant 0 : i32
    %c0_i32_0 = arith.constant 0 : i32
    return %c0_i32, %arg0 : i32, i32
  }
  func.func @transform_4(%arg0: i32) -> (i32, i32) {
    %c0_i32 = arith.constant 0 : i32
    %c0_i32_0 = arith.constant 0 : i32
    return %arg0, %c0_i32 : i32, i32
  }
  func.func @transform_5(%arg0: i32) -> (i32, i32) {
    %c0_i32 = arith.constant 0 : i32
    %c0_i32_0 = arith.constant 0 : i32
    %c0_i32_1 = arith.constant 0 : i32
    return %c0_i32, %c0_i32_0 : i32, i32
  }
  func.func @transform_6(%arg0: i32) -> (i32, i32) {
    %c0_i32 = arith.constant 0 : i32
    %c0_i32_0 = arith.constant 0 : i32
    %c0_i32_1 = arith.constant 0 : i32
    return %c0_i32, %c0_i32_0 : i32, i32
  }
  func.func @transform_7(%arg0: i32) -> (i32, i32) {
    %c0_i32 = arith.constant 0 : i32
    %c0_i32_0 = arith.constant 0 : i32
    %c0_i32_1 = arith.constant 0 : i32
    return %c0_i32, %c0_i32_0 : i32, i32
  }
  func.func @transform_8(%arg0: i32) -> (i32, i32) {
    %c0_i32 = arith.constant 0 : i32
    %c0_i32_0 = arith.constant 0 : i32
    %c0_i32_1 = arith.constant 0 : i32
    return %c0_i32, %c0_i32_0 : i32, i32
  }
  func.func @transform_9(%arg0: i32) -> (i32, i32) {
    %c0_i32 = arith.constant 0 : i32
    %c0_i32_0 = arith.constant 0 : i32
    %c0_i32_1 = arith.constant 0 : i32
    return %c0_i32, %c0_i32_0 : i32, i32
  }
  func.func @transform_10(%arg0: i32) -> (i32, i32) {
    %c0_i32 = arith.constant 0 : i32
    %c0_i32_0 = arith.constant 0 : i32
    %c0_i32_1 = arith.constant 0 : i32
    return %c0_i32, %c0_i32_0 : i32, i32
  }
  func.func @transform_11(%arg0: i32) -> (i32, i32) {
    %c0_i32 = arith.constant 0 : i32
    %c0_i32_0 = arith.constant 0 : i32
    %c0_i32_1 = arith.constant 0 : i32
    return %c0_i32, %c0_i32_0 : i32, i32
  }
  func.func @transform_12(%arg0: i32) -> (i32, i32) {
    %c0_i32 = arith.constant 0 : i32
    %c0_i32_0 = arith.constant 0 : i32
    %c0_i32_1 = arith.constant 0 : i32
    return %c0_i32, %c0_i32_0 : i32, i32
  }
  func.func @transform_13(%arg0: i32) -> (i32, i32) {
    %c0_i32 = arith.constant 0 : i32
    %c0_i32_0 = arith.constant 0 : i32
    %c0_i32_1 = arith.constant 0 : i32
    return %c0_i32, %c0_i32_0 : i32, i32
  }
  func.func @transform_14(%arg0: i32) -> (i32, i32) {
    %c0_i32 = arith.constant 0 : i32
    %c0_i32_0 = arith.constant 0 : i32
    %c0_i32_1 = arith.constant 0 : i32
    return %c0_i32, %c0_i32_0 : i32, i32
  }
  func.func @transform_15(%arg0: i32) -> (i32, i32) {
    %c0_i32 = arith.constant 0 : i32
    %c0_i32_0 = arith.constant 0 : i32
    %c0_i32_1 = arith.constant 0 : i32
    return %c0_i32, %c0_i32_0 : i32, i32
  }
  func.func @transform_16(%arg0: i32) -> (i32, i32) {
    %c0_i32 = arith.constant 0 : i32
    %c0_i32_0 = arith.constant 0 : i32
    %c0_i32_1 = arith.constant 0 : i32
    return %c0_i32, %c0_i32_0 : i32, i32
  }
  func.func @transform_17(%arg0: i32) -> (i32, i32) {
    %c0_i32 = arith.constant 0 : i32
    %c0_i32_0 = arith.constant 0 : i32
    %c0_i32_1 = arith.constant 0 : i32
    return %c0_i32, %c0_i32_0 : i32, i32
  }
  func.func @transform_18(%arg0: i32) -> (i32, i32) {
    %c0_i32 = arith.constant 0 : i32
    %c0_i32_0 = arith.constant 0 : i32
    %c0_i32_1 = arith.constant 0 : i32
    return %c0_i32, %c0_i32_0 : i32, i32
  }
  func.func @transform_19(%arg0: i32) -> (i32, i32) {
    %c0_i32 = arith.constant 0 : i32
    %c0_i32_0 = arith.constant 0 : i32
    %c0_i32_1 = arith.constant 0 : i32
    return %c0_i32, %c0_i32_0 : i32, i32
  }
}

</mosaic_0001>

<llo_original>
// kernel: linear_net_forward.1
$region0: #{linear_net_forward.1}
  #allocation0 [shape = 'u32[]', space=smem, size = 0x4, offset = 0x4, fixed_abs, tag = 'smem constant byte address 0x4 - core index']
  #allocation1 [shape = 'u32[144,128]{1,0:T(1,128)}', space=vmem, size = 0x12000, scoped, tag = 'internal scratch']
  #allocation2 [shape = 'f32[8,768]{1,0:T(8,128)}', space=vmem, size = 0x6000, scoped, tag = 'scratch operand']
  %s0 = inlined_call_operand.vmem [shape: bf16[8,3072], index: 0, kind: input, shape index: {}]
  %s1 = inlined_call_operand.hbm [shape: s8[3072,1024], index: 1, kind: input, shape index: {}]
  %s2 = inlined_call_operand.hbm [shape: f32[1,1024], index: 2, kind: input, shape index: {}]
  %s3 = inlined_call_operand.hbm [shape: f32[1,1024], index: 3, kind: input, shape index: {}]
  %s4 = inlined_call_operand.hbm [shape: s8[1024,768], index: 4, kind: input, shape index: {}]
  %s5 = inlined_call_operand.hbm [shape: f32[1,768], index: 5, kind: input, shape index: {}]
  %s6 = inlined_call_operand.hbm [shape: f32[1,768], index: 6, kind: input, shape index: {}]
  %s7 = inlined_call_operand.hbm [shape: s8[768,512], index: 7, kind: input, shape index: {}]
  %s8 = inlined_call_operand.hbm [shape: f32[1,512], index: 8, kind: input, shape index: {}]
  %s9 = inlined_call_operand.hbm [shape: f32[1,512], index: 9, kind: input, shape index: {}]
  %s10 = inlined_call_operand.hbm [shape: s8[512,384], index: 10, kind: input, shape index: {}]
  %s11 = inlined_call_operand.hbm [shape: f32[1,384], index: 11, kind: input, shape index: {}]
  %s12 = inlined_call_operand.hbm [shape: f32[1,384], index: 12, kind: input, shape index: {}]
  %s13 = inlined_call_operand.hbm [shape: s8[384,256], index: 13, kind: input, shape index: {}]
  %s14 = inlined_call_operand.hbm [shape: f32[1,256], index: 14, kind: input, shape index: {}]
  %s15 = inlined_call_operand.hbm [shape: f32[1,256], index: 15, kind: input, shape index: {}]
  %s16 = inlined_call_operand.hbm [shape: s8[256,128], index: 16, kind: input, shape index: {}]
  %s17 = inlined_call_operand.hbm [shape: f32[1,128], index: 17, kind: input, shape index: {}]
  %s18 = inlined_call_operand.hbm [shape: f32[1,128], index: 18, kind: input, shape index: {}]
  %s19 = inlined_call_operand.hbm [shape: f32[8,128], index: 19, kind: output, shape index: {}]
  %s20 = sld [smem:[#allocation0]]
  $region189: #{linear_net_forward.1} parent=0
    _
  %s22 = ssub.s32 1, %s20
  %s23 = scalar_select 0, %s22, %s20
  $region1: #{linear_net_forward.1} parent=0
    #allocation3 [shape = 'u8[1572864]{0}', space=vmem, size = 0x180000, scoped, tag = 'input window, operand 1']
    #allocation4 [shape = 's32[2]{0}', space=sflag, size = 0x8, scoped, tag = 'scoped memory for linear_net_forward.1']
    #allocation5 [shape = 's32[2]{0}', space=sflag, size = 0x8, scoped, tag = 'scoped memory for linear_net_forward.1']
    #allocation6 [shape = 'u8[2048]{0}', space=vmem, size = 0x800, scoped, tag = 'input window, operand 2']
    #allocation7 [shape = 's32[2]{0}', space=sflag, size = 0x8, scoped, tag = 'scoped memory for linear_net_forward.1']
    #allocation8 [shape = 'u8[2048]{0}', space=vmem, size = 0x800, scoped, tag = 'input window, operand 3']
    #allocation9 [shape = 'u8[393216]{0}', space=vmem, size = 0x60000, scoped, tag = 'input window, operand 4']
    #allocation10 [shape = 's32[2]{0}', space=sflag, size = 0x8, scoped, tag = 'scoped memory for linear_net_forward.1']
    #allocation11 [shape = 'u8[3072]{0}', space=vmem, size = 0xc00, scoped, tag = 'input window, operand 5, single buffered']
    #allocation12 [shape = 'u8[3072]{0}', space=vmem, size = 0xc00, scoped, tag = 'input window, operand 6, single buffered']
    #allocation13 [shape = 's32[1]{0}', space=sflag, size = 0x4, scoped, tag = 'scoped memory for linear_net_forward.1']
    #allocation14 [shape = 'u8[393216]{0}', space=vmem, size = 0x60000, scoped, tag = 'input window, operand 7, single buffered']
    #allocation15 [shape = 'u8[2048]{0}', space=vmem, size = 0x800, scoped, tag = 'input window, operand 8, single buffered']
    #allocation16 [shape = 's32[1]{0}', space=sflag, size = 0x4, scoped, tag = 'scoped memory for linear_net_forward.1']
    #allocation17 [shape = 'u8[2048]{0}', space=vmem, size = 0x800, scoped, tag = 'input window, operand 9, single buffered']
    #allocation18 [shape = 'u8[196608]{0}', space=vmem, size = 0x30000, scoped, tag = 'input window, operand 10, single buffered']
    #allocation19 [shape = 's32[1]{0}', space=sflag, size = 0x4, scoped, tag = 'scoped memory for linear_net_forward.1']
    #allocation20 [shape = 'u8[1536]{0}', space=vmem, size = 0x800, scoped, tag = 'input window, operand 11, single buffered']
    #allocation21 [shape = 'u8[1536]{0}', space=vmem, size = 0x800, scoped, tag = 'input window, operand 12, single buffered']
    #allocation22 [shape = 's32[1]{0}', space=sflag, size = 0x4, scoped, tag = 'scoped memory for linear_net_forward.1']
    #allocation23 [shape = 'u8[98304]{0}', space=vmem, size = 0x18000, scoped, tag = 'input window, operand 13, single buffered']
    #allocation24 [shape = 'u8[1024]{0}', space=vmem, size = 0x400, scoped, tag = 'input window, operand 14, single buffered']
    #allocation25 [shape = 's32[1]{0}', space=sflag, size = 0x4, scoped, tag = 'scoped memory for linear_net_forward.1']
    #allocation26 [shape = 'u8[1024]{0}', space=vmem, size = 0x400, scoped, tag = 'input window, operand 15, single buffered']
    #allocation27 [shape = 'u8[32768]{0}', space=vmem, size = 0x8000, scoped, tag = 'input window, operand 16, single buffered']
    #allocation28 [shape = 's32[1]{0}', space=sflag, size = 0x4, scoped, tag = 'scoped memory for linear_net_forward.1']
    #allocation29 [shape = 'u8[512]{0}', space=vmem, size = 0x400, scoped, tag = 'input window, operand 17, single buffered']
    #allocation30 [shape = 'u8[512]{0}', space=vmem, size = 0x400, scoped, tag = 'input window, operand 18, single buffered']
    #allocation31 [shape = 's32[1]{0}', space=sflag, size = 0x4, scoped, tag = 'scoped memory for linear_net_forward.1']
    #allocation32 [shape = 'u8[4096]{0}', space=vmem, size = 0x1000, scoped, tag = 'output window, operand 0, single buffered']
    %24 = vsyncpa [#allocation4], 0
    %s25 = scalar_lea.sflag [#allocation4], 1
    %26 = vsyncpa %s25, 0
    %27 = vsyncpa [#allocation7], 0
    %s28 = scalar_lea.sflag [#allocation7], 1
    %29 = vsyncpa %s28, 0
    %30 = vsyncpa [#allocation10], 0
    %s31 = scalar_lea.sflag [#allocation10], 1
    %32 = vsyncpa %s31, 0
    %33 = vsyncpa [#allocation13], 0
    %34 = vsyncpa [#allocation16], 0
    %35 = vsyncpa [#allocation19], 0
    %36 = vsyncpa [#allocation22], 0
    %37 = vsyncpa [#allocation25], 0
    %38 = vsyncpa [#allocation28], 0
    %39 = vsyncpa [#allocation31], 0
    %40 = vsyncpa [#allocation5], 0
    loop: start=0, step=1, limit=6
    $region2: #{linear_net_forward.1} parent=1 // loop_pre_header
      _
    $region3: #{linear_net_forward.1} parent=1 // loop_header
      %s42 = sphi 0, %s46
      %p43 = scmp.ge.s32.totalorder %s42, 6
      %s50 = sphi 0, %s50
      %s52 = sphi 0, %s50
      %s53 = sphi 0, %s52
      %s67 = sphi 0, %s53
      %s73 = sphi 0, %s75
      %s76 = sphi 0, %s73
      %s77 = sphi 0, %s76
      %s93 = sphi 0, %s77
      %s99 = sphi 0, %s101
      %s102 = sphi 0, %s99
      %s103 = sphi 0, %s102
      %s119 = sphi 0, %s103
      %s125 = sphi 0, %s127
      %s128 = sphi 0, %s125
      %s129 = sphi 0, %s128
      %s145 = sphi 0, %s129
      %s151 = sphi 0, %s153
      %s154 = sphi 0, %s151
      %s155 = sphi 0, %s154
      %s171 = sphi 0, %s155
      %s175 = sphi 0, %s175
      %s177 = sphi 0, %s175
      %s178 = sphi 0, %s177
      %s192 = sphi 0, %s178
      %s196 = sphi 0, %s196
      %s198 = sphi 0, %s196
      %s199 = sphi 0, %s198
      %s213 = sphi 0, %s199
      %s217 = sphi 0, %s217
      %s219 = sphi 0, %s217
      %s220 = sphi 0, %s219
      %s234 = sphi 0, %s220
      %s238 = sphi 0, %s238
      %s240 = sphi 0, %s238
      %s241 = sphi 0, %s240
      %s255 = sphi 0, %s241
      %s259 = sphi 0, %s259
      %s261 = sphi 0, %s259
      %s262 = sphi 0, %s261
      %s276 = sphi 0, %s262
      %s280 = sphi 0, %s280
      %s282 = sphi 0, %s280
      %s283 = sphi 0, %s282
      %s297 = sphi 0, %s283
      %s301 = sphi 0, %s301
      %s303 = sphi 0, %s301
      %s304 = sphi 0, %s303
      %s318 = sphi 0, %s304
      %s322 = sphi 0, %s322
      %s324 = sphi 0, %s322
      %s325 = sphi 0, %s324
      %s339 = sphi 0, %s325
      %s343 = sphi 0, %s343
      %s345 = sphi 0, %s343
      %s346 = sphi 0, %s345
      %s360 = sphi 0, %s346
      %s364 = sphi 0, %s364
      %s366 = sphi 0, %s364
      %s367 = sphi 0, %s366
      %s381 = sphi 0, %s367
      %s385 = sphi 0, %s385
      %s387 = sphi 0, %s385
      %s388 = sphi 0, %s387
      %s402 = sphi 0, %s388
      %s406 = sphi 0, %s406
      %s408 = sphi 0, %s406
      %s409 = sphi 0, %s408
      %s423 = sphi 0, %s409
      %s427 = sphi 0, %s427
      %s429 = sphi 0, %s427
      %s430 = sphi 0, %s429
      %s444 = sphi 0, %s430
      %s448 = sphi 0, %s448
      %s450 = sphi 0, %s448
      %s451 = sphi 0, %s450
      %s465 = sphi 0, %s451
      %s469 = sphi 0, %s469
      %s471 = sphi 0, %s469
      %s472 = sphi 0, %s471
      %s486 = sphi 0, %s472
    $region4: #{linear_net_forward.1} parent=1 // loop_header_branch
      %45 = sbr.rel (%p43) target = $region8
    $region5: #{linear_net_forward.1} parent=1 // loop_body
      %s47 = ssub.s32 %s42, 1
      %s48 = ssub.s32 %s42, 2
      %s49 = sadd.s32 %s42, 1
      %s51 = sadd.s32 %s50, 1
      %p54 = scmp.eq.s32.totalorder %s42, 3
      %p55 = scmp.ne.s32.totalorder %s50, %s52
      %p56 = scmp.eq.s32.totalorder %s42, 0
      %p57 = por %p55, %p56
      %p58 = scmp.ne.s32.totalorder %s50, %s52
      %p59 = scmp.eq.s32.totalorder %s47, 3
      %p60 = por %p58, %p59
      %p61 = scmp.ne.s32.totalorder %s52, %s53
      %p62 = scmp.eq.s32.totalorder %s47, 0
      %p63 = por %p61, %p62
      %p64 = scmp.ne.s32.totalorder %s52, %s53
      %p65 = scmp.eq.s32.totalorder %s48, 3
      %p66 = por %p64, %p65
      %p68 = scmp.ne.s32.totalorder %s53, %s67
      %p69 = scmp.eq.s32.totalorder %s48, 0
      %p70 = por %p68, %p69
      %s71 = ssub.s32 %s42, %s49
      %p72 = scmp.eq.s32.totalorder %s71, 0
      %s74 = sadd.s32 %s73, 1
      %s75 = scalar_select %p72, %s73, %s74
      %p78 = pneg %p72
      %p79 = scmp.eq.s32.totalorder %s42, 3
      %p80 = por %p78, %p79
      %p81 = scmp.ne.s32.totalorder %s73, %s76
      %p82 = scmp.eq.s32.totalorder %s42, 0
      %p83 = por %p81, %p82
      %p84 = scmp.ne.s32.totalorder %s73, %s76
      %p85 = scmp.eq.s32.totalorder %s47, 3
      %p86 = por %p84, %p85
      %p87 = scmp.ne.s32.totalorder %s76, %s77
      %p88 = scmp.eq.s32.totalorder %s47, 0
      %p89 = por %p87, %p88
      %p90 = scmp.ne.s32.totalorder %s76, %s77
      %p91 = scmp.eq.s32.totalorder %s48, 3
      %p92 = por %p90, %p91
      %p94 = scmp.ne.s32.totalorder %s77, %s93
      %p95 = scmp.eq.s32.totalorder %s48, 0
      %p96 = por %p94, %p95
      %s97 = ssub.s32 %s42, %s49
      %p98 = scmp.eq.s32.totalorder %s97, 0
      %s100 = sadd.s32 %s99, 1
      %s101 = scalar_select %p98, %s99, %s100
      %p104 = pneg %p98
      %p105 = scmp.eq.s32.totalorder %s42, 3
      %p106 = por %p104, %p105
      %p107 = scmp.ne.s32.totalorder %s99, %s102
      %p108 = scmp.eq.s32.totalorder %s42, 0
      %p109 = por %p107, %p108
      %p110 = scmp.ne.s32.totalorder %s99, %s102
      %p111 = scmp.eq.s32.totalorder %s47, 3
      %p112 = por %p110, %p111
      %p113 = scmp.ne.s32.totalorder %s102, %s103
      %p114 = scmp.eq.s32.totalorder %s47, 0
      %p115 = por %p113, %p114
      %p116 = scmp.ne.s32.totalorder %s102, %s103
      %p117 = scmp.eq.s32.totalorder %s48, 3
      %p118 = por %p116, %p117
      %p120 = scmp.ne.s32.totalorder %s103, %s119
      %p121 = scmp.eq.s32.totalorder %s48, 0
      %p122 = por %p120, %p121
      %s123 = ssub.s32 %s42, %s49
      %p124 = scmp.eq.s32.totalorder %s123, 0
      %s126 = sadd.s32 %s125, 1
      %s127 = scalar_select %p124, %s125, %s126
      %p130 = pneg %p124
      %p131 = scmp.eq.s32.totalorder %s42, 3
      %p132 = por %p130, %p131
      %p133 = scmp.ne.s32.totalorder %s125, %s128
      %p134 = scmp.eq.s32.totalorder %s42, 0
      %p135 = por %p133, %p134
      %p136 = scmp.ne.s32.totalorder %s125, %s128
      %p137 = scmp.eq.s32.totalorder %s47, 3
      %p138 = por %p136, %p137
      %p139 = scmp.ne.s32.totalorder %s128, %s129
      %p140 = scmp.eq.s32.totalorder %s47, 0
      %p141 = por %p139, %p140
      %p142 = scmp.ne.s32.totalorder %s128, %s129
      %p143 = scmp.eq.s32.totalorder %s48, 3
      %p144 = por %p142, %p143
      %p146 = scmp.ne.s32.totalorder %s129, %s145
      %p147 = scmp.eq.s32.totalorder %s48, 0
      %p148 = por %p146, %p147
      %s149 = ssub.s32 %s42, %s49
      %p150 = scmp.eq.s32.totalorder %s149, 0
      %s152 = sadd.s32 %s151, 1
      %s153 = scalar_select %p150, %s151, %s152
      %p156 = pneg %p150
      %p157 = scmp.eq.s32.totalorder %s42, 3
      %p158 = por %p156, %p157
      %p159 = scmp.ne.s32.totalorder %s151, %s154
      %p160 = scmp.eq.s32.totalorder %s42, 0
      %p161 = por %p159, %p160
      %p162 = scmp.ne.s32.totalorder %s151, %s154
      %p163 = scmp.eq.s32.totalorder %s47, 3
      %p164 = por %p162, %p163
      %p165 = scmp.ne.s32.totalorder %s154, %s155
      %p166 = scmp.eq.s32.totalorder %s47, 0
      %p167 = por %p165, %p166
      %p168 = scmp.ne.s32.totalorder %s154, %s155
      %p169 = scmp.eq.s32.totalorder %s48, 3
      %p170 = por %p168, %p169
      %p172 = scmp.ne.s32.totalorder %s155, %s171
      %p173 = scmp.eq.s32.totalorder %s48, 0
      %p174 = por %p172, %p173
      %s176 = sadd.s32 %s175, 1
      %p179 = scmp.eq.s32.totalorder %s42, 3
      %p180 = scmp.ne.s32.totalorder %s175, %s177
      %p181 = scmp.eq.s32.totalorder %s42, 0
      %p182 = por %p180, %p181
      %p183 = scmp.ne.s32.totalorder %s175, %s177
      %p184 = scmp.eq.s32.totalorder %s47, 3
      %p185 = por %p183, %p184
      %p186 = scmp.ne.s32.totalorder %s177, %s178
      %p187 = scmp.eq.s32.totalorder %s47, 0
      %p188 = por %p186, %p187
      %p189 = scmp.ne.s32.totalorder %s177, %s178
      %p190 = scmp.eq.s32.totalorder %s48, 3
      %p191 = por %p189, %p190
      %p193 = scmp.ne.s32.totalorder %s178, %s192
      %p194 = scmp.eq.s32.totalorder %s48, 0
      %p195 = por %p193, %p194
      %s197 = sadd.s32 %s196, 1
      %p200 = scmp.eq.s32.totalorder %s42, 3
      %p201 = scmp.ne.s32.totalorder %s196, %s198
      %p202 = scmp.eq.s32.totalorder %s42, 0
      %p203 = por %p201, %p202
      %p204 = scmp.ne.s32.totalorder %s196, %s198
      %p205 = scmp.eq.s32.totalorder %s47, 3
      %p206 = por %p204, %p205
      %p207 = scmp.ne.s32.totalorder %s198, %s199
      %p208 = scmp.eq.s32.totalorder %s47, 0
      %p209 = por %p207, %p208
      %p210 = scmp.ne.s32.totalorder %s198, %s199
      %p211 = scmp.eq.s32.totalorder %s48, 3
      %p212 = por %p210, %p211
      %p214 = scmp.ne.s32.totalorder %s199, %s213
      %p215 = scmp.eq.s32.totalorder %s48, 0
      %p216 = por %p214, %p215
      %s218 = sadd.s32 %s217, 1
      %p221 = scmp.eq.s32.totalorder %s42, 3
      %p222 = scmp.ne.s32.totalorder %s217, %s219
      %p223 = scmp.eq.s32.totalorder %s42, 0
      %p224 = por %p222, %p223
      %p225 = scmp.ne.s32.totalorder %s217, %s219
      %p226 = scmp.eq.s32.totalorder %s47, 3
      %p227 = por %p225, %p226
      %p228 = scmp.ne.s32.totalorder %s219, %s220
      %p229 = scmp.eq.s32.totalorder %s47, 0
      %p230 = por %p228, %p229
      %p231 = scmp.ne.s32.totalorder %s219, %s220
      %p232 = scmp.eq.s32.totalorder %s48, 3
      %p233 = por %p231, %p232
      %p235 = scmp.ne.s32.totalorder %s220, %s234
      %p236 = scmp.eq.s32.totalorder %s48, 0
      %p237 = por %p235, %p236
      %s239 = sadd.s32 %s238, 1
      %p242 = scmp.eq.s32.totalorder %s42, 3
      %p243 = scmp.ne.s32.totalorder %s238, %s240
      %p244 = scmp.eq.s32.totalorder %s42, 0
      %p245 = por %p243, %p244
      %p246 = scmp.ne.s32.totalorder %s238, %s240
      %p247 = scmp.eq.s32.totalorder %s47, 3
      %p248 = por %p246, %p247
      %p249 = scmp.ne.s32.totalorder %s240, %s241
      %p250 = scmp.eq.s32.totalorder %s47, 0
      %p251 = por %p249, %p250
      %p252 = scmp.ne.s32.totalorder %s240, %s241
      %p253 = scmp.eq.s32.totalorder %s48, 3
      %p254 = por %p252, %p253
      %p256 = scmp.ne.s32.totalorder %s241, %s255
      %p257 = scmp.eq.s32.totalorder %s48, 0
      %p258 = por %p256, %p257
      %s260 = sadd.s32 %s259, 1
      %p263 = scmp.eq.s32.totalorder %s42, 3
      %p264 = scmp.ne.s32.totalorder %s259, %s261
      %p265 = scmp.eq.s32.totalorder %s42, 0
      %p266 = por %p264, %p265
      %p267 = scmp.ne.s32.totalorder %s259, %s261
      %p268 = scmp.eq.s32.totalorder %s47, 3
      %p269 = por %p267, %p268
      %p270 = scmp.ne.s32.totalorder %s261, %s262
      %p271 = scmp.eq.s32.totalorder %s47, 0
      %p272 = por %p270, %p271
      %p273 = scmp.ne.s32.totalorder %s261, %s262
      %p274 = scmp.eq.s32.totalorder %s48, 3
      %p275 = por %p273, %p274
      %p277 = scmp.ne.s32.totalorder %s262, %s276
      %p278 = scmp.eq.s32.totalorder %s48, 0
      %p279 = por %p277, %p278
      %s281 = sadd.s32 %s280, 1
      %p284 = scmp.eq.s32.totalorder %s42, 3
      %p285 = scmp.ne.s32.totalorder %s280, %s282
      %p286 = scmp.eq.s32.totalorder %s42, 0
      %p287 = por %p285, %p286
      %p288 = scmp.ne.s32.totalorder %s280, %s282
      %p289 = scmp.eq.s32.totalorder %s47, 3
      %p290 = por %p288, %p289
      %p291 = scmp.ne.s32.totalorder %s282, %s283
      %p292 = scmp.eq.s32.totalorder %s47, 0
      %p293 = por %p291, %p292
      %p294 = scmp.ne.s32.totalorder %s282, %s283
      %p295 = scmp.eq.s32.totalorder %s48, 3
      %p296 = por %p294, %p295
      %p298 = scmp.ne.s32.totalorder %s283, %s297
      %p299 = scmp.eq.s32.totalorder %s48, 0
      %p300 = por %p298, %p299
      %s302 = sadd.s32 %s301, 1
      %p305 = scmp.eq.s32.totalorder %s42, 3
      %p306 = scmp.ne.s32.totalorder %s301, %s303
      %p307 = scmp.eq.s32.totalorder %s42, 0
      %p308 = por %p306, %p307
      %p309 = scmp.ne.s32.totalorder %s301, %s303
      %p310 = scmp.eq.s32.totalorder %s47, 3
      %p311 = por %p309, %p310
      %p312 = scmp.ne.s32.totalorder %s303, %s304
      %p313 = scmp.eq.s32.totalorder %s47, 0
      %p314 = por %p312, %p313
      %p315 = scmp.ne.s32.totalorder %s303, %s304
      %p316 = scmp.eq.s32.totalorder %s48, 3
      %p317 = por %p315, %p316
      %p319 = scmp.ne.s32.totalorder %s304, %s318
      %p320 = scmp.eq.s32.totalorder %s48, 0
      %p321 = por %p319, %p320
      %s323 = sadd.s32 %s322, 1
      %p326 = scmp.eq.s32.totalorder %s42, 3
      %p327 = scmp.ne.s32.totalorder %s322, %s324
      %p328 = scmp.eq.s32.totalorder %s42, 0
      %p329 = por %p327, %p328
      %p330 = scmp.ne.s32.totalorder %s322, %s324
      %p331 = scmp.eq.s32.totalorder %s47, 3
      %p332 = por %p330, %p331
      %p333 = scmp.ne.s32.totalorder %s324, %s325
      %p334 = scmp.eq.s32.totalorder %s47, 0
      %p335 = por %p333, %p334
      %p336 = scmp.ne.s32.totalorder %s324, %s325
      %p337 = scmp.eq.s32.totalorder %s48, 3
      %p338 = por %p336, %p337
      %p340 = scmp.ne.s32.totalorder %s325, %s339
      %p341 = scmp.eq.s32.totalorder %s48, 0
      %p342 = por %p340, %p341
      %s344 = sadd.s32 %s343, 1
      %p347 = scmp.eq.s32.totalorder %s42, 3
      %p348 = scmp.ne.s32.totalorder %s343, %s345
      %p349 = scmp.eq.s32.totalorder %s42, 0
      %p350 = por %p348, %p349
      %p351 = scmp.ne.s32.totalorder %s343, %s345
      %p352 = scmp.eq.s32.totalorder %s47, 3
      %p353 = por %p351, %p352
      %p354 = scmp.ne.s32.totalorder %s345, %s346
      %p355 = scmp.eq.s32.totalorder %s47, 0
      %p356 = por %p354, %p355
      %p357 = scmp.ne.s32.totalorder %s345, %s346
      %p358 = scmp.eq.s32.totalorder %s48, 3
      %p359 = por %p357, %p358
      %p361 = scmp.ne.s32.totalorder %s346, %s360
      %p362 = scmp.eq.s32.totalorder %s48, 0
      %p363 = por %p361, %p362
      %s365 = sadd.s32 %s364, 1
      %p368 = scmp.eq.s32.totalorder %s42, 3
      %p369 = scmp.ne.s32.totalorder %s364, %s366
      %p370 = scmp.eq.s32.totalorder %s42, 0
      %p371 = por %p369, %p370
      %p372 = scmp.ne.s32.totalorder %s364, %s366
      %p373 = scmp.eq.s32.totalorder %s47, 3
      %p374 = por %p372, %p373
      %p375 = scmp.ne.s32.totalorder %s366, %s367
      %p376 = scmp.eq.s32.totalorder %s47, 0
      %p377 = por %p375, %p376
      %p378 = scmp.ne.s32.totalorder %s366, %s367
      %p379 = scmp.eq.s32.totalorder %s48, 3
      %p380 = por %p378, %p379
      %p382 = scmp.ne.s32.totalorder %s367, %s381
      %p383 = scmp.eq.s32.totalorder %s48, 0
      %p384 = por %p382, %p383
      %s386 = sadd.s32 %s385, 1
      %p389 = scmp.eq.s32.totalorder %s42, 3
      %p390 = scmp.ne.s32.totalorder %s385, %s387
      %p391 = scmp.eq.s32.totalorder %s42, 0
      %p392 = por %p390, %p391
      %p393 = scmp.ne.s32.totalorder %s385, %s387
      %p394 = scmp.eq.s32.totalorder %s47, 3
      %p395 = por %p393, %p394
      %p396 = scmp.ne.s32.totalorder %s387, %s388
      %p397 = scmp.eq.s32.totalorder %s47, 0
      %p398 = por %p396, %p397
      %p399 = scmp.ne.s32.totalorder %s387, %s388
      %p400 = scmp.eq.s32.totalorder %s48, 3
      %p401 = por %p399, %p400
      %p403 = scmp.ne.s32.totalorder %s388, %s402
      %p404 = scmp.eq.s32.totalorder %s48, 0
      %p405 = por %p403, %p404
      %s407 = sadd.s32 %s406, 1
      %p410 = scmp.eq.s32.totalorder %s42, 3
      %p411 = scmp.ne.s32.totalorder %s406, %s408
      %p412 = scmp.eq.s32.totalorder %s42, 0
      %p413 = por %p411, %p412
      %p414 = scmp.ne.s32.totalorder %s406, %s408
      %p415 = scmp.eq.s32.totalorder %s47, 3
      %p416 = por %p414, %p415
      %p417 = scmp.ne.s32.totalorder %s408, %s409
      %p418 = scmp.eq.s32.totalorder %s47, 0
      %p419 = por %p417, %p418
      %p420 = scmp.ne.s32.totalorder %s408, %s409
      %p421 = scmp.eq.s32.totalorder %s48, 3
      %p422 = por %p420, %p421
      %p424 = scmp.ne.s32.totalorder %s409, %s423
      %p425 = scmp.eq.s32.totalorder %s48, 0
      %p426 = por %p424, %p425
      %s428 = sadd.s32 %s427, 1
      %p431 = scmp.eq.s32.totalorder %s42, 3
      %p432 = scmp.ne.s32.totalorder %s427, %s429
      %p433 = scmp.eq.s32.totalorder %s42, 0
      %p434 = por %p432, %p433
      %p435 = scmp.ne.s32.totalorder %s427, %s429
      %p436 = scmp.eq.s32.totalorder %s47, 3
      %p437 = por %p435, %p436
      %p438 = scmp.ne.s32.totalorder %s429, %s430
      %p439 = scmp.eq.s32.totalorder %s47, 0
      %p440 = por %p438, %p439
      %p441 = scmp.ne.s32.totalorder %s429, %s430
      %p442 = scmp.eq.s32.totalorder %s48, 3
      %p443 = por %p441, %p442
      %p445 = scmp.ne.s32.totalorder %s430, %s444
      %p446 = scmp.eq.s32.totalorder %s48, 0
      %p447 = por %p445, %p446
      %s449 = sadd.s32 %s448, 1
      %p452 = scmp.eq.s32.totalorder %s42, 3
      %p453 = scmp.ne.s32.totalorder %s448, %s450
      %p454 = scmp.eq.s32.totalorder %s42, 0
      %p455 = por %p453, %p454
      %p456 = scmp.ne.s32.totalorder %s448, %s450
      %p457 = scmp.eq.s32.totalorder %s47, 3
      %p458 = por %p456, %p457
      %p459 = scmp.ne.s32.totalorder %s450, %s451
      %p460 = scmp.eq.s32.totalorder %s47, 0
      %p461 = por %p459, %p460
      %p462 = scmp.ne.s32.totalorder %s450, %s451
      %p463 = scmp.eq.s32.totalorder %s48, 3
      %p464 = por %p462, %p463
      %p466 = scmp.ne.s32.totalorder %s451, %s465
      %p467 = scmp.eq.s32.totalorder %s48, 0
      %p468 = por %p466, %p467
      %s470 = sadd.s32 %s469, 1
      %p473 = scmp.eq.s32.totalorder %s42, 3
      %p474 = scmp.ne.s32.totalorder %s469, %s471
      %p475 = scmp.eq.s32.totalorder %s42, 0
      %p476 = por %p474, %p475
      %p477 = scmp.ne.s32.totalorder %s469, %s471
      %p478 = scmp.eq.s32.totalorder %s47, 3
      %p479 = por %p477, %p478
      %p480 = scmp.ne.s32.totalorder %s471, %s472
      %p481 = scmp.eq.s32.totalorder %s47, 0
      %p482 = por %p480, %p481
      %p483 = scmp.ne.s32.totalorder %s471, %s472
      %p484 = scmp.eq.s32.totalorder %s48, 3
      %p485 = por %p483, %p484
      %p487 = scmp.ne.s32.totalorder %s472, %s486
      %p488 = scmp.eq.s32.totalorder %s48, 0
      %p489 = por %p487, %p488
      %p490 = scmp.le.s32.totalorder 1, %s42
      %p491 = scmp.lt.s32.totalorder %s42, 5
      %p492 = pnand %p490, %p491
      %p493 = pneg %p492
      // Predicated region
      $region9: #{linear_net_forward.1} parent=5 // pred_check
        _
      $region10: #{linear_net_forward.1} parent=5 // pred_check_branch
        %495 = sbr.rel (%p492) target = $region12
      $region11: #{linear_net_forward.1} parent=5 // pred_region
        %s496 = ssub.s32 %s42, 1
        // Predicated region
        $region13: #{linear_net_forward.1} parent=11 // pred_check
          %p497 = pneg %p63
        $region14: #{linear_net_forward.1} parent=11 // pred_check_branch
          %499 = sbr.rel (%p497) target = $region16
        $region15: #{linear_net_forward.1} parent=11 // pred_region
          _
        $region16: #{linear_net_forward.1} parent=11 // pred_fallthru
          _
        // Predicated region
        $region17: #{linear_net_forward.1} parent=11 // pred_check
          %p500 = pneg %p188
        $region18: #{linear_net_forward.1} parent=11 // pred_check_branch
          %502 = sbr.rel (%p500) target = $region20
        $region19: #{linear_net_forward.1} parent=11 // pred_region
          %s504 = ssub.s32 96, 96
          %505 = vsyncadd [#allocation10], %s504
          %s507 = sshll.u32 [#allocation11], 4
          %s508 = int_to_ptr.vmem [resolvable:$true] %s507
          %510 = dma.hbm_to_vmem [thread:$0]  %s5, 96, %s508, [#allocation10]
        $region20: #{linear_net_forward.1} parent=11 // pred_fallthru
          _
        // Predicated region
        $region21: #{linear_net_forward.1} parent=11 // pred_check
          %p511 = pneg %p209
        $region22: #{linear_net_forward.1} parent=11 // pred_check_branch
          %513 = sbr.rel (%p511) target = $region24
        $region23: #{linear_net_forward.1} parent=11 // pred_region
          %s515 = ssub.s32 96, 96
          %516 = vsyncadd [#allocation13], %s515
          %s518 = sshll.u32 [#allocation12], 4
          %s519 = int_to_ptr.vmem [resolvable:$true] %s518
          %521 = dma.hbm_to_vmem [thread:$0]  %s6, 96, %s519, [#allocation13]
        $region24: #{linear_net_forward.1} parent=11 // pred_fallthru
          _
        // Predicated region
        $region25: #{linear_net_forward.1} parent=11 // pred_check
          %p522 = pneg %p230
        $region26: #{linear_net_forward.1} parent=11 // pred_check_branch
          %524 = sbr.rel (%p522) target = $region28
        $region27: #{linear_net_forward.1} parent=11 // pred_region
          %s526 = ssub.s32 12288, 12288
          %527 = vsyncadd [#allocation13], %s526
          %s528 = sshll.u32 [#allocation14], 4
          %s529 = int_to_ptr.vmem [resolvable:$true] %s528
          %534 = dma.hbm_to_vmem [thread:$0]  %s7, 12288, %s529, [#allocation13], 512, 512, 32
        $region28: #{linear_net_forward.1} parent=11 // pred_fallthru
          _
        // Predicated region
        $region29: #{linear_net_forward.1} parent=11 // pred_check
          %p535 = pneg %p251
        $region30: #{linear_net_forward.1} parent=11 // pred_check_branch
          %537 = sbr.rel (%p535) target = $region32
        $region31: #{linear_net_forward.1} parent=11 // pred_region
          %s539 = ssub.s32 64, 64
          %540 = vsyncadd [#allocation16], %s539
          %s542 = sshll.u32 [#allocation15], 4
          %s543 = int_to_ptr.vmem [resolvable:$true] %s542
          %545 = dma.hbm_to_vmem [thread:$0]  %s8, 64, %s543, [#allocation16]
        $region32: #{linear_net_forward.1} parent=11 // pred_fallthru
          _
        // Predicated region
        $region33: #{linear_net_forward.1} parent=11 // pred_check
          %p546 = pneg %p272
        $region34: #{linear_net_forward.1} parent=11 // pred_check_branch
          %548 = sbr.rel (%p546) target = $region36
        $region35: #{linear_net_forward.1} parent=11 // pred_region
          %s550 = ssub.s32 64, 64
          %551 = vsyncadd [#allocation16], %s550
          %s553 = sshll.u32 [#allocation17], 4
          %s554 = int_to_ptr.vmem [resolvable:$true] %s553
          %556 = dma.hbm_to_vmem [thread:$0]  %s9, 64, %s554, [#allocation16]
        $region36: #{linear_net_forward.1} parent=11 // pred_fallthru
          _
        // Predicated region
        $region37: #{linear_net_forward.1} parent=11 // pred_check
          %p557 = pneg %p293
        $region38: #{linear_net_forward.1} parent=11 // pred_check_branch
          %559 = sbr.rel (%p557) target = $region40
        $region39: #{linear_net_forward.1} parent=11 // pred_region
          %s561 = ssub.s32 6144, 6144
          %562 = vsyncadd [#allocation19], %s561
          %s563 = sshll.u32 [#allocation18], 4
          %s564 = int_to_ptr.vmem [resolvable:$true] %s563
          %569 = dma.hbm_to_vmem [thread:$0]  %s10, 6144, %s564, [#allocation19], 384, 384, 24
        $region40: #{linear_net_forward.1} parent=11 // pred_fallthru
          _
        // Predicated region
        $region41: #{linear_net_forward.1} parent=11 // pred_check
          %p570 = pneg %p314
        $region42: #{linear_net_forward.1} parent=11 // pred_check_branch
          %572 = sbr.rel (%p570) target = $region44
        $region43: #{linear_net_forward.1} parent=11 // pred_region
          %s574 = ssub.s32 48, 48
          %575 = vsyncadd [#allocation19], %s574
          %s577 = sshll.u32 [#allocation20], 4
          %s578 = int_to_ptr.vmem [resolvable:$true] %s577
          %580 = dma.hbm_to_vmem [thread:$0]  %s11, 48, %s578, [#allocation19]
        $region44: #{linear_net_forward.1} parent=11 // pred_fallthru
          _
        // Predicated region
        $region45: #{linear_net_forward.1} parent=11 // pred_check
          %p581 = pneg %p335
        $region46: #{linear_net_forward.1} parent=11 // pred_check_branch
          %583 = sbr.rel (%p581) target = $region48
        $region47: #{linear_net_forward.1} parent=11 // pred_region
          %s585 = ssub.s32 48, 48
          %586 = vsyncadd [#allocation22], %s585
          %s588 = sshll.u32 [#allocation21], 4
          %s589 = int_to_ptr.vmem [resolvable:$true] %s588
          %591 = dma.hbm_to_vmem [thread:$0]  %s12, 48, %s589, [#allocation22]
        $region48: #{linear_net_forward.1} parent=11 // pred_fallthru
          _
        // Predicated region
        $region49: #{linear_net_forward.1} parent=11 // pred_check
          %p592 = pneg %p356
        $region50: #{linear_net_forward.1} parent=11 // pred_check_branch
          %594 = sbr.rel (%p592) target = $region52
        $region51: #{linear_net_forward.1} parent=11 // pred_region
          %s596 = ssub.s32 3072, 3072
          %597 = vsyncadd [#allocation22], %s596
          %s598 = sshll.u32 [#allocation23], 4
          %s599 = int_to_ptr.vmem [resolvable:$true] %s598
          %604 = dma.hbm_to_vmem [thread:$0]  %s13, 3072, %s599, [#allocation22], 256, 256, 16
        $region52: #{linear_net_forward.1} parent=11 // pred_fallthru
          _
        // Predicated region
        $region53: #{linear_net_forward.1} parent=11 // pred_check
          %p605 = pneg %p377
        $region54: #{linear_net_forward.1} parent=11 // pred_check_branch
          %607 = sbr.rel (%p605) target = $region56
        $region55: #{linear_net_forward.1} parent=11 // pred_region
          %s609 = ssub.s32 32, 32
          %610 = vsyncadd [#allocation25], %s609
          %s612 = sshll.u32 [#allocation24], 4
          %s613 = int_to_ptr.vmem [resolvable:$true] %s612
          %615 = dma.hbm_to_vmem [thread:$0]  %s14, 32, %s613, [#allocation25]
        $region56: #{linear_net_forward.1} parent=11 // pred_fallthru
          _
        // Predicated region
        $region57: #{linear_net_forward.1} parent=11 // pred_check
          %p616 = pneg %p398
        $region58: #{linear_net_forward.1} parent=11 // pred_check_branch
          %618 = sbr.rel (%p616) target = $region60
        $region59: #{linear_net_forward.1} parent=11 // pred_region
          %s620 = ssub.s32 32, 32
          %621 = vsyncadd [#allocation25], %s620
          %s623 = sshll.u32 [#allocation26], 4
          %s624 = int_to_ptr.vmem [resolvable:$true] %s623
          %626 = dma.hbm_to_vmem [thread:$0]  %s15, 32, %s624, [#allocation25]
        $region60: #{linear_net_forward.1} parent=11 // pred_fallthru
          _
        // Predicated region
        $region61: #{linear_net_forward.1} parent=11 // pred_check
          %p627 = pneg %p419
        $region62: #{linear_net_forward.1} parent=11 // pred_check_branch
          %629 = sbr.rel (%p627) target = $region64
        $region63: #{linear_net_forward.1} parent=11 // pred_region
          %s631 = ssub.s32 1024, 1024
          %632 = vsyncadd [#allocation28], %s631
          %s633 = sshll.u32 [#allocation27], 4
          %s634 = int_to_ptr.vmem [resolvable:$true] %s633
          %639 = dma.hbm_to_vmem [thread:$0]  %s16, 1024, %s634, [#allocation28], 128, 128, 8
        $region64: #{linear_net_forward.1} parent=11 // pred_fallthru
          _
        // Predicated region
        $region65: #{linear_net_forward.1} parent=11 // pred_check
          %p640 = pneg %p440
        $region66: #{linear_net_forward.1} parent=11 // pred_check_branch
          %642 = sbr.rel (%p640) target = $region68
        $region67: #{linear_net_forward.1} parent=11 // pred_region
          %s644 = ssub.s32 16, 16
          %645 = vsyncadd [#allocation28], %s644
          %s647 = sshll.u32 [#allocation29], 4
          %s648 = int_to_ptr.vmem [resolvable:$true] %s647
          %650 = dma.hbm_to_vmem [thread:$0]  %s17, 16, %s648, [#allocation28]
        $region68: #{linear_net_forward.1} parent=11 // pred_fallthru
          _
        // Predicated region
        $region69: #{linear_net_forward.1} parent=11 // pred_check
          %p651 = pneg %p461
        $region70: #{linear_net_forward.1} parent=11 // pred_check_branch
          %653 = sbr.rel (%p651) target = $region72
        $region71: #{linear_net_forward.1} parent=11 // pred_region
          %s655 = ssub.s32 16, 16
          %656 = vsyncadd [#allocation31], %s655
          %s658 = sshll.u32 [#allocation30], 4
          %s659 = int_to_ptr.vmem [resolvable:$true] %s658
          %661 = dma.hbm_to_vmem [thread:$0]  %s18, 16, %s659, [#allocation31]
        $region72: #{linear_net_forward.1} parent=11 // pred_fallthru
          _
      $region12: #{linear_net_forward.1} parent=5 // pred_fallthru
        _
      %p662 = scmp.lt.s32.totalorder %s42, 4
      // Predicated region
      $region73: #{linear_net_forward.1} parent=5 // pred_check
        %p663 = pneg %p662
      $region74: #{linear_net_forward.1} parent=5 // pred_check_branch
        %665 = sbr.rel (%p663) target = $region76
      $region75: #{linear_net_forward.1} parent=5 // pred_region
        // Predicated region
        $region77: #{linear_net_forward.1} parent=75 // pred_check
          %p666 = pneg %p83
        $region78: #{linear_net_forward.1} parent=75 // pred_check_branch
          %668 = sbr.rel (%p666) target = $region80
        $region79: #{linear_net_forward.1} parent=75 // pred_region
          %s669 = sand.u32 %s73, 1
          %s670 = scalar_lea.sflag [#allocation4], %s669
          %s671 = sand.u32 %s73, 1
          %s672 = smul.addr %s671, 1536
          %s673 = scalar_lea.vmem [#allocation3], %s672
          %s674 = smul.u32 2, %s42
          %s676 = ssub.s32 24576, 24576
          %677 = vsyncadd %s670, %s676
          %s678 = smul.addr %s674, 128
          %s679 = scalar_lea.hbm %s1, %s678
          %s680 = sshll.u32 %s673, 4
          %s681 = int_to_ptr.vmem [resolvable:$true] %s680
          %686 = dma.hbm_to_vmem [thread:$0]  %s679, 24576, %s681, %s670, 1024, 256, 16
        $region80: #{linear_net_forward.1} parent=75 // pred_fallthru
          _
        // Predicated region
        $region81: #{linear_net_forward.1} parent=75 // pred_check
          %p687 = pneg %p109
        $region82: #{linear_net_forward.1} parent=75 // pred_check_branch
          %689 = sbr.rel (%p687) target = $region84
        $region83: #{linear_net_forward.1} parent=75 // pred_region
          %s690 = sand.u32 %s42, 1
          %s691 = scalar_lea.sflag [#allocation7], %s690
          %s692 = sand.u32 %s99, 1
          %s693 = smul.addr %s692, 2
          %s694 = scalar_lea.vmem [#allocation6], %s693
          %s695 = smul.u32 2, %s42
          %s697 = ssub.s32 32, 32
          %698 = vsyncadd %s691, %s697
          %s699 = smul.addr %s695, 16
          %s700 = scalar_lea.hbm %s2, %s699
          %s702 = sshll.u32 %s694, 4
          %s703 = int_to_ptr.vmem [resolvable:$true] %s702
          %705 = dma.hbm_to_vmem [thread:$0]  %s700, 32, %s703, %s691
        $region84: #{linear_net_forward.1} parent=75 // pred_fallthru
          _
        // Predicated region
        $region85: #{linear_net_forward.1} parent=75 // pred_check
          %p706 = pneg %p135
        $region86: #{linear_net_forward.1} parent=75 // pred_check_branch
          %708 = sbr.rel (%p706) target = $region88
        $region87: #{linear_net_forward.1} parent=75 // pred_region
          %s709 = sand.u32 %s42, 1
          %s710 = scalar_lea.sflag [#allocation7], %s709
          %s711 = sand.u32 %s125, 1
          %s712 = smul.addr %s711, 2
          %s713 = scalar_lea.vmem [#allocation8], %s712
          %s714 = smul.u32 2, %s42
          %s716 = ssub.s32 32, 32
          %717 = vsyncadd %s710, %s716
          %s718 = smul.addr %s714, 16
          %s719 = scalar_lea.hbm %s3, %s718
          %s721 = sshll.u32 %s713, 4
          %s722 = int_to_ptr.vmem [resolvable:$true] %s721
          %724 = dma.hbm_to_vmem [thread:$0]  %s719, 32, %s722, %s710
        $region88: #{linear_net_forward.1} parent=75 // pred_fallthru
          _
        // Predicated region
        $region89: #{linear_net_forward.1} parent=75 // pred_check
          %p725 = pneg %p161
        $region90: #{linear_net_forward.1} parent=75 // pred_check_branch
          %727 = sbr.rel (%p725) target = $region92
        $region91: #{linear_net_forward.1} parent=75 // pred_region
          %s728 = sand.u32 %s42, 1
          %s729 = scalar_lea.sflag [#allocation10], %s728
          %s730 = sand.u32 %s151, 1
          %s731 = smul.addr %s730, 384
          %s732 = scalar_lea.vmem [#allocation9], %s731
          %s733 = smul.u32 8, %s42
          %s735 = ssub.s32 6144, 6144
          %736 = vsyncadd %s729, %s735
          %s737 = smul.addr %s733, 6
          %s738 = smul.addr %s737, 128
          %s739 = scalar_lea.hbm %s4, %s738
          %s740 = sshll.u32 %s732, 4
          %s741 = int_to_ptr.vmem [resolvable:$true] %s740
          %746 = dma.hbm_to_vmem [thread:$0]  %s739, 6144, %s741, %s729, 768, 768, 48
        $region92: #{linear_net_forward.1} parent=75 // pred_fallthru
          _
      $region76: #{linear_net_forward.1} parent=5 // pred_fallthru
        _
      %p747 = scmp.le.s32.totalorder 1, %s42
      %p748 = scmp.lt.s32.totalorder %s42, 5
      %p749 = pnand %p747, %p748
      %p750 = pneg %p749
      // Predicated region
      $region93: #{linear_net_forward.1} parent=5 // pred_check
        _
      $region94: #{linear_net_forward.1} parent=5 // pred_check_branch
        %752 = sbr.rel (%p749) target = $region96
      $region95: #{linear_net_forward.1} parent=5 // pred_region
        %s753 = ssub.s32 %s42, 1
        %s754 = sand.u32 %s76, 1
        %s755 = scalar_lea.sflag [#allocation4], %s754
        %s756 = sand.u32 %s76, 1
        %s757 = smul.addr %s756, 1536
        %s758 = scalar_lea.vmem [#allocation3], %s757
        // Predicated region
        $region97: #{linear_net_forward.1} parent=95 // pred_check
          %p759 = pneg %p89
        $region98: #{linear_net_forward.1} parent=95 // pred_check_branch
          %761 = sbr.rel (%p759) target = $region100
        $region99: #{linear_net_forward.1} parent=95 // pred_region
          %762 = dma.done %s755, 24576
        $region100: #{linear_net_forward.1} parent=95 // pred_fallthru
          _
        %s763 = sand.u32 %s47, 1
        %s764 = scalar_lea.sflag [#allocation7], %s763
        %s765 = sand.u32 %s102, 1
        %s766 = smul.addr %s765, 2
        %s767 = scalar_lea.vmem [#allocation6], %s766
        // Predicated region
        $region101: #{linear_net_forward.1} parent=95 // pred_check
          %p768 = pneg %p115
        $region102: #{linear_net_forward.1} parent=95 // pred_check_branch
          %770 = sbr.rel (%p768) target = $region104
        $region103: #{linear_net_forward.1} parent=95 // pred_region
          %771 = dma.done %s764, 32
        $region104: #{linear_net_forward.1} parent=95 // pred_fallthru
          _
        %s772 = sand.u32 %s47, 1
        %s773 = scalar_lea.sflag [#allocation7], %s772
        %s774 = sand.u32 %s128, 1
        %s775 = smul.addr %s774, 2
        %s776 = scalar_lea.vmem [#allocation8], %s775
        // Predicated region
        $region105: #{linear_net_forward.1} parent=95 // pred_check
          %p777 = pneg %p141
        $region106: #{linear_net_forward.1} parent=95 // pred_check_branch
          %779 = sbr.rel (%p777) target = $region108
        $region107: #{linear_net_forward.1} parent=95 // pred_region
          %780 = dma.done %s773, 32
        $region108: #{linear_net_forward.1} parent=95 // pred_fallthru
          _
        %s781 = sand.u32 %s47, 1
        %s782 = scalar_lea.sflag [#allocation10], %s781
        %s783 = sand.u32 %s154, 1
        %s784 = smul.addr %s783, 384
        %s785 = scalar_lea.vmem [#allocation9], %s784
        // Predicated region
        $region109: #{linear_net_forward.1} parent=95 // pred_check
          %p786 = pneg %p167
        $region110: #{linear_net_forward.1} parent=95 // pred_check_branch
          %788 = sbr.rel (%p786) target = $region112
        $region111: #{linear_net_forward.1} parent=95 // pred_region
          %789 = dma.done %s782, 6144
        $region112: #{linear_net_forward.1} parent=95 // pred_fallthru
          _
        // Predicated region
        $region113: #{linear_net_forward.1} parent=95 // pred_check
          %p790 = pneg %p188
        $region114: #{linear_net_forward.1} parent=95 // pred_check_branch
          %792 = sbr.rel (%p790) target = $region116
        $region115: #{linear_net_forward.1} parent=95 // pred_region
          %793 = dma.done [#allocation10], 96
        $region116: #{linear_net_forward.1} parent=95 // pred_fallthru
          _
        // Predicated region
        $region117: #{linear_net_forward.1} parent=95 // pred_check
          %p794 = pneg %p209
        $region118: #{linear_net_forward.1} parent=95 // pred_check_branch
          %796 = sbr.rel (%p794) target = $region120
        $region119: #{linear_net_forward.1} parent=95 // pred_region
          %797 = dma.done [#allocation13], 96
        $region120: #{linear_net_forward.1} parent=95 // pred_fallthru
          _
        // Predicated region
        $region121: #{linear_net_forward.1} parent=95 // pred_check
          %p798 = pneg %p230
        $region122: #{linear_net_forward.1} parent=95 // pred_check_branch
          %800 = sbr.rel (%p798) target = $region124
        $region123: #{linear_net_forward.1} parent=95 // pred_region
          %801 = dma.done [#allocation13], 12288
        $region124: #{linear_net_forward.1} parent=95 // pred_fallthru
          _
        // Predicated region
        $region125: #{linear_net_forward.1} parent=95 // pred_check
          %p802 = pneg %p251
        $region126: #{linear_net_forward.1} parent=95 // pred_check_branch
          %804 = sbr.rel (%p802) target = $region128
        $region127: #{linear_net_forward.1} parent=95 // pred_region
          %805 = dma.done [#allocation16], 64
        $region128: #{linear_net_forward.1} parent=95 // pred_fallthru
          _
        // Predicated region
        $region129: #{linear_net_forward.1} parent=95 // pred_check
          %p806 = pneg %p272
        $region130: #{linear_net_forward.1} parent=95 // pred_check_branch
          %808 = sbr.rel (%p806) target = $region132
        $region131: #{linear_net_forward.1} parent=95 // pred_region
          %809 = dma.done [#allocation16], 64
        $region132: #{linear_net_forward.1} parent=95 // pred_fallthru
          _
        // Predicated region
        $region133: #{linear_net_forward.1} parent=95 // pred_check
          %p810 = pneg %p293
        $region134: #{linear_net_forward.1} parent=95 // pred_check_branch
          %812 = sbr.rel (%p810) target = $region136
        $region135: #{linear_net_forward.1} parent=95 // pred_region
          %813 = dma.done [#allocation19], 6144
        $region136: #{linear_net_forward.1} parent=95 // pred_fallthru
          _
        // Predicated region
        $region137: #{linear_net_forward.1} parent=95 // pred_check
          %p814 = pneg %p314
        $region138: #{linear_net_forward.1} parent=95 // pred_check_branch
          %816 = sbr.rel (%p814) target = $region140
        $region139: #{linear_net_forward.1} parent=95 // pred_region
          %817 = dma.done [#allocation19], 48
        $region140: #{linear_net_forward.1} parent=95 // pred_fallthru
          _
        // Predicated region
        $region141: #{linear_net_forward.1} parent=95 // pred_check
          %p818 = pneg %p335
        $region142: #{linear_net_forward.1} parent=95 // pred_check_branch
          %820 = sbr.rel (%p818) target = $region144
        $region143: #{linear_net_forward.1} parent=95 // pred_region
          %821 = dma.done [#allocation22], 48
        $region144: #{linear_net_forward.1} parent=95 // pred_fallthru
          _
        // Predicated region
        $region145: #{linear_net_forward.1} parent=95 // pred_check
          %p822 = pneg %p356
        $region146: #{linear_net_forward.1} parent=95 // pred_check_branch
          %824 = sbr.rel (%p822) target = $region148
        $region147: #{linear_net_forward.1} parent=95 // pred_region
          %825 = dma.done [#allocation22], 3072
        $region148: #{linear_net_forward.1} parent=95 // pred_fallthru
          _
        // Predicated region
        $region149: #{linear_net_forward.1} parent=95 // pred_check
          %p826 = pneg %p377
        $region150: #{linear_net_forward.1} parent=95 // pred_check_branch
          %828 = sbr.rel (%p826) target = $region152
        $region151: #{linear_net_forward.1} parent=95 // pred_region
          %829 = dma.done [#allocation25], 32
        $region152: #{linear_net_forward.1} parent=95 // pred_fallthru
          _
        // Predicated region
        $region153: #{linear_net_forward.1} parent=95 // pred_check
          %p830 = pneg %p398
        $region154: #{linear_net_forward.1} parent=95 // pred_check_branch
          %832 = sbr.rel (%p830) target = $region156
        $region155: #{linear_net_forward.1} parent=95 // pred_region
          %833 = dma.done [#allocation25], 32
        $region156: #{linear_net_forward.1} parent=95 // pred_fallthru
          _
        // Predicated region
        $region157: #{linear_net_forward.1} parent=95 // pred_check
          %p834 = pneg %p419
        $region158: #{linear_net_forward.1} parent=95 // pred_check_branch
          %836 = sbr.rel (%p834) target = $region160
        $region159: #{linear_net_forward.1} parent=95 // pred_region
          %837 = dma.done [#allocation28], 1024
        $region160: #{linear_net_forward.1} parent=95 // pred_fallthru
          _
        // Predicated region
        $region161: #{linear_net_forward.1} parent=95 // pred_check
          %p838 = pneg %p440
        $region162: #{linear_net_forward.1} parent=95 // pred_check_branch
          %840 = sbr.rel (%p838) target = $region164
        $region163: #{linear_net_forward.1} parent=95 // pred_region
          %841 = dma.done [#allocation28], 16
        $region164: #{linear_net_forward.1} parent=95 // pred_fallthru
          _
        // Predicated region
        $region165: #{linear_net_forward.1} parent=95 // pred_check
          %p842 = pneg %p461
        $region166: #{linear_net_forward.1} parent=95 // pred_check_branch
          %844 = sbr.rel (%p842) target = $region168
        $region167: #{linear_net_forward.1} parent=95 // pred_region
          %845 = dma.done [#allocation31], 16
        $region168: #{linear_net_forward.1} parent=95 // pred_fallthru
          _
        %p846 = pneg %p63
        %p847 = pneg %p60
        %s848 = sand.u32 %s76, 1
        %s849 = scalar_lea.sflag [#allocation4], %s848
        %s850 = sand.u32 %s76, 1
        %s851 = smul.addr %s850, 1536
        %s852 = scalar_lea.vmem [#allocation3], %s851
        %p853 = pneg %p89
        %p854 = pneg %p86
        %s855 = sand.u32 %s47, 1
        %s856 = scalar_lea.sflag [#allocation7], %s855
        %s857 = sand.u32 %s102, 1
        %s858 = smul.addr %s857, 2
        %s859 = scalar_lea.vmem [#allocation6], %s858
        %p860 = pneg %p115
        %p861 = pneg %p112
        %s862 = sand.u32 %s47, 1
        %s863 = scalar_lea.sflag [#allocation7], %s862
        %s864 = sand.u32 %s128, 1
        %s865 = smul.addr %s864, 2
        %s866 = scalar_lea.vmem [#allocation8], %s865
        %p867 = pneg %p141
        %p868 = pneg %p138
        %s869 = sand.u32 %s47, 1
        %s870 = scalar_lea.sflag [#allocation10], %s869
        %s871 = sand.u32 %s154, 1
        %s872 = smul.addr %s871, 384
        %s873 = scalar_lea.vmem [#allocation9], %s872
        %p874 = pneg %p167
        %p875 = pneg %p164
        %p876 = pneg %p188
        %p877 = pneg %p185
        %p878 = pneg %p209
        %p879 = pneg %p206
        %p880 = pneg %p230
        %p881 = pneg %p227
        %p882 = pneg %p251
        %p883 = pneg %p248
        %p884 = pneg %p272
        %p885 = pneg %p269
        %p886 = pneg %p293
        %p887 = pneg %p290
        %p888 = pneg %p314
        %p889 = pneg %p311
        %p890 = pneg %p335
        %p891 = pneg %p332
        %p892 = pneg %p356
        %p893 = pneg %p353
        %p894 = pneg %p377
        %p895 = pneg %p374
        %p896 = pneg %p398
        %p897 = pneg %p395
        %p898 = pneg %p419
        %p899 = pneg %p416
        %p900 = pneg %p440
        %p901 = pneg %p437
        %p902 = pneg %p461
        %p903 = pneg %p458
        %p904 = pneg %p482
        %p905 = pneg %p479
        %s906 = smul.u32 2, %s47
        %s907 = smul.u32 2, %s47
        %s908 = smul.u32 2, %s47
        %s909 = smul.u32 8, %s47
        %p911 = scmp.eq.s32.totalorder %s47, 0
        // Predicated region
        $region169: #{linear_net_forward.1} parent=95 // pred_check
          %p912 = pneg %p911
        $region170: #{linear_net_forward.1} parent=95 // pred_check_branch
          %914 = sbr.rel (%p912) target = $region172
        $region171: #{linear_net_forward.1} parent=95 // pred_region
          %915 = vst [vmem:[#allocation2] sm:$0xff] 0.0
          %916 = vst [vmem:[#allocation2 + $0x8] sm:$0xff] 0.0
          %917 = vst [vmem:[#allocation2 + $0x10] sm:$0xff] 0.0
          %918 = vst [vmem:[#allocation2 + $0x18] sm:$0xff] 0.0
          %919 = vst [vmem:[#allocation2 + $0x20] sm:$0xff] 0.0
          %920 = vst [vmem:[#allocation2 + $0x28] sm:$0xff] 0.0
        $region172: #{linear_net_forward.1} parent=95 // pred_fallthru
          _
        %v921 = vld [vmem:[%s0] sm:$0xff]
        %v922 = vld [vmem:[%s0 + $0x8] sm:$0xff]
        %v923 = vld [vmem:[%s0 + $0x10] sm:$0xff]
        %v924 = vld [vmem:[%s0 + $0x18] sm:$0xff]
        %v925 = vld [vmem:[%s0 + $0x20] sm:$0xff]
        %v926 = vld [vmem:[%s0 + $0x28] sm:$0xff]
        %v927 = vld [vmem:[%s0 + $0x30] sm:$0xff]
        %v928 = vld [vmem:[%s0 + $0x38] sm:$0xff]
        %v929 = vld [vmem:[%s0 + $0x40] sm:$0xff]
        %v930 = vld [vmem:[%s0 + $0x48] sm:$0xff]
        %v931 = vld [vmem:[%s0 + $0x50] sm:$0xff]
        %v932 = vld [vmem:[%s0 + $0x58] sm:$0xff]
        %v933 = vld [vmem:[%s758] sm:$0xff]
        %v934 = vld [vmem:[%s758 + $0x8] sm:$0xff]
        %v935 = vld [vmem:[%s758 + $0x10] sm:$0xff]
        %v936 = vld [vmem:[%s758 + $0x18] sm:$0xff]
        %v937 = vld [vmem:[%s758 + $0x20] sm:$0xff]
        %v938 = vld [vmem:[%s758 + $0x28] sm:$0xff]
        %v939 = vld [vmem:[%s758 + $0x30] sm:$0xff]
        %v940 = vld [vmem:[%s758 + $0x38] sm:$0xff]
        %v941 = vld [vmem:[%s758 + $0x40] sm:$0xff]
        %v942 = vld [vmem:[%s758 + $0x48] sm:$0xff]
        %v943 = vld [vmem:[%s758 + $0x50] sm:$0xff]
        %v944 = vld [vmem:[%s758 + $0x58] sm:$0xff]
        %v945 = vld [vmem:[%s758 + $0x60] sm:$0xff]
        %v946 = vld [vmem:[%s758 + $0x68] sm:$0xff]
        %v947 = vld [vmem:[%s758 + $0x70] sm:$0xff]
        %v948 = vld [vmem:[%s758 + $0x78] sm:$0xff]
        %v949 = vld [vmem:[%s758 + $0x80] sm:$0xff]
        %v950 = vld [vmem:[%s758 + $0x88] sm:$0xff]
        %v951 = vld [vmem:[%s758 + $0x90] sm:$0xff]
        %v952 = vld [vmem:[%s758 + $0x98] sm:$0xff]
        %v953 = vld [vmem:[%s758 + $0xa0] sm:$0xff]
        %v954 = vld [vmem:[%s758 + $0xa8] sm:$0xff]
        %v955 = vld [vmem:[%s758 + $0xb0] sm:$0xff]
        %v956 = vld [vmem:[%s758 + $0xb8] sm:$0xff]
        %v957 = vld [vmem:[%s758 + $0xc0] sm:$0xff]
        %v958 = vld [vmem:[%s758 + $0xc8] sm:$0xff]
        %v959 = vld [vmem:[%s758 + $0xd0] sm:$0xff]
        %v960 = vld [vmem:[%s758 + $0xd8] sm:$0xff]
        %v961 = vld [vmem:[%s758 + $0xe0] sm:$0xff]
        %v962 = vld [vmem:[%s758 + $0xe8] sm:$0xff]
        %v963 = vld [vmem:[%s758 + $0xf0] sm:$0xff]
        %v964 = vld [vmem:[%s758 + $0xf8] sm:$0xff]
        %v965 = vld [vmem:[%s758 + $0x100] sm:$0xff]
        %v966 = vld [vmem:[%s758 + $0x108] sm:$0xff]
        %v967 = vld [vmem:[%s758 + $0x110] sm:$0xff]
        %v968 = vld [vmem:[%s758 + $0x118] sm:$0xff]
        %v969 = vld [vmem:[%s758 + $0x120] sm:$0xff]
        %v970 = vld [vmem:[%s758 + $0x128] sm:$0xff]
        %v971 = vld [vmem:[%s758 + $0x130] sm:$0xff]
        %v972 = vld [vmem:[%s758 + $0x138] sm:$0xff]
        %v973 = vld [vmem:[%s758 + $0x140] sm:$0xff]
        %v974 = vld [vmem:[%s758 + $0x148] sm:$0xff]
        %v975 = vld [vmem:[%s758 + $0x150] sm:$0xff]
        %v976 = vld [vmem:[%s758 + $0x158] sm:$0xff]
        %v977 = vld [vmem:[%s758 + $0x160] sm:$0xff]
        %v978 = vld [vmem:[%s758 + $0x168] sm:$0xff]
        %v979 = vld [vmem:[%s758 + $0x170] sm:$0xff]
        %v980 = vld [vmem:[%s758 + $0x178] sm:$0xff]
        %v981 = vld [vmem:[%s758 + $0x180] sm:$0xff]
        %v982 = vld [vmem:[%s758 + $0x188] sm:$0xff]
        %v983 = vld [vmem:[%s758 + $0x190] sm:$0xff]
        %v984 = vld [vmem:[%s758 + $0x198] sm:$0xff]
        %v985 = vld [vmem:[%s758 + $0x1a0] sm:$0xff]
        %v986 = vld [vmem:[%s758 + $0x1a8] sm:$0xff]
        %v987 = vld [vmem:[%s758 + $0x1b0] sm:$0xff]
        %v988 = vld [vmem:[%s758 + $0x1b8] sm:$0xff]
        %v989 = vld [vmem:[%s758 + $0x1c0] sm:$0xff]
        %v990 = vld [vmem:[%s758 + $0x1c8] sm:$0xff]
        %v991 = vld [vmem:[%s758 + $0x1d0] sm:$0xff]
        %v992 = vld [vmem:[%s758 + $0x1d8] sm:$0xff]
        %v993 = vld [vmem:[%s758 + $0x1e0] sm:$0xff]
        %v994 = vld [vmem:[%s758 + $0x1e8] sm:$0xff]
        %v995 = vld [vmem:[%s758 + $0x1f0] sm:$0xff]
        %v996 = vld [vmem:[%s758 + $0x1f8] sm:$0xff]
        %v997 = vld [vmem:[%s758 + $0x200] sm:$0xff]
        %v998 = vld [vmem:[%s758 + $0x208] sm:$0xff]
        %v999 = vld [vmem:[%s758 + $0x210] sm:$0xff]
        %v1000 = vld [vmem:[%s758 + $0x218] sm:$0xff]
        %v1001 = vld [vmem:[%s758 + $0x220] sm:$0xff]
        %v1002 = vld [vmem:[%s758 + $0x228] sm:$0xff]
        %v1003 = vld [vmem:[%s758 + $0x230] sm:$0xff]
        %v1004 = vld [vmem:[%s758 + $0x238] sm:$0xff]
        %v1005 = vld [vmem:[%s758 + $0x240] sm:$0xff]
        %v1006 = vld [vmem:[%s758 + $0x248] sm:$0xff]
        %v1007 = vld [vmem:[%s758 + $0x250] sm:$0xff]
        %v1008 = vld [vmem:[%s758 + $0x258] sm:$0xff]
        %v1009 = vld [vmem:[%s758 + $0x260] sm:$0xff]
        %v1010 = vld [vmem:[%s758 + $0x268] sm:$0xff]
        %v1011 = vld [vmem:[%s758 + $0x270] sm:$0xff]
        %v1012 = vld [vmem:[%s758 + $0x278] sm:$0xff]
        %v1013 = vld [vmem:[%s758 + $0x280] sm:$0xff]
        %v1014 = vld [vmem:[%s758 + $0x288] sm:$0xff]
        %v1015 = vld [vmem:[%s758 + $0x290] sm:$0xff]
        %v1016 = vld [vmem:[%s758 + $0x298] sm:$0xff]
        %v1017 = vld [vmem:[%s758 + $0x2a0] sm:$0xff]
        %v1018 = vld [vmem:[%s758 + $0x2a8] sm:$0xff]
        %v1019 = vld [vmem:[%s758 + $0x2b0] sm:$0xff]
        %v1020 = vld [vmem:[%s758 + $0x2b8] sm:$0xff]
        %v1021 = vld [vmem:[%s758 + $0x2c0] sm:$0xff]
        %v1022 = vld [vmem:[%s758 + $0x2c8] sm:$0xff]
        %v1023 = vld [vmem:[%s758 + $0x2d0] sm:$0xff]
        %v1024 = vld [vmem:[%s758 + $0x2d8] sm:$0xff]
        %v1025 = vld [vmem:[%s758 + $0x2e0] sm:$0xff]
        %v1026 = vld [vmem:[%s758 + $0x2e8] sm:$0xff]
        %v1027 = vld [vmem:[%s758 + $0x2f0] sm:$0xff]
        %v1028 = vld [vmem:[%s758 + $0x2f8] sm:$0xff]
        %v1029 = vld [vmem:[%s758 + $0x300] sm:$0xff]
        %v1030 = vld [vmem:[%s758 + $0x308] sm:$0xff]
        %v1031 = vld [vmem:[%s758 + $0x310] sm:$0xff]
        %v1032 = vld [vmem:[%s758 + $0x318] sm:$0xff]
        %v1033 = vld [vmem:[%s758 + $0x320] sm:$0xff]
        %v1034 = vld [vmem:[%s758 + $0x328] sm:$0xff]
        %v1035 = vld [vmem:[%s758 + $0x330] sm:$0xff]
        %v1036 = vld [vmem:[%s758 + $0x338] sm:$0xff]
        %v1037 = vld [vmem:[%s758 + $0x340] sm:$0xff]
        %v1038 = vld [vmem:[%s758 + $0x348] sm:$0xff]
        %v1039 = vld [vmem:[%s758 + $0x350] sm:$0xff]
        %v1040 = vld [vmem:[%s758 + $0x358] sm:$0xff]
        %v1041 = vld [vmem:[%s758 + $0x360] sm:$0xff]
        %v1042 = vld [vmem:[%s758 + $0x368] sm:$0xff]
        %v1043 = vld [vmem:[%s758 + $0x370] sm:$0xff]
        %v1044 = vld [vmem:[%s758 + $0x378] sm:$0xff]
        %v1045 = vld [vmem:[%s758 + $0x380] sm:$0xff]
        %v1046 = vld [vmem:[%s758 + $0x388] sm:$0xff]
        %v1047 = vld [vmem:[%s758 + $0x390] sm:$0xff]
        %v1048 = vld [vmem:[%s758 + $0x398] sm:$0xff]
        %v1049 = vld [vmem:[%s758 + $0x3a0] sm:$0xff]
        %v1050 = vld [vmem:[%s758 + $0x3a8] sm:$0xff]
        %v1051 = vld [vmem:[%s758 + $0x3b0] sm:$0xff]
        %v1052 = vld [vmem:[%s758 + $0x3b8] sm:$0xff]
        %v1053 = vld [vmem:[%s758 + $0x3c0] sm:$0xff]
        %v1054 = vld [vmem:[%s758 + $0x3c8] sm:$0xff]
        %v1055 = vld [vmem:[%s758 + $0x3d0] sm:$0xff]
        %v1056 = vld [vmem:[%s758 + $0x3d8] sm:$0xff]
        %v1057 = vld [vmem:[%s758 + $0x3e0] sm:$0xff]
        %v1058 = vld [vmem:[%s758 + $0x3e8] sm:$0xff]
        %v1059 = vld [vmem:[%s758 + $0x3f0] sm:$0xff]
        %v1060 = vld [vmem:[%s758 + $0x3f8] sm:$0xff]
        %v1061 = vld [vmem:[%s758 + $0x400] sm:$0xff]
        %v1062 = vld [vmem:[%s758 + $0x408] sm:$0xff]
        %v1063 = vld [vmem:[%s758 + $0x410] sm:$0xff]
        %v1064 = vld [vmem:[%s758 + $0x418] sm:$0xff]
        %v1065 = vld [vmem:[%s758 + $0x420] sm:$0xff]
        %v1066 = vld [vmem:[%s758 + $0x428] sm:$0xff]
        %v1067 = vld [vmem:[%s758 + $0x430] sm:$0xff]
        %v1068 = vld [vmem:[%s758 + $0x438] sm:$0xff]
        %v1069 = vld [vmem:[%s758 + $0x440] sm:$0xff]
        %v1070 = vld [vmem:[%s758 + $0x448] sm:$0xff]
        %v1071 = vld [vmem:[%s758 + $0x450] sm:$0xff]
        %v1072 = vld [vmem:[%s758 + $0x458] sm:$0xff]
        %v1073 = vld [vmem:[%s758 + $0x460] sm:$0xff]
        %v1074 = vld [vmem:[%s758 + $0x468] sm:$0xff]
        %v1075 = vld [vmem:[%s758 + $0x470] sm:$0xff]
        %v1076 = vld [vmem:[%s758 + $0x478] sm:$0xff]
        %v1077 = vld [vmem:[%s758 + $0x480] sm:$0xff]
        %v1078 = vld [vmem:[%s758 + $0x488] sm:$0xff]
        %v1079 = vld [vmem:[%s758 + $0x490] sm:$0xff]
        %v1080 = vld [vmem:[%s758 + $0x498] sm:$0xff]
        %v1081 = vld [vmem:[%s758 + $0x4a0] sm:$0xff]
        %v1082 = vld [vmem:[%s758 + $0x4a8] sm:$0xff]
        %v1083 = vld [vmem:[%s758 + $0x4b0] sm:$0xff]
        %v1084 = vld [vmem:[%s758 + $0x4b8] sm:$0xff]
        %v1085 = vld [vmem:[%s758 + $0x4c0] sm:$0xff]
        %v1086 = vld [vmem:[%s758 + $0x4c8] sm:$0xff]
        %v1087 = vld [vmem:[%s758 + $0x4d0] sm:$0xff]
        %v1088 = vld [vmem:[%s758 + $0x4d8] sm:$0xff]
        %v1089 = vld [vmem:[%s758 + $0x4e0] sm:$0xff]
        %v1090 = vld [vmem:[%s758 + $0x4e8] sm:$0xff]
        %v1091 = vld [vmem:[%s758 + $0x4f0] sm:$0xff]
        %v1092 = vld [vmem:[%s758 + $0x4f8] sm:$0xff]
        %v1093 = vld [vmem:[%s758 + $0x500] sm:$0xff]
        %v1094 = vld [vmem:[%s758 + $0x508] sm:$0xff]
        %v1095 = vld [vmem:[%s758 + $0x510] sm:$0xff]
        %v1096 = vld [vmem:[%s758 + $0x518] sm:$0xff]
        %v1097 = vld [vmem:[%s758 + $0x520] sm:$0xff]
        %v1098 = vld [vmem:[%s758 + $0x528] sm:$0xff]
        %v1099 = vld [vmem:[%s758 + $0x530] sm:$0xff]
        %v1100 = vld [vmem:[%s758 + $0x538] sm:$0xff]
        %v1101 = vld [vmem:[%s758 + $0x540] sm:$0xff]
        %v1102 = vld [vmem:[%s758 + $0x548] sm:$0xff]
        %v1103 = vld [vmem:[%s758 + $0x550] sm:$0xff]
        %v1104 = vld [vmem:[%s758 + $0x558] sm:$0xff]
        %v1105 = vld [vmem:[%s758 + $0x560] sm:$0xff]
        %v1106 = vld [vmem:[%s758 + $0x568] sm:$0xff]
        %v1107 = vld [vmem:[%s758 + $0x570] sm:$0xff]
        %v1108 = vld [vmem:[%s758 + $0x578] sm:$0xff]
        %v1109 = vld [vmem:[%s758 + $0x580] sm:$0xff]
        %v1110 = vld [vmem:[%s758 + $0x588] sm:$0xff]
        %v1111 = vld [vmem:[%s758 + $0x590] sm:$0xff]
        %v1112 = vld [vmem:[%s758 + $0x598] sm:$0xff]
        %v1113 = vld [vmem:[%s758 + $0x5a0] sm:$0xff]
        %v1114 = vld [vmem:[%s758 + $0x5a8] sm:$0xff]
        %v1115 = vld [vmem:[%s758 + $0x5b0] sm:$0xff]
        %v1116 = vld [vmem:[%s758 + $0x5b8] sm:$0xff]
        %v1117 = vld [vmem:[%s758 + $0x5c0] sm:$0xff]
        %v1118 = vld [vmem:[%s758 + $0x5c8] sm:$0xff]
        %v1119 = vld [vmem:[%s758 + $0x5d0] sm:$0xff]
        %v1120 = vld [vmem:[%s758 + $0x5d8] sm:$0xff]
        %v1121 = vld [vmem:[%s758 + $0x5e0] sm:$0xff]
        %v1122 = vld [vmem:[%s758 + $0x5e8] sm:$0xff]
        %v1123 = vld [vmem:[%s758 + $0x5f0] sm:$0xff]
        %v1124 = vld [vmem:[%s758 + $0x5f8] sm:$0xff]
        %v1125 = vunpack.c.l.s8.bf16 %v933
        %v1126 = vunpack.c.l.s8.bf16 %v934
        %v1127 = vunpack.c.h.s8.bf16 %v933
        %v1128 = vunpack.c.h.s8.bf16 %v934
        %v1129 = vunpack.c.l.s8.bf16 %v935
        %v1130 = vunpack.c.l.s8.bf16 %v936
        %v1131 = vunpack.c.h.s8.bf16 %v935
        %v1132 = vunpack.c.h.s8.bf16 %v936
        %v1133 = vunpack.c.l.s8.bf16 %v937
        %v1134 = vunpack.c.l.s8.bf16 %v938
        %v1135 = vunpack.c.h.s8.bf16 %v937
        %v1136 = vunpack.c.h.s8.bf16 %v938
        %v1137 = vunpack.c.l.s8.bf16 %v939
        %v1138 = vunpack.c.l.s8.bf16 %v940
        %v1139 = vunpack.c.h.s8.bf16 %v939
        %v1140 = vunpack.c.h.s8.bf16 %v940
        %v1141 = vunpack.c.l.s8.bf16 %v941
        %v1142 = vunpack.c.l.s8.bf16 %v942
        %v1143 = vunpack.c.h.s8.bf16 %v941
        %v1144 = vunpack.c.h.s8.bf16 %v942
        %v1145 = vunpack.c.l.s8.bf16 %v943
        %v1146 = vunpack.c.l.s8.bf16 %v944
        %v1147 = vunpack.c.h.s8.bf16 %v943
        %v1148 = vunpack.c.h.s8.bf16 %v944
        %v1149 = vunpack.c.l.s8.bf16 %v945
        %v1150 = vunpack.c.l.s8.bf16 %v946
        %v1151 = vunpack.c.h.s8.bf16 %v945
        %v1152 = vunpack.c.h.s8.bf16 %v946
        %v1153 = vunpack.c.l.s8.bf16 %v947
        %v1154 = vunpack.c.l.s8.bf16 %v948
        %v1155 = vunpack.c.h.s8.bf16 %v947
        %v1156 = vunpack.c.h.s8.bf16 %v948
        %v1157 = vunpack.c.l.s8.bf16 %v949
        %v1158 = vunpack.c.l.s8.bf16 %v950
        %v1159 = vunpack.c.h.s8.bf16 %v949
        %v1160 = vunpack.c.h.s8.bf16 %v950
        %v1161 = vunpack.c.l.s8.bf16 %v951
        %v1162 = vunpack.c.l.s8.bf16 %v952
        %v1163 = vunpack.c.h.s8.bf16 %v951
        %v1164 = vunpack.c.h.s8.bf16 %v952
        %v1165 = vunpack.c.l.s8.bf16 %v953
        %v1166 = vunpack.c.l.s8.bf16 %v954
        %v1167 = vunpack.c.h.s8.bf16 %v953
        %v1168 = vunpack.c.h.s8.bf16 %v954
        %v1169 = vunpack.c.l.s8.bf16 %v955
        %v1170 = vunpack.c.l.s8.bf16 %v956
        %v1171 = vunpack.c.h.s8.bf16 %v955
        %v1172 = vunpack.c.h.s8.bf16 %v956
        %v1173 = vunpack.c.l.s8.bf16 %v957
        %v1174 = vunpack.c.l.s8.bf16 %v958
        %v1175 = vunpack.c.h.s8.bf16 %v957
        %v1176 = vunpack.c.h.s8.bf16 %v958
        %v1177 = vunpack.c.l.s8.bf16 %v959
        %v1178 = vunpack.c.l.s8.bf16 %v960
        %v1179 = vunpack.c.h.s8.bf16 %v959
        %v1180 = vunpack.c.h.s8.bf16 %v960
        %v1181 = vunpack.c.l.s8.bf16 %v961
        %v1182 = vunpack.c.l.s8.bf16 %v962
        %v1183 = vunpack.c.h.s8.bf16 %v961
        %v1184 = vunpack.c.h.s8.bf16 %v962
        %v1185 = vunpack.c.l.s8.bf16 %v963
        %v1186 = vunpack.c.l.s8.bf16 %v964
        %v1187 = vunpack.c.h.s8.bf16 %v963
        %v1188 = vunpack.c.h.s8.bf16 %v964
        %v1189 = vunpack.c.l.s8.bf16 %v965
        %v1190 = vunpack.c.l.s8.bf16 %v966
        %v1191 = vunpack.c.h.s8.bf16 %v965
        %v1192 = vunpack.c.h.s8.bf16 %v966
        %v1193 = vunpack.c.l.s8.bf16 %v967
        %v1194 = vunpack.c.l.s8.bf16 %v968
        %v1195 = vunpack.c.h.s8.bf16 %v967
        %v1196 = vunpack.c.h.s8.bf16 %v968
        %v1197 = vunpack.c.l.s8.bf16 %v969
        %v1198 = vunpack.c.l.s8.bf16 %v970
        %v1199 = vunpack.c.h.s8.bf16 %v969
        %v1200 = vunpack.c.h.s8.bf16 %v970
        %v1201 = vunpack.c.l.s8.bf16 %v971
        %v1202 = vunpack.c.l.s8.bf16 %v972
        %v1203 = vunpack.c.h.s8.bf16 %v971
        %v1204 = vunpack.c.h.s8.bf16 %v972
        %v1205 = vunpack.c.l.s8.bf16 %v973
        %v1206 = vunpack.c.l.s8.bf16 %v974
        %v1207 = vunpack.c.h.s8.bf16 %v973
        %v1208 = vunpack.c.h.s8.bf16 %v974
        %v1209 = vunpack.c.l.s8.bf16 %v975
        %v1210 = vunpack.c.l.s8.bf16 %v976
        %v1211 = vunpack.c.h.s8.bf16 %v975
        %v1212 = vunpack.c.h.s8.bf16 %v976
        %v1213 = vunpack.c.l.s8.bf16 %v977
        %v1214 = vunpack.c.l.s8.bf16 %v978
        %v1215 = vunpack.c.h.s8.bf16 %v977
        %v1216 = vunpack.c.h.s8.bf16 %v978
        %v1217 = vunpack.c.l.s8.bf16 %v979
        %v1218 = vunpack.c.l.s8.bf16 %v980
        %v1219 = vunpack.c.h.s8.bf16 %v979
        %v1220 = vunpack.c.h.s8.bf16 %v980
        %v1221 = vunpack.c.l.s8.bf16 %v981
        %v1222 = vunpack.c.l.s8.bf16 %v982
        %v1223 = vunpack.c.h.s8.bf16 %v981
        %v1224 = vunpack.c.h.s8.bf16 %v982
        %v1225 = vunpack.c.l.s8.bf16 %v983
        %v1226 = vunpack.c.l.s8.bf16 %v984
        %v1227 = vunpack.c.h.s8.bf16 %v983
        %v1228 = vunpack.c.h.s8.bf16 %v984
        %v1229 = vunpack.c.l.s8.bf16 %v985
        %v1230 = vunpack.c.l.s8.bf16 %v986
        %v1231 = vunpack.c.h.s8.bf16 %v985
        %v1232 = vunpack.c.h.s8.bf16 %v986
        %v1233 = vunpack.c.l.s8.bf16 %v987
        %v1234 = vunpack.c.l.s8.bf16 %v988
        %v1235 = vunpack.c.h.s8.bf16 %v987
        %v1236 = vunpack.c.h.s8.bf16 %v988
        %v1237 = vunpack.c.l.s8.bf16 %v989
        %v1238 = vunpack.c.l.s8.bf16 %v990
        %v1239 = vunpack.c.h.s8.bf16 %v989
        %v1240 = vunpack.c.h.s8.bf16 %v990
        %v1241 = vunpack.c.l.s8.bf16 %v991
        %v1242 = vunpack.c.l.s8.bf16 %v992
        %v1243 = vunpack.c.h.s8.bf16 %v991
        %v1244 = vunpack.c.h.s8.bf16 %v992
        %v1245 = vunpack.c.l.s8.bf16 %v993
        %v1246 = vunpack.c.l.s8.bf16 %v994
        %v1247 = vunpack.c.h.s8.bf16 %v993
        %v1248 = vunpack.c.h.s8.bf16 %v994
        %v1249 = vunpack.c.l.s8.bf16 %v995
        %v1250 = vunpack.c.l.s8.bf16 %v996
        %v1251 = vunpack.c.h.s8.bf16 %v995
        %v1252 = vunpack.c.h.s8.bf16 %v996
        %v1253 = vunpack.c.l.s8.bf16 %v997
        %v1254 = vunpack.c.l.s8.bf16 %v998
        %v1255 = vunpack.c.h.s8.bf16 %v997
        %v1256 = vunpack.c.h.s8.bf16 %v998
        %v1257 = vunpack.c.l.s8.bf16 %v999
        %v1258 = vunpack.c.l.s8.bf16 %v1000
        %v1259 = vunpack.c.h.s8.bf16 %v999
        %v1260 = vunpack.c.h.s8.bf16 %v1000
        %v1261 = vunpack.c.l.s8.bf16 %v1001
        %v1262 = vunpack.c.l.s8.bf16 %v1002
        %v1263 = vunpack.c.h.s8.bf16 %v1001
        %v1264 = vunpack.c.h.s8.bf16 %v1002
        %v1265 = vunpack.c.l.s8.bf16 %v1003
        %v1266 = vunpack.c.l.s8.bf16 %v1004
        %v1267 = vunpack.c.h.s8.bf16 %v1003
        %v1268 = vunpack.c.h.s8.bf16 %v1004
        %v1269 = vunpack.c.l.s8.bf16 %v1005
        %v1270 = vunpack.c.l.s8.bf16 %v1006
        %v1271 = vunpack.c.h.s8.bf16 %v1005
        %v1272 = vunpack.c.h.s8.bf16 %v1006
        %v1273 = vunpack.c.l.s8.bf16 %v1007
        %v1274 = vunpack.c.l.s8.bf16 %v1008
        %v1275 = vunpack.c.h.s8.bf16 %v1007
        %v1276 = vunpack.c.h.s8.bf16 %v1008
        %v1277 = vunpack.c.l.s8.bf16 %v1009
        %v1278 = vunpack.c.l.s8.bf16 %v1010
        %v1279 = vunpack.c.h.s8.bf16 %v1009
        %v1280 = vunpack.c.h.s8.bf16 %v1010
        %v1281 = vunpack.c.l.s8.bf16 %v1011
        %v1282 = vunpack.c.l.s8.bf16 %v1012
        %v1283 = vunpack.c.h.s8.bf16 %v1011
        %v1284 = vunpack.c.h.s8.bf16 %v1012
        %v1285 = vunpack.c.l.s8.bf16 %v1013
        %v1286 = vunpack.c.l.s8.bf16 %v1014
        %v1287 = vunpack.c.h.s8.bf16 %v1013
        %v1288 = vunpack.c.h.s8.bf16 %v1014
        %v1289 = vunpack.c.l.s8.bf16 %v1015
        %v1290 = vunpack.c.l.s8.bf16 %v1016
        %v1291 = vunpack.c.h.s8.bf16 %v1015
        %v1292 = vunpack.c.h.s8.bf16 %v1016
        %v1293 = vunpack.c.l.s8.bf16 %v1017
        %v1294 = vunpack.c.l.s8.bf16 %v1018
        %v1295 = vunpack.c.h.s8.bf16 %v1017
        %v1296 = vunpack.c.h.s8.bf16 %v1018
        %v1297 = vunpack.c.l.s8.bf16 %v1019
        %v1298 = vunpack.c.l.s8.bf16 %v1020
        %v1299 = vunpack.c.h.s8.bf16 %v1019
        %v1300 = vunpack.c.h.s8.bf16 %v1020
        %v1301 = vunpack.c.l.s8.bf16 %v1021
        %v1302 = vunpack.c.l.s8.bf16 %v1022
        %v1303 = vunpack.c.h.s8.bf16 %v1021
        %v1304 = vunpack.c.h.s8.bf16 %v1022
        %v1305 = vunpack.c.l.s8.bf16 %v1023
        %v1306 = vunpack.c.l.s8.bf16 %v1024
        %v1307 = vunpack.c.h.s8.bf16 %v1023
        %v1308 = vunpack.c.h.s8.bf16 %v1024
        %v1309 = vunpack.c.l.s8.bf16 %v1025
        %v1310 = vunpack.c.l.s8.bf16 %v1026
        %v1311 = vunpack.c.h.s8.bf16 %v1025
        %v1312 = vunpack.c.h.s8.bf16 %v1026
        %v1313 = vunpack.c.l.s8.bf16 %v1027
        %v1314 = vunpack.c.l.s8.bf16 %v1028
        %v1315 = vunpack.c.h.s8.bf16 %v1027
        %v1316 = vunpack.c.h.s8.bf16 %v1028
        %v1317 = vunpack.c.l.s8.bf16 %v1029
        %v1318 = vunpack.c.l.s8.bf16 %v1030
        %v1319 = vunpack.c.h.s8.bf16 %v1029
        %v1320 = vunpack.c.h.s8.bf16 %v1030
        %v1321 = vunpack.c.l.s8.bf16 %v1031
        %v1322 = vunpack.c.l.s8.bf16 %v1032
        %v1323 = vunpack.c.h.s8.bf16 %v1031
        %v1324 = vunpack.c.h.s8.bf16 %v1032
        %v1325 = vunpack.c.l.s8.bf16 %v1033
        %v1326 = vunpack.c.l.s8.bf16 %v1034
        %v1327 = vunpack.c.h.s8.bf16 %v1033
        %v1328 = vunpack.c.h.s8.bf16 %v1034
        %v1329 = vunpack.c.l.s8.bf16 %v1035
        %v1330 = vunpack.c.l.s8.bf16 %v1036
        %v1331 = vunpack.c.h.s8.bf16 %v1035
        %v1332 = vunpack.c.h.s8.bf16 %v1036
        %v1333 = vunpack.c.l.s8.bf16 %v1037
        %v1334 = vunpack.c.l.s8.bf16 %v1038
        %v1335 = vunpack.c.h.s8.bf16 %v1037
        %v1336 = vunpack.c.h.s8.bf16 %v1038
        %v1337 = vunpack.c.l.s8.bf16 %v1039
        %v1338 = vunpack.c.l.s8.bf16 %v1040
        %v1339 = vunpack.c.h.s8.bf16 %v1039
        %v1340 = vunpack.c.h.s8.bf16 %v1040
        %v1341 = vunpack.c.l.s8.bf16 %v1041
        %v1342 = vunpack.c.l.s8.bf16 %v1042
        %v1343 = vunpack.c.h.s8.bf16 %v1041
        %v1344 = vunpack.c.h.s8.bf16 %v1042
        %v1345 = vunpack.c.l.s8.bf16 %v1043
        %v1346 = vunpack.c.l.s8.bf16 %v1044
        %v1347 = vunpack.c.h.s8.bf16 %v1043
        %v1348 = vunpack.c.h.s8.bf16 %v1044
        %v1349 = vunpack.c.l.s8.bf16 %v1045
        %v1350 = vunpack.c.l.s8.bf16 %v1046
        %v1351 = vunpack.c.h.s8.bf16 %v1045
        %v1352 = vunpack.c.h.s8.bf16 %v1046
        %v1353 = vunpack.c.l.s8.bf16 %v1047
        %v1354 = vunpack.c.l.s8.bf16 %v1048
        %v1355 = vunpack.c.h.s8.bf16 %v1047
        %v1356 = vunpack.c.h.s8.bf16 %v1048
        %v1357 = vunpack.c.l.s8.bf16 %v1049
        %v1358 = vunpack.c.l.s8.bf16 %v1050
        %v1359 = vunpack.c.h.s8.bf16 %v1049
        %v1360 = vunpack.c.h.s8.bf16 %v1050
        %v1361 = vunpack.c.l.s8.bf16 %v1051
        %v1362 = vunpack.c.l.s8.bf16 %v1052
        %v1363 = vunpack.c.h.s8.bf16 %v1051
        %v1364 = vunpack.c.h.s8.bf16 %v1052
        %v1365 = vunpack.c.l.s8.bf16 %v1053
        %v1366 = vunpack.c.l.s8.bf16 %v1054
        %v1367 = vunpack.c.h.s8.bf16 %v1053
        %v1368 = vunpack.c.h.s8.bf16 %v1054
        %v1369 = vunpack.c.l.s8.bf16 %v1055
        %v1370 = vunpack.c.l.s8.bf16 %v1056
        %v1371 = vunpack.c.h.s8.bf16 %v1055
        %v1372 = vunpack.c.h.s8.bf16 %v1056
        %v1373 = vunpack.c.l.s8.bf16 %v1057
        %v1374 = vunpack.c.l.s8.bf16 %v1058
        %v1375 = vunpack.c.h.s8.bf16 %v1057
        %v1376 = vunpack.c.h.s8.bf16 %v1058
        %v1377 = vunpack.c.l.s8.bf16 %v1059
        %v1378 = vunpack.c.l.s8.bf16 %v1060
        %v1379 = vunpack.c.h.s8.bf16 %v1059
        %v1380 = vunpack.c.h.s8.bf16 %v1060
        %v1381 = vunpack.c.l.s8.bf16 %v1061
        %v1382 = vunpack.c.l.s8.bf16 %v1062
        %v1383 = vunpack.c.h.s8.bf16 %v1061
        %v1384 = vunpack.c.h.s8.bf16 %v1062
        %v1385 = vunpack.c.l.s8.bf16 %v1063
        %v1386 = vunpack.c.l.s8.bf16 %v1064
        %v1387 = vunpack.c.h.s8.bf16 %v1063
        %v1388 = vunpack.c.h.s8.bf16 %v1064
        %v1389 = vunpack.c.l.s8.bf16 %v1065
        %v1390 = vunpack.c.l.s8.bf16 %v1066
        %v1391 = vunpack.c.h.s8.bf16 %v1065
        %v1392 = vunpack.c.h.s8.bf16 %v1066
        %v1393 = vunpack.c.l.s8.bf16 %v1067
        %v1394 = vunpack.c.l.s8.bf16 %v1068
        %v1395 = vunpack.c.h.s8.bf16 %v1067
        %v1396 = vunpack.c.h.s8.bf16 %v1068
        %v1397 = vunpack.c.l.s8.bf16 %v1069
        %v1398 = vunpack.c.l.s8.bf16 %v1070
        %v1399 = vunpack.c.h.s8.bf16 %v1069
        %v1400 = vunpack.c.h.s8.bf16 %v1070
        %v1401 = vunpack.c.l.s8.bf16 %v1071
        %v1402 = vunpack.c.l.s8.bf16 %v1072
        %v1403 = vunpack.c.h.s8.bf16 %v1071
        %v1404 = vunpack.c.h.s8.bf16 %v1072
        %v1405 = vunpack.c.l.s8.bf16 %v1073
        %v1406 = vunpack.c.l.s8.bf16 %v1074
        %v1407 = vunpack.c.h.s8.bf16 %v1073
        %v1408 = vunpack.c.h.s8.bf16 %v1074
        %v1409 = vunpack.c.l.s8.bf16 %v1075
        %v1410 = vunpack.c.l.s8.bf16 %v1076
        %v1411 = vunpack.c.h.s8.bf16 %v1075
        %v1412 = vunpack.c.h.s8.bf16 %v1076
        %v1413 = vunpack.c.l.s8.bf16 %v1077
        %v1414 = vunpack.c.l.s8.bf16 %v1078
        %v1415 = vunpack.c.h.s8.bf16 %v1077
        %v1416 = vunpack.c.h.s8.bf16 %v1078
        %v1417 = vunpack.c.l.s8.bf16 %v1079
        %v1418 = vunpack.c.l.s8.bf16 %v1080
        %v1419 = vunpack.c.h.s8.bf16 %v1079
        %v1420 = vunpack.c.h.s8.bf16 %v1080
        %v1421 = vunpack.c.l.s8.bf16 %v1081
        %v1422 = vunpack.c.l.s8.bf16 %v1082
        %v1423 = vunpack.c.h.s8.bf16 %v1081
        %v1424 = vunpack.c.h.s8.bf16 %v1082
        %v1425 = vunpack.c.l.s8.bf16 %v1083
        %v1426 = vunpack.c.l.s8.bf16 %v1084
        %v1427 = vunpack.c.h.s8.bf16 %v1083
        %v1428 = vunpack.c.h.s8.bf16 %v1084
        %v1429 = vunpack.c.l.s8.bf16 %v1085
        %v1430 = vunpack.c.l.s8.bf16 %v1086
        %v1431 = vunpack.c.h.s8.bf16 %v1085
        %v1432 = vunpack.c.h.s8.bf16 %v1086
        %v1433 = vunpack.c.l.s8.bf16 %v1087
        %v1434 = vunpack.c.l.s8.bf16 %v1088
        %v1435 = vunpack.c.h.s8.bf16 %v1087
        %v1436 = vunpack.c.h.s8.bf16 %v1088
        %v1437 = vunpack.c.l.s8.bf16 %v1089
        %v1438 = vunpack.c.l.s8.bf16 %v1090
        %v1439 = vunpack.c.h.s8.bf16 %v1089
        %v1440 = vunpack.c.h.s8.bf16 %v1090
        %v1441 = vunpack.c.l.s8.bf16 %v1091
        %v1442 = vunpack.c.l.s8.bf16 %v1092
        %v1443 = vunpack.c.h.s8.bf16 %v1091
        %v1444 = vunpack.c.h.s8.bf16 %v1092
        %v1445 = vunpack.c.l.s8.bf16 %v1093
        %v1446 = vunpack.c.l.s8.bf16 %v1094
        %v1447 = vunpack.c.h.s8.bf16 %v1093
        %v1448 = vunpack.c.h.s8.bf16 %v1094
        %v1449 = vunpack.c.l.s8.bf16 %v1095
        %v1450 = vunpack.c.l.s8.bf16 %v1096
        %v1451 = vunpack.c.h.s8.bf16 %v1095
        %v1452 = vunpack.c.h.s8.bf16 %v1096
        %v1453 = vunpack.c.l.s8.bf16 %v1097
        %v1454 = vunpack.c.l.s8.bf16 %v1098
        %v1455 = vunpack.c.h.s8.bf16 %v1097
        %v1456 = vunpack.c.h.s8.bf16 %v1098
        %v1457 = vunpack.c.l.s8.bf16 %v1099
        %v1458 = vunpack.c.l.s8.bf16 %v1100
        %v1459 = vunpack.c.h.s8.bf16 %v1099
        %v1460 = vunpack.c.h.s8.bf16 %v1100
        %v1461 = vunpack.c.l.s8.bf16 %v1101
        %v1462 = vunpack.c.l.s8.bf16 %v1102
        %v1463 = vunpack.c.h.s8.bf16 %v1101
        %v1464 = vunpack.c.h.s8.bf16 %v1102
        %v1465 = vunpack.c.l.s8.bf16 %v1103
        %v1466 = vunpack.c.l.s8.bf16 %v1104
        %v1467 = vunpack.c.h.s8.bf16 %v1103
        %v1468 = vunpack.c.h.s8.bf16 %v1104
        %v1469 = vunpack.c.l.s8.bf16 %v1105
        %v1470 = vunpack.c.l.s8.bf16 %v1106
        %v1471 = vunpack.c.h.s8.bf16 %v1105
        %v1472 = vunpack.c.h.s8.bf16 %v1106
        %v1473 = vunpack.c.l.s8.bf16 %v1107
        %v1474 = vunpack.c.l.s8.bf16 %v1108
        %v1475 = vunpack.c.h.s8.bf16 %v1107
        %v1476 = vunpack.c.h.s8.bf16 %v1108
        %v1477 = vunpack.c.l.s8.bf16 %v1109
        %v1478 = vunpack.c.l.s8.bf16 %v1110
        %v1479 = vunpack.c.h.s8.bf16 %v1109
        %v1480 = vunpack.c.h.s8.bf16 %v1110
        %v1481 = vunpack.c.l.s8.bf16 %v1111
        %v1482 = vunpack.c.l.s8.bf16 %v1112
        %v1483 = vunpack.c.h.s8.bf16 %v1111
        %v1484 = vunpack.c.h.s8.bf16 %v1112
        %v1485 = vunpack.c.l.s8.bf16 %v1113
        %v1486 = vunpack.c.l.s8.bf16 %v1114
        %v1487 = vunpack.c.h.s8.bf16 %v1113
        %v1488 = vunpack.c.h.s8.bf16 %v1114
        %v1489 = vunpack.c.l.s8.bf16 %v1115
        %v1490 = vunpack.c.l.s8.bf16 %v1116
        %v1491 = vunpack.c.h.s8.bf16 %v1115
        %v1492 = vunpack.c.h.s8.bf16 %v1116
        %v1493 = vunpack.c.l.s8.bf16 %v1117
        %v1494 = vunpack.c.l.s8.bf16 %v1118
        %v1495 = vunpack.c.h.s8.bf16 %v1117
        %v1496 = vunpack.c.h.s8.bf16 %v1118
        %v1497 = vunpack.c.l.s8.bf16 %v1119
        %v1498 = vunpack.c.l.s8.bf16 %v1120
        %v1499 = vunpack.c.h.s8.bf16 %v1119
        %v1500 = vunpack.c.h.s8.bf16 %v1120
        %v1501 = vunpack.c.l.s8.bf16 %v1121
        %v1502 = vunpack.c.l.s8.bf16 %v1122
        %v1503 = vunpack.c.h.s8.bf16 %v1121
        %v1504 = vunpack.c.h.s8.bf16 %v1122
        %v1505 = vunpack.c.l.s8.bf16 %v1123
        %v1506 = vunpack.c.l.s8.bf16 %v1124
        %v1507 = vunpack.c.h.s8.bf16 %v1123
        %v1508 = vunpack.c.h.s8.bf16 %v1124
        %v1521 = vunpack.c.l.b16 %v921
        %v1522 = vunpack.c.h.b16 %v921
        %v1523 = vunpack.c.l.b16 %v922
        %v1524 = vunpack.c.h.b16 %v922
        %v1525 = vunpack.c.l.b16 %v923
        %v1526 = vunpack.c.h.b16 %v923
        %v1527 = vunpack.c.l.b16 %v924
        %v1528 = vunpack.c.h.b16 %v924
        %v1529 = vunpack.c.l.b16 %v925
        %v1530 = vunpack.c.h.b16 %v925
        %v1531 = vunpack.c.l.b16 %v926
        %v1532 = vunpack.c.h.b16 %v926
        %v1533 = vunpack.c.l.b16 %v927
        %v1534 = vunpack.c.h.b16 %v927
        %v1535 = vunpack.c.l.b16 %v928
        %v1536 = vunpack.c.h.b16 %v928
        %v1537 = vunpack.c.l.b16 %v929
        %v1538 = vunpack.c.h.b16 %v929
        %v1539 = vunpack.c.l.b16 %v930
        %v1540 = vunpack.c.h.b16 %v930
        %v1541 = vunpack.c.l.b16 %v931
        %v1542 = vunpack.c.h.b16 %v931
        %v1543 = vunpack.c.l.b16 %v932
        %v1544 = vunpack.c.h.b16 %v932
        %v1545 = vpack.c.b16 %v1521, %v1521
        %v1546 = vpack.c.b16 %v1522, %v1522
        %v1547 = vpack.c.b16 %v1523, %v1523
        %v1548 = vpack.c.b16 %v1524, %v1524
        %v1549 = vpack.c.b16 %v1525, %v1525
        %v1550 = vpack.c.b16 %v1526, %v1526
        %v1551 = vpack.c.b16 %v1527, %v1527
        %v1552 = vpack.c.b16 %v1528, %v1528
        %v1553 = vpack.c.b16 %v1529, %v1529
        %v1554 = vpack.c.b16 %v1530, %v1530
        %v1555 = vpack.c.b16 %v1531, %v1531
        %v1556 = vpack.c.b16 %v1532, %v1532
        %v1557 = vpack.c.b16 %v1533, %v1533
        %v1558 = vpack.c.b16 %v1534, %v1534
        %v1559 = vpack.c.b16 %v1535, %v1535
        %v1560 = vpack.c.b16 %v1536, %v1536
        %v1561 = vpack.c.b16 %v1537, %v1537
        %v1562 = vpack.c.b16 %v1538, %v1538
        %v1563 = vpack.c.b16 %v1539, %v1539
        %v1564 = vpack.c.b16 %v1540, %v1540
        %v1565 = vpack.c.b16 %v1541, %v1541
        %v1566 = vpack.c.b16 %v1542, %v1542
        %v1567 = vpack.c.b16 %v1543, %v1543
        %v1568 = vpack.c.b16 %v1544, %v1544
        %1593 = vmatprep.subr.bf16.mxu0 %v1126
        %1594 = vmatpush1.bf16.msra.mxu0 %v1125
        %1595 = vmatprep.subr.bf16.mxu0 %v1128
        %1596 = vmatpush1.bf16.msra.mxu0 %v1127
        %1597 = vmatprep.subr.bf16.mxu0 %v1130
        %1598 = vmatpush1.bf16.msra.mxu0 %v1129
        %1599 = vmatprep.subr.bf16.mxu0 %v1132
        %1600 = vmatpush1.bf16.msra.mxu0 %v1131
        %1601 = vmatprep.subr.bf16.mxu0 %v1134
        %1602 = vmatpush1.bf16.msra.mxu0 %v1133
        %1603 = vmatprep.subr.bf16.mxu0 %v1136
        %1604 = vmatpush1.bf16.msra.mxu0 %v1135
        %1605 = vmatprep.subr.bf16.mxu0 %v1138
        %1606 = vmatpush1.bf16.msra.mxu0 %v1137
        %1607 = vmatprep.subr.bf16.mxu0 %v1140
        %1608 = vmatpush1.bf16.msra.mxu0 %v1139
        %1609 = vmatprep.subr.bf16.mxu0 %v1142
        %1610 = vmatpush1.bf16.msra.mxu0 %v1141
        %1611 = vmatprep.subr.bf16.mxu0 %v1144
        %1612 = vmatpush1.bf16.msra.mxu0 %v1143
        %1613 = vmatprep.subr.bf16.mxu0 %v1146
        %1614 = vmatpush1.bf16.msra.mxu0 %v1145
        %1615 = vmatprep.subr.bf16.mxu0 %v1148
        %1616 = vmatpush1.bf16.msra.mxu0 %v1147
        %1617 = vmatprep.subr.bf16.mxu0 %v1150
        %1618 = vmatpush1.bf16.msra.mxu0 %v1149
        %1619 = vmatprep.subr.bf16.mxu0 %v1152
        %1620 = vmatpush1.bf16.msra.mxu0 %v1151
        %1621 = vmatprep.subr.bf16.mxu0 %v1154
        %1622 = vmatpush1.bf16.msra.mxu0 %v1153
        %1623 = vmatprep.subr.bf16.mxu0 %v1156
        %1624 = vmatpush1.bf16.msra.mxu0 %v1155
        %1625 = vmatprep.mubr.bf16.mxu0 %v1546
        %1626 = vmatmul.mubr.bf16.gmra.mrb[0].mxu0 %v1545
        %v1627 = vpop.f32.mrb[0].mxu0
        %v1628 = vadd.f32 0.0, %v1627
        %v1629 = vpop.f32.mrb[0].mxu0
        %v1630 = vadd.f32 0.0, %v1629
        %v1631 = vpop.f32.mrb[0].mxu0
        %v1632 = vpop.f32.mrb[0].mxu0
        %1633 = vdwg.mxu0
        %1634 = vmatprep.subr.bf16.mxu0 %v1158
        %1635 = vmatpush1.bf16.msra.mxu0 %v1157
        %1636 = vmatprep.subr.bf16.mxu0 %v1160
        %1637 = vmatpush1.bf16.msra.mxu0 %v1159
        %1638 = vmatprep.subr.bf16.mxu0 %v1162
        %1639 = vmatpush1.bf16.msra.mxu0 %v1161
        %1640 = vmatprep.subr.bf16.mxu0 %v1164
        %1641 = vmatpush1.bf16.msra.mxu0 %v1163
        %1642 = vmatprep.subr.bf16.mxu0 %v1166
        %1643 = vmatpush1.bf16.msra.mxu0 %v1165
        %1644 = vmatprep.subr.bf16.mxu0 %v1168
        %1645 = vmatpush1.bf16.msra.mxu0 %v1167
        %1646 = vmatprep.subr.bf16.mxu0 %v1170
        %1647 = vmatpush1.bf16.msra.mxu0 %v1169
        %1648 = vmatprep.subr.bf16.mxu0 %v1172
        %1649 = vmatpush1.bf16.msra.mxu0 %v1171
        %1650 = vmatprep.subr.bf16.mxu0 %v1174
        %1651 = vmatpush1.bf16.msra.mxu0 %v1173
        %1652 = vmatprep.subr.bf16.mxu0 %v1176
        %1653 = vmatpush1.bf16.msra.mxu0 %v1175
        %1654 = vmatprep.subr.bf16.mxu0 %v1178
        %1655 = vmatpush1.bf16.msra.mxu0 %v1177
        %1656 = vmatprep.subr.bf16.mxu0 %v1180
        %1657 = vmatpush1.bf16.msra.mxu0 %v1179
        %1658 = vmatprep.subr.bf16.mxu0 %v1182
        %1659 = vmatpush1.bf16.msra.mxu0 %v1181
        %1660 = vmatprep.subr.bf16.mxu0 %v1184
        %1661 = vmatpush1.bf16.msra.mxu0 %v1183
        %1662 = vmatprep.subr.bf16.mxu0 %v1186
        %1663 = vmatpush1.bf16.msra.mxu0 %v1185
        %1664 = vmatprep.subr.bf16.mxu0 %v1188
        %1665 = vmatpush1.bf16.msra.mxu0 %v1187
        %1666 = vmatprep.mubr.bf16.mxu0 %v1548
        %1667 = vmatmul.mubr.bf16.gmra.mrb[0].mxu0 %v1547
        %v1668 = vpop.f32.mrb[0].mxu0
        %v1669 = vadd.f32 %v1628, %v1668
        %v1670 = vpop.f32.mrb[0].mxu0
        %v1671 = vadd.f32 %v1630, %v1670
        %v1672 = vpop.f32.mrb[0].mxu0
        %v1673 = vpop.f32.mrb[0].mxu0
        %1674 = vdwg.mxu0
        %1675 = vmatprep.subr.bf16.mxu0 %v1190
        %1676 = vmatpush1.bf16.msra.mxu0 %v1189
        %1677 = vmatprep.subr.bf16.mxu0 %v1192
        %1678 = vmatpush1.bf16.msra.mxu0 %v1191
        %1679 = vmatprep.subr.bf16.mxu0 %v1194
        %1680 = vmatpush1.bf16.msra.mxu0 %v1193
        %1681 = vmatprep.subr.bf16.mxu0 %v1196
        %1682 = vmatpush1.bf16.msra.mxu0 %v1195
        %1683 = vmatprep.subr.bf16.mxu0 %v1198
        %1684 = vmatpush1.bf16.msra.mxu0 %v1197
        %1685 = vmatprep.subr.bf16.mxu0 %v1200
        %1686 = vmatpush1.bf16.msra.mxu0 %v1199
        %1687 = vmatprep.subr.bf16.mxu0 %v1202
        %1688 = vmatpush1.bf16.msra.mxu0 %v1201
        %1689 = vmatprep.subr.bf16.mxu0 %v1204
        %1690 = vmatpush1.bf16.msra.mxu0 %v1203
        %1691 = vmatprep.subr.bf16.mxu0 %v1206
        %1692 = vmatpush1.bf16.msra.mxu0 %v1205
        %1693 = vmatprep.subr.bf16.mxu0 %v1208
        %1694 = vmatpush1.bf16.msra.mxu0 %v1207
        %1695 = vmatprep.subr.bf16.mxu0 %v1210
        %1696 = vmatpush1.bf16.msra.mxu0 %v1209
        %1697 = vmatprep.subr.bf16.mxu0 %v1212
        %1698 = vmatpush1.bf16.msra.mxu0 %v1211
        %1699 = vmatprep.subr.bf16.mxu0 %v1214
        %1700 = vmatpush1.bf16.msra.mxu0 %v1213
        %1701 = vmatprep.subr.bf16.mxu0 %v1216
        %1702 = vmatpush1.bf16.msra.mxu0 %v1215
        %1703 = vmatprep.subr.bf16.mxu0 %v1218
        %1704 = vmatpush1.bf16.msra.mxu0 %v1217
        %1705 = vmatprep.subr.bf16.mxu0 %v1220
        %1706 = vmatpush1.bf16.msra.mxu0 %v1219
        %1707 = vmatprep.mubr.bf16.mxu0 %v1550
        %1708 = vmatmul.mubr.bf16.gmra.mrb[0].mxu0 %v1549
        %v1709 = vpop.f32.mrb[0].mxu0
        %v1710 = vadd.f32 %v1669, %v1709
        %v1711 = vpop.f32.mrb[0].mxu0
        %v1712 = vadd.f32 %v1671, %v1711
        %v1713 = vpop.f32.mrb[0].mxu0
        %v1714 = vpop.f32.mrb[0].mxu0
        %1715 = vdwg.mxu0
        %1716 = vmatprep.subr.bf16.mxu0 %v1222
        %1717 = vmatpush1.bf16.msra.mxu0 %v1221
        %1718 = vmatprep.subr.bf16.mxu0 %v1224
        %1719 = vmatpush1.bf16.msra.mxu0 %v1223
        %1720 = vmatprep.subr.bf16.mxu0 %v1226
        %1721 = vmatpush1.bf16.msra.mxu0 %v1225
        %1722 = vmatprep.subr.bf16.mxu0 %v1228
        %1723 = vmatpush1.bf16.msra.mxu0 %v1227
        %1724 = vmatprep.subr.bf16.mxu0 %v1230
        %1725 = vmatpush1.bf16.msra.mxu0 %v1229
        %1726 = vmatprep.subr.bf16.mxu0 %v1232
        %1727 = vmatpush1.bf16.msra.mxu0 %v1231
        %1728 = vmatprep.subr.bf16.mxu0 %v1234
        %1729 = vmatpush1.bf16.msra.mxu0 %v1233
        %1730 = vmatprep.subr.bf16.mxu0 %v1236
        %1731 = vmatpush1.bf16.msra.mxu0 %v1235
        %1732 = vmatprep.subr.bf16.mxu0 %v1238
        %1733 = vmatpush1.bf16.msra.mxu0 %v1237
        %1734 = vmatprep.subr.bf16.mxu0 %v1240
        %1735 = vmatpush1.bf16.msra.mxu0 %v1239
        %1736 = vmatprep.subr.bf16.mxu0 %v1242
        %1737 = vmatpush1.bf16.msra.mxu0 %v1241
        %1738 = vmatprep.subr.bf16.mxu0 %v1244
        %1739 = vmatpush1.bf16.msra.mxu0 %v1243
        %1740 = vmatprep.subr.bf16.mxu0 %v1246
        %1741 = vmatpush1.bf16.msra.mxu0 %v1245
        %1742 = vmatprep.subr.bf16.mxu0 %v1248
        %1743 = vmatpush1.bf16.msra.mxu0 %v1247
        %1744 = vmatprep.subr.bf16.mxu0 %v1250
        %1745 = vmatpush1.bf16.msra.mxu0 %v1249
        %1746 = vmatprep.subr.bf16.mxu0 %v1252
        %1747 = vmatpush1.bf16.msra.mxu0 %v1251
        %1748 = vmatprep.mubr.bf16.mxu0 %v1552
        %1749 = vmatmul.mubr.bf16.gmra.mrb[0].mxu0 %v1551
        %v1750 = vpop.f32.mrb[0].mxu0
        %v1751 = vadd.f32 %v1710, %v1750
        %v1752 = vpop.f32.mrb[0].mxu0
        %v1753 = vadd.f32 %v1712, %v1752
        %v1754 = vpop.f32.mrb[0].mxu0
        %v1755 = vpop.f32.mrb[0].mxu0
        %1756 = vdwg.mxu0
        %1757 = vmatprep.subr.bf16.mxu0 %v1254
        %1758 = vmatpush1.bf16.msra.mxu0 %v1253
        %1759 = vmatprep.subr.bf16.mxu0 %v1256
        %1760 = vmatpush1.bf16.msra.mxu0 %v1255
        %1761 = vmatprep.subr.bf16.mxu0 %v1258
        %1762 = vmatpush1.bf16.msra.mxu0 %v1257
        %1763 = vmatprep.subr.bf16.mxu0 %v1260
        %1764 = vmatpush1.bf16.msra.mxu0 %v1259
        %1765 = vmatprep.subr.bf16.mxu0 %v1262
        %1766 = vmatpush1.bf16.msra.mxu0 %v1261
        %1767 = vmatprep.subr.bf16.mxu0 %v1264
        %1768 = vmatpush1.bf16.msra.mxu0 %v1263
        %1769 = vmatprep.subr.bf16.mxu0 %v1266
        %1770 = vmatpush1.bf16.msra.mxu0 %v1265
        %1771 = vmatprep.subr.bf16.mxu0 %v1268
        %1772 = vmatpush1.bf16.msra.mxu0 %v1267
        %1773 = vmatprep.subr.bf16.mxu0 %v1270
        %1774 = vmatpush1.bf16.msra.mxu0 %v1269
        %1775 = vmatprep.subr.bf16.mxu0 %v1272
        %1776 = vmatpush1.bf16.msra.mxu0 %v1271
        %1777 = vmatprep.subr.bf16.mxu0 %v1274
        %1778 = vmatpush1.bf16.msra.mxu0 %v1273
        %1779 = vmatprep.subr.bf16.mxu0 %v1276
        %1780 = vmatpush1.bf16.msra.mxu0 %v1275
        %1781 = vmatprep.subr.bf16.mxu0 %v1278
        %1782 = vmatpush1.bf16.msra.mxu0 %v1277
        %1783 = vmatprep.subr.bf16.mxu0 %v1280
        %1784 = vmatpush1.bf16.msra.mxu0 %v1279
        %1785 = vmatprep.subr.bf16.mxu0 %v1282
        %1786 = vmatpush1.bf16.msra.mxu0 %v1281
        %1787 = vmatprep.subr.bf16.mxu0 %v1284
        %1788 = vmatpush1.bf16.msra.mxu0 %v1283
        %1789 = vmatprep.mubr.bf16.mxu0 %v1554
        %1790 = vmatmul.mubr.bf16.gmra.mrb[0].mxu0 %v1553
        %v1791 = vpop.f32.mrb[0].mxu0
        %v1792 = vadd.f32 %v1751, %v1791
        %v1793 = vpop.f32.mrb[0].mxu0
        %v1794 = vadd.f32 %v1753, %v1793
        %v1795 = vpop.f32.mrb[0].mxu0
        %v1796 = vpop.f32.mrb[0].mxu0
        %1797 = vdwg.mxu0
        %1798 = vmatprep.subr.bf16.mxu0 %v1286
        %1799 = vmatpush1.bf16.msra.mxu0 %v1285
        %1800 = vmatprep.subr.bf16.mxu0 %v1288
        %1801 = vmatpush1.bf16.msra.mxu0 %v1287
        %1802 = vmatprep.subr.bf16.mxu0 %v1290
        %1803 = vmatpush1.bf16.msra.mxu0 %v1289
        %1804 = vmatprep.subr.bf16.mxu0 %v1292
        %1805 = vmatpush1.bf16.msra.mxu0 %v1291
        %1806 = vmatprep.subr.bf16.mxu0 %v1294
        %1807 = vmatpush1.bf16.msra.mxu0 %v1293
        %1808 = vmatprep.subr.bf16.mxu0 %v1296
        %1809 = vmatpush1.bf16.msra.mxu0 %v1295
        %1810 = vmatprep.subr.bf16.mxu0 %v1298
        %1811 = vmatpush1.bf16.msra.mxu0 %v1297
        %1812 = vmatprep.subr.bf16.mxu0 %v1300
        %1813 = vmatpush1.bf16.msra.mxu0 %v1299
        %1814 = vmatprep.subr.bf16.mxu0 %v1302
        %1815 = vmatpush1.bf16.msra.mxu0 %v1301
        %1816 = vmatprep.subr.bf16.mxu0 %v1304
        %1817 = vmatpush1.bf16.msra.mxu0 %v1303
        %1818 = vmatprep.subr.bf16.mxu0 %v1306
        %1819 = vmatpush1.bf16.msra.mxu0 %v1305
        %1820 = vmatprep.subr.bf16.mxu0 %v1308
        %1821 = vmatpush1.bf16.msra.mxu0 %v1307
        %1822 = vmatprep.subr.bf16.mxu0 %v1310
        %1823 = vmatpush1.bf16.msra.mxu0 %v1309
        %1824 = vmatprep.subr.bf16.mxu0 %v1312
        %1825 = vmatpush1.bf16.msra.mxu0 %v1311
        %1826 = vmatprep.subr.bf16.mxu0 %v1314
        %1827 = vmatpush1.bf16.msra.mxu0 %v1313
        %1828 = vmatprep.subr.bf16.mxu0 %v1316
        %1829 = vmatpush1.bf16.msra.mxu0 %v1315
        %1830 = vmatprep.mubr.bf16.mxu0 %v1556
        %1831 = vmatmul.mubr.bf16.gmra.mrb[0].mxu0 %v1555
        %v1832 = vpop.f32.mrb[0].mxu0
        %v1833 = vadd.f32 %v1792, %v1832
        %v1834 = vpop.f32.mrb[0].mxu0
        %v1835 = vadd.f32 %v1794, %v1834
        %v1836 = vpop.f32.mrb[0].mxu0
        %v1837 = vpop.f32.mrb[0].mxu0
        %1838 = vdwg.mxu0
        %1839 = vmatprep.subr.bf16.mxu0 %v1318
        %1840 = vmatpush1.bf16.msra.mxu0 %v1317
        %1841 = vmatprep.subr.bf16.mxu0 %v1320
        %1842 = vmatpush1.bf16.msra.mxu0 %v1319
        %1843 = vmatprep.subr.bf16.mxu0 %v1322
        %1844 = vmatpush1.bf16.msra.mxu0 %v1321
        %1845 = vmatprep.subr.bf16.mxu0 %v1324
        %1846 = vmatpush1.bf16.msra.mxu0 %v1323
        %1847 = vmatprep.subr.bf16.mxu0 %v1326
        %1848 = vmatpush1.bf16.msra.mxu0 %v1325
        %1849 = vmatprep.subr.bf16.mxu0 %v1328
        %1850 = vmatpush1.bf16.msra.mxu0 %v1327
        %1851 = vmatprep.subr.bf16.mxu0 %v1330
        %1852 = vmatpush1.bf16.msra.mxu0 %v1329
        %1853 = vmatprep.subr.bf16.mxu0 %v1332
        %1854 = vmatpush1.bf16.msra.mxu0 %v1331
        %1855 = vmatprep.subr.bf16.mxu0 %v1334
        %1856 = vmatpush1.bf16.msra.mxu0 %v1333
        %1857 = vmatprep.subr.bf16.mxu0 %v1336
        %1858 = vmatpush1.bf16.msra.mxu0 %v1335
        %1859 = vmatprep.subr.bf16.mxu0 %v1338
        %1860 = vmatpush1.bf16.msra.mxu0 %v1337
        %1861 = vmatprep.subr.bf16.mxu0 %v1340
        %1862 = vmatpush1.bf16.msra.mxu0 %v1339
        %1863 = vmatprep.subr.bf16.mxu0 %v1342
        %1864 = vmatpush1.bf16.msra.mxu0 %v1341
        %1865 = vmatprep.subr.bf16.mxu0 %v1344
        %1866 = vmatpush1.bf16.msra.mxu0 %v1343
        %1867 = vmatprep.subr.bf16.mxu0 %v1346
        %1868 = vmatpush1.bf16.msra.mxu0 %v1345
        %1869 = vmatprep.subr.bf16.mxu0 %v1348
        %1870 = vmatpush1.bf16.msra.mxu0 %v1347
        %1871 = vmatprep.mubr.bf16.mxu0 %v1558
        %1872 = vmatmul.mubr.bf16.gmra.mrb[0].mxu0 %v1557
        %v1873 = vpop.f32.mrb[0].mxu0
        %v1874 = vadd.f32 %v1833, %v1873
        %v1875 = vpop.f32.mrb[0].mxu0
        %v1876 = vadd.f32 %v1835, %v1875
        %v1877 = vpop.f32.mrb[0].mxu0
        %v1878 = vpop.f32.mrb[0].mxu0
        %1879 = vdwg.mxu0
        %1880 = vmatprep.subr.bf16.mxu0 %v1350
        %1881 = vmatpush1.bf16.msra.mxu0 %v1349
        %1882 = vmatprep.subr.bf16.mxu0 %v1352
        %1883 = vmatpush1.bf16.msra.mxu0 %v1351
        %1884 = vmatprep.subr.bf16.mxu0 %v1354
        %1885 = vmatpush1.bf16.msra.mxu0 %v1353
        %1886 = vmatprep.subr.bf16.mxu0 %v1356
        %1887 = vmatpush1.bf16.msra.mxu0 %v1355
        %1888 = vmatprep.subr.bf16.mxu0 %v1358
        %1889 = vmatpush1.bf16.msra.mxu0 %v1357
        %1890 = vmatprep.subr.bf16.mxu0 %v1360
        %1891 = vmatpush1.bf16.msra.mxu0 %v1359
        %1892 = vmatprep.subr.bf16.mxu0 %v1362
        %1893 = vmatpush1.bf16.msra.mxu0 %v1361
        %1894 = vmatprep.subr.bf16.mxu0 %v1364
        %1895 = vmatpush1.bf16.msra.mxu0 %v1363
        %1896 = vmatprep.subr.bf16.mxu0 %v1366
        %1897 = vmatpush1.bf16.msra.mxu0 %v1365
        %1898 = vmatprep.subr.bf16.mxu0 %v1368
        %1899 = vmatpush1.bf16.msra.mxu0 %v1367
        %1900 = vmatprep.subr.bf16.mxu0 %v1370
        %1901 = vmatpush1.bf16.msra.mxu0 %v1369
        %1902 = vmatprep.subr.bf16.mxu0 %v1372
        %1903 = vmatpush1.bf16.msra.mxu0 %v1371
        %1904 = vmatprep.subr.bf16.mxu0 %v1374
        %1905 = vmatpush1.bf16.msra.mxu0 %v1373
        %1906 = vmatprep.subr.bf16.mxu0 %v1376
        %1907 = vmatpush1.bf16.msra.mxu0 %v1375
        %1908 = vmatprep.subr.bf16.mxu0 %v1378
        %1909 = vmatpush1.bf16.msra.mxu0 %v1377
        %1910 = vmatprep.subr.bf16.mxu0 %v1380
        %1911 = vmatpush1.bf16.msra.mxu0 %v1379
        %1912 = vmatprep.mubr.bf16.mxu0 %v1560
        %1913 = vmatmul.mubr.bf16.gmra.mrb[0].mxu0 %v1559
        %v1914 = vpop.f32.mrb[0].mxu0
        %v1915 = vadd.f32 %v1874, %v1914
        %v1916 = vpop.f32.mrb[0].mxu0
        %v1917 = vadd.f32 %v1876, %v1916
        %v1918 = vpop.f32.mrb[0].mxu0
        %v1919 = vpop.f32.mrb[0].mxu0
        %1920 = vdwg.mxu0
        %1921 = vmatprep.subr.bf16.mxu0 %v1382
        %1922 = vmatpush1.bf16.msra.mxu0 %v1381
        %1923 = vmatprep.subr.bf16.mxu0 %v1384
        %1924 = vmatpush1.bf16.msra.mxu0 %v1383
        %1925 = vmatprep.subr.bf16.mxu0 %v1386
        %1926 = vmatpush1.bf16.msra.mxu0 %v1385
        %1927 = vmatprep.subr.bf16.mxu0 %v1388
        %1928 = vmatpush1.bf16.msra.mxu0 %v1387
        %1929 = vmatprep.subr.bf16.mxu0 %v1390
        %1930 = vmatpush1.bf16.msra.mxu0 %v1389
        %1931 = vmatprep.subr.bf16.mxu0 %v1392
        %1932 = vmatpush1.bf16.msra.mxu0 %v1391
        %1933 = vmatprep.subr.bf16.mxu0 %v1394
        %1934 = vmatpush1.bf16.msra.mxu0 %v1393
        %1935 = vmatprep.subr.bf16.mxu0 %v1396
        %1936 = vmatpush1.bf16.msra.mxu0 %v1395
        %1937 = vmatprep.subr.bf16.mxu0 %v1398
        %1938 = vmatpush1.bf16.msra.mxu0 %v1397
        %1939 = vmatprep.subr.bf16.mxu0 %v1400
        %1940 = vmatpush1.bf16.msra.mxu0 %v1399
        %1941 = vmatprep.subr.bf16.mxu0 %v1402
        %1942 = vmatpush1.bf16.msra.mxu0 %v1401
        %1943 = vmatprep.subr.bf16.mxu0 %v1404
        %1944 = vmatpush1.bf16.msra.mxu0 %v1403
        %1945 = vmatprep.subr.bf16.mxu0 %v1406
        %1946 = vmatpush1.bf16.msra.mxu0 %v1405
        %1947 = vmatprep.subr.bf16.mxu0 %v1408
        %1948 = vmatpush1.bf16.msra.mxu0 %v1407
        %1949 = vmatprep.subr.bf16.mxu0 %v1410
        %1950 = vmatpush1.bf16.msra.mxu0 %v1409
        %1951 = vmatprep.subr.bf16.mxu0 %v1412
        %1952 = vmatpush1.bf16.msra.mxu0 %v1411
        %1953 = vmatprep.mubr.bf16.mxu0 %v1562
        %1954 = vmatmul.mubr.bf16.gmra.mrb[0].mxu0 %v1561
        %v1955 = vpop.f32.mrb[0].mxu0
        %v1956 = vadd.f32 %v1915, %v1955
        %v1957 = vpop.f32.mrb[0].mxu0
        %v1958 = vadd.f32 %v1917, %v1957
        %v1959 = vpop.f32.mrb[0].mxu0
        %v1960 = vpop.f32.mrb[0].mxu0
        %1961 = vdwg.mxu0
        %1962 = vmatprep.subr.bf16.mxu0 %v1414
        %1963 = vmatpush1.bf16.msra.mxu0 %v1413
        %1964 = vmatprep.subr.bf16.mxu0 %v1416
        %1965 = vmatpush1.bf16.msra.mxu0 %v1415
        %1966 = vmatprep.subr.bf16.mxu0 %v1418
        %1967 = vmatpush1.bf16.msra.mxu0 %v1417
        %1968 = vmatprep.subr.bf16.mxu0 %v1420
        %1969 = vmatpush1.bf16.msra.mxu0 %v1419
        %1970 = vmatprep.subr.bf16.mxu0 %v1422
        %1971 = vmatpush1.bf16.msra.mxu0 %v1421
        %1972 = vmatprep.subr.bf16.mxu0 %v1424
        %1973 = vmatpush1.bf16.msra.mxu0 %v1423
        %1974 = vmatprep.subr.bf16.mxu0 %v1426
        %1975 = vmatpush1.bf16.msra.mxu0 %v1425
        %1976 = vmatprep.subr.bf16.mxu0 %v1428
        %1977 = vmatpush1.bf16.msra.mxu0 %v1427
        %1978 = vmatprep.subr.bf16.mxu0 %v1430
        %1979 = vmatpush1.bf16.msra.mxu0 %v1429
        %1980 = vmatprep.subr.bf16.mxu0 %v1432
        %1981 = vmatpush1.bf16.msra.mxu0 %v1431
        %1982 = vmatprep.subr.bf16.mxu0 %v1434
        %1983 = vmatpush1.bf16.msra.mxu0 %v1433
        %1984 = vmatprep.subr.bf16.mxu0 %v1436
        %1985 = vmatpush1.bf16.msra.mxu0 %v1435
        %1986 = vmatprep.subr.bf16.mxu0 %v1438
        %1987 = vmatpush1.bf16.msra.mxu0 %v1437
        %1988 = vmatprep.subr.bf16.mxu0 %v1440
        %1989 = vmatpush1.bf16.msra.mxu0 %v1439
        %1990 = vmatprep.subr.bf16.mxu0 %v1442
        %1991 = vmatpush1.bf16.msra.mxu0 %v1441
        %1992 = vmatprep.subr.bf16.mxu0 %v1444
        %1993 = vmatpush1.bf16.msra.mxu0 %v1443
        %1994 = vmatprep.mubr.bf16.mxu0 %v1564
        %1995 = vmatmul.mubr.bf16.gmra.mrb[0].mxu0 %v1563
        %v1996 = vpop.f32.mrb[0].mxu0
        %v1997 = vadd.f32 %v1956, %v1996
        %v1998 = vpop.f32.mrb[0].mxu0
        %v1999 = vadd.f32 %v1958, %v1998
        %v2000 = vpop.f32.mrb[0].mxu0
        %v2001 = vpop.f32.mrb[0].mxu0
        %2002 = vdwg.mxu0
        %2003 = vmatprep.subr.bf16.mxu0 %v1446
        %2004 = vmatpush1.bf16.msra.mxu0 %v1445
        %2005 = vmatprep.subr.bf16.mxu0 %v1448
        %2006 = vmatpush1.bf16.msra.mxu0 %v1447
        %2007 = vmatprep.subr.bf16.mxu0 %v1450
        %2008 = vmatpush1.bf16.msra.mxu0 %v1449
        %2009 = vmatprep.subr.bf16.mxu0 %v1452
        %2010 = vmatpush1.bf16.msra.mxu0 %v1451
        %2011 = vmatprep.subr.bf16.mxu0 %v1454
        %2012 = vmatpush1.bf16.msra.mxu0 %v1453
        %2013 = vmatprep.subr.bf16.mxu0 %v1456
        %2014 = vmatpush1.bf16.msra.mxu0 %v1455
        %2015 = vmatprep.subr.bf16.mxu0 %v1458
        %2016 = vmatpush1.bf16.msra.mxu0 %v1457
        %2017 = vmatprep.subr.bf16.mxu0 %v1460
        %2018 = vmatpush1.bf16.msra.mxu0 %v1459
        %2019 = vmatprep.subr.bf16.mxu0 %v1462
        %2020 = vmatpush1.bf16.msra.mxu0 %v1461
        %2021 = vmatprep.subr.bf16.mxu0 %v1464
        %2022 = vmatpush1.bf16.msra.mxu0 %v1463
        %2023 = vmatprep.subr.bf16.mxu0 %v1466
        %2024 = vmatpush1.bf16.msra.mxu0 %v1465
        %2025 = vmatprep.subr.bf16.mxu0 %v1468
        %2026 = vmatpush1.bf16.msra.mxu0 %v1467
        %2027 = vmatprep.subr.bf16.mxu0 %v1470
        %2028 = vmatpush1.bf16.msra.mxu0 %v1469
        %2029 = vmatprep.subr.bf16.mxu0 %v1472
        %2030 = vmatpush1.bf16.msra.mxu0 %v1471
        %2031 = vmatprep.subr.bf16.mxu0 %v1474
        %2032 = vmatpush1.bf16.msra.mxu0 %v1473
        %2033 = vmatprep.subr.bf16.mxu0 %v1476
        %2034 = vmatpush1.bf16.msra.mxu0 %v1475
        %2035 = vmatprep.mubr.bf16.mxu0 %v1566
        %2036 = vmatmul.mubr.bf16.gmra.mrb[0].mxu0 %v1565
        %v2037 = vpop.f32.mrb[0].mxu0
        %v2038 = vadd.f32 %v1997, %v2037
        %v2039 = vpop.f32.mrb[0].mxu0
        %v2040 = vadd.f32 %v1999, %v2039
        %v2041 = vpop.f32.mrb[0].mxu0
        %v2042 = vpop.f32.mrb[0].mxu0
        %2043 = vdwg.mxu0
        %2044 = vmatprep.subr.bf16.mxu0 %v1478
        %2045 = vmatpush1.bf16.msra.mxu0 %v1477
        %2046 = vmatprep.subr.bf16.mxu0 %v1480
        %2047 = vmatpush1.bf16.msra.mxu0 %v1479
        %2048 = vmatprep.subr.bf16.mxu0 %v1482
        %2049 = vmatpush1.bf16.msra.mxu0 %v1481
        %2050 = vmatprep.subr.bf16.mxu0 %v1484
        %2051 = vmatpush1.bf16.msra.mxu0 %v1483
        %2052 = vmatprep.subr.bf16.mxu0 %v1486
        %2053 = vmatpush1.bf16.msra.mxu0 %v1485
        %2054 = vmatprep.subr.bf16.mxu0 %v1488
        %2055 = vmatpush1.bf16.msra.mxu0 %v1487
        %2056 = vmatprep.subr.bf16.mxu0 %v1490
        %2057 = vmatpush1.bf16.msra.mxu0 %v1489
        %2058 = vmatprep.subr.bf16.mxu0 %v1492
        %2059 = vmatpush1.bf16.msra.mxu0 %v1491
        %2060 = vmatprep.subr.bf16.mxu0 %v1494
        %2061 = vmatpush1.bf16.msra.mxu0 %v1493
        %2062 = vmatprep.subr.bf16.mxu0 %v1496
        %2063 = vmatpush1.bf16.msra.mxu0 %v1495
        %2064 = vmatprep.subr.bf16.mxu0 %v1498
        %2065 = vmatpush1.bf16.msra.mxu0 %v1497
        %2066 = vmatprep.subr.bf16.mxu0 %v1500
        %2067 = vmatpush1.bf16.msra.mxu0 %v1499
        %2068 = vmatprep.subr.bf16.mxu0 %v1502
        %2069 = vmatpush1.bf16.msra.mxu0 %v1501
        %2070 = vmatprep.subr.bf16.mxu0 %v1504
        %2071 = vmatpush1.bf16.msra.mxu0 %v1503
        %2072 = vmatprep.subr.bf16.mxu0 %v1506
        %2073 = vmatpush1.bf16.msra.mxu0 %v1505
        %2074 = vmatprep.subr.bf16.mxu0 %v1508
        %2075 = vmatpush1.bf16.msra.mxu0 %v1507
        %2076 = vmatprep.mubr.bf16.mxu0 %v1568
        %2077 = vmatmul.mubr.bf16.gmra.mrb[0].mxu0 %v1567
        %v2078 = vpop.f32.mrb[0].mxu0
        %v2079 = vadd.f32 %v2038, %v2078
        %v2080 = vpop.f32.mrb[0].mxu0
        %v2081 = vadd.f32 %v2040, %v2080
        %v2082 = vpop.f32.mrb[0].mxu0
        %v2083 = vpop.f32.mrb[0].mxu0
        %2084 = vdwg.mxu0
        %v2085 = vld [vmem:[%s767] sm:$0x3]
        %v2087 = vlaneseq
        %v2088 = vshrl.u32 %v2087, 7
        %v2089 = vsub.s32 0, %v2088
        %v2090 = vrot.slane %v2085, %v2089
        %v2091 = vlaneseq
        %v2092 = vshrl.u32 %v2091, 7
        %v2093 = vsub.s32 1, %v2092
        %v2094 = vrot.slane %v2085, %v2093
        %v2097 = vmul.f32 %v2079, %v2090
        %v2098 = vmul.f32 %v2081, %v2094
        %v2099 = vld [vmem:[%s776] sm:$0x3]
        %v2101 = vlaneseq
        %v2102 = vshrl.u32 %v2101, 7
        %v2103 = vsub.s32 0, %v2102
        %v2104 = vrot.slane %v2099, %v2103
        %v2105 = vlaneseq
        %v2106 = vshrl.u32 %v2105, 7
        %v2107 = vsub.s32 1, %v2106
        %v2108 = vrot.slane %v2099, %v2107
        %v2111 = vadd.f32 %v2097, %v2104
        %v2112 = vadd.f32 %v2098, %v2108
        %v2113 = vmax.f32 %v2111, 0.0
        %v2114 = vmax.f32 %v2112, 0.0
        %v2115 = vld [vmem:[#allocation2] sm:$0xff]
        %v2116 = vld [vmem:[#allocation2 + $0x8] sm:$0xff]
        %v2117 = vld [vmem:[#allocation2 + $0x10] sm:$0xff]
        %v2118 = vld [vmem:[#allocation2 + $0x18] sm:$0xff]
        %v2119 = vld [vmem:[#allocation2 + $0x20] sm:$0xff]
        %v2120 = vld [vmem:[#allocation2 + $0x28] sm:$0xff]
        %v2121 = vpack.c.bf16 %v2113, %v2113
        %v2122 = vpack.c.bf16 %v2114, %v2114
        %v2123 = vld [vmem:[%s785] sm:$0xff]
        %v2124 = vld [vmem:[%s785 + $0x8] sm:$0xff]
        %v2125 = vld [vmem:[%s785 + $0x10] sm:$0xff]
        %v2126 = vld [vmem:[%s785 + $0x18] sm:$0xff]
        %v2127 = vld [vmem:[%s785 + $0x20] sm:$0xff]
        %v2128 = vld [vmem:[%s785 + $0x28] sm:$0xff]
        %v2129 = vld [vmem:[%s785 + $0x30] sm:$0xff]
        %v2130 = vld [vmem:[%s785 + $0x38] sm:$0xff]
        %v2131 = vld [vmem:[%s785 + $0x40] sm:$0xff]
        %v2132 = vld [vmem:[%s785 + $0x48] sm:$0xff]
        %v2133 = vld [vmem:[%s785 + $0x50] sm:$0xff]
        %v2134 = vld [vmem:[%s785 + $0x58] sm:$0xff]
        %v2135 = vld [vmem:[%s785 + $0x60] sm:$0xff]
        %v2136 = vld [vmem:[%s785 + $0x68] sm:$0xff]
        %v2137 = vld [vmem:[%s785 + $0x70] sm:$0xff]
        %v2138 = vld [vmem:[%s785 + $0x78] sm:$0xff]
        %v2139 = vld [vmem:[%s785 + $0x80] sm:$0xff]
        %v2140 = vld [vmem:[%s785 + $0x88] sm:$0xff]
        %v2141 = vld [vmem:[%s785 + $0x90] sm:$0xff]
        %v2142 = vld [vmem:[%s785 + $0x98] sm:$0xff]
        %v2143 = vld [vmem:[%s785 + $0xa0] sm:$0xff]
        %v2144 = vld [vmem:[%s785 + $0xa8] sm:$0xff]
        %v2145 = vld [vmem:[%s785 + $0xb0] sm:$0xff]
        %v2146 = vld [vmem:[%s785 + $0xb8] sm:$0xff]
        %v2147 = vld [vmem:[%s785 + $0xc0] sm:$0xff]
        %v2148 = vld [vmem:[%s785 + $0xc8] sm:$0xff]
        %v2149 = vld [vmem:[%s785 + $0xd0] sm:$0xff]
        %v2150 = vld [vmem:[%s785 + $0xd8] sm:$0xff]
        %v2151 = vld [vmem:[%s785 + $0xe0] sm:$0xff]
        %v2152 = vld [vmem:[%s785 + $0xe8] sm:$0xff]
        %v2153 = vld [vmem:[%s785 + $0xf0] sm:$0xff]
        %v2154 = vld [vmem:[%s785 + $0xf8] sm:$0xff]
        %v2155 = vld [vmem:[%s785 + $0x100] sm:$0xff]
        %v2156 = vld [vmem:[%s785 + $0x108] sm:$0xff]
        %v2157 = vld [vmem:[%s785 + $0x110] sm:$0xff]
        %v2158 = vld [vmem:[%s785 + $0x118] sm:$0xff]
        %v2159 = vld [vmem:[%s785 + $0x120] sm:$0xff]
        %v2160 = vld [vmem:[%s785 + $0x128] sm:$0xff]
        %v2161 = vld [vmem:[%s785 + $0x130] sm:$0xff]
        %v2162 = vld [vmem:[%s785 + $0x138] sm:$0xff]
        %v2163 = vld [vmem:[%s785 + $0x140] sm:$0xff]
        %v2164 = vld [vmem:[%s785 + $0x148] sm:$0xff]
        %v2165 = vld [vmem:[%s785 + $0x150] sm:$0xff]
        %v2166 = vld [vmem:[%s785 + $0x158] sm:$0xff]
        %v2167 = vld [vmem:[%s785 + $0x160] sm:$0xff]
        %v2168 = vld [vmem:[%s785 + $0x168] sm:$0xff]
        %v2169 = vld [vmem:[%s785 + $0x170] sm:$0xff]
        %v2170 = vld [vmem:[%s785 + $0x178] sm:$0xff]
        %v2171 = vunpack.c.l.s8.bf16 %v2123
        %v2172 = vunpack.c.l.s8.bf16 %v2124
        %v2173 = vunpack.c.l.s8.bf16 %v2125
        %v2174 = vunpack.c.l.s8.bf16 %v2126
        %v2175 = vunpack.c.l.s8.bf16 %v2127
        %v2176 = vunpack.c.l.s8.bf16 %v2128
        %v2177 = vunpack.c.h.s8.bf16 %v2123
        %v2178 = vunpack.c.h.s8.bf16 %v2124
        %v2179 = vunpack.c.h.s8.bf16 %v2125
        %v2180 = vunpack.c.h.s8.bf16 %v2126
        %v2181 = vunpack.c.h.s8.bf16 %v2127
        %v2182 = vunpack.c.h.s8.bf16 %v2128
        %v2183 = vunpack.c.l.s8.bf16 %v2129
        %v2184 = vunpack.c.l.s8.bf16 %v2130
        %v2185 = vunpack.c.l.s8.bf16 %v2131
        %v2186 = vunpack.c.l.s8.bf16 %v2132
        %v2187 = vunpack.c.l.s8.bf16 %v2133
        %v2188 = vunpack.c.l.s8.bf16 %v2134
        %v2189 = vunpack.c.h.s8.bf16 %v2129
        %v2190 = vunpack.c.h.s8.bf16 %v2130
        %v2191 = vunpack.c.h.s8.bf16 %v2131
        %v2192 = vunpack.c.h.s8.bf16 %v2132
        %v2193 = vunpack.c.h.s8.bf16 %v2133
        %v2194 = vunpack.c.h.s8.bf16 %v2134
        %v2195 = vunpack.c.l.s8.bf16 %v2135
        %v2196 = vunpack.c.l.s8.bf16 %v2136
        %v2197 = vunpack.c.l.s8.bf16 %v2137
        %v2198 = vunpack.c.l.s8.bf16 %v2138
        %v2199 = vunpack.c.l.s8.bf16 %v2139
        %v2200 = vunpack.c.l.s8.bf16 %v2140
        %v2201 = vunpack.c.h.s8.bf16 %v2135
        %v2202 = vunpack.c.h.s8.bf16 %v2136
        %v2203 = vunpack.c.h.s8.bf16 %v2137
        %v2204 = vunpack.c.h.s8.bf16 %v2138
        %v2205 = vunpack.c.h.s8.bf16 %v2139
        %v2206 = vunpack.c.h.s8.bf16 %v2140
        %v2207 = vunpack.c.l.s8.bf16 %v2141
        %v2208 = vunpack.c.l.s8.bf16 %v2142
        %v2209 = vunpack.c.l.s8.bf16 %v2143
        %v2210 = vunpack.c.l.s8.bf16 %v2144
        %v2211 = vunpack.c.l.s8.bf16 %v2145
        %v2212 = vunpack.c.l.s8.bf16 %v2146
        %v2213 = vunpack.c.h.s8.bf16 %v2141
        %v2214 = vunpack.c.h.s8.bf16 %v2142
        %v2215 = vunpack.c.h.s8.bf16 %v2143
        %v2216 = vunpack.c.h.s8.bf16 %v2144
        %v2217 = vunpack.c.h.s8.bf16 %v2145
        %v2218 = vunpack.c.h.s8.bf16 %v2146
        %v2219 = vunpack.c.l.s8.bf16 %v2147
        %v2220 = vunpack.c.l.s8.bf16 %v2148
        %v2221 = vunpack.c.l.s8.bf16 %v2149
        %v2222 = vunpack.c.l.s8.bf16 %v2150
        %v2223 = vunpack.c.l.s8.bf16 %v2151
        %v2224 = vunpack.c.l.s8.bf16 %v2152
        %v2225 = vunpack.c.h.s8.bf16 %v2147
        %v2226 = vunpack.c.h.s8.bf16 %v2148
        %v2227 = vunpack.c.h.s8.bf16 %v2149
        %v2228 = vunpack.c.h.s8.bf16 %v2150
        %v2229 = vunpack.c.h.s8.bf16 %v2151
        %v2230 = vunpack.c.h.s8.bf16 %v2152
        %v2231 = vunpack.c.l.s8.bf16 %v2153
        %v2232 = vunpack.c.l.s8.bf16 %v2154
        %v2233 = vunpack.c.l.s8.bf16 %v2155
        %v2234 = vunpack.c.l.s8.bf16 %v2156
        %v2235 = vunpack.c.l.s8.bf16 %v2157
        %v2236 = vunpack.c.l.s8.bf16 %v2158
        %v2237 = vunpack.c.h.s8.bf16 %v2153
        %v2238 = vunpack.c.h.s8.bf16 %v2154
        %v2239 = vunpack.c.h.s8.bf16 %v2155
        %v2240 = vunpack.c.h.s8.bf16 %v2156
        %v2241 = vunpack.c.h.s8.bf16 %v2157
        %v2242 = vunpack.c.h.s8.bf16 %v2158
        %v2243 = vunpack.c.l.s8.bf16 %v2159
        %v2244 = vunpack.c.l.s8.bf16 %v2160
        %v2245 = vunpack.c.l.s8.bf16 %v2161
        %v2246 = vunpack.c.l.s8.bf16 %v2162
        %v2247 = vunpack.c.l.s8.bf16 %v2163
        %v2248 = vunpack.c.l.s8.bf16 %v2164
        %v2249 = vunpack.c.h.s8.bf16 %v2159
        %v2250 = vunpack.c.h.s8.bf16 %v2160
        %v2251 = vunpack.c.h.s8.bf16 %v2161
        %v2252 = vunpack.c.h.s8.bf16 %v2162
        %v2253 = vunpack.c.h.s8.bf16 %v2163
        %v2254 = vunpack.c.h.s8.bf16 %v2164
        %v2255 = vunpack.c.l.s8.bf16 %v2165
        %v2256 = vunpack.c.l.s8.bf16 %v2166
        %v2257 = vunpack.c.l.s8.bf16 %v2167
        %v2258 = vunpack.c.l.s8.bf16 %v2168
        %v2259 = vunpack.c.l.s8.bf16 %v2169
        %v2260 = vunpack.c.l.s8.bf16 %v2170
        %v2261 = vunpack.c.h.s8.bf16 %v2165
        %v2262 = vunpack.c.h.s8.bf16 %v2166
        %v2263 = vunpack.c.h.s8.bf16 %v2167
        %v2264 = vunpack.c.h.s8.bf16 %v2168
        %v2265 = vunpack.c.h.s8.bf16 %v2169
        %v2266 = vunpack.c.h.s8.bf16 %v2170
        %2267 = vmatprep.subr.bf16.mxu0 %v2172
        %2268 = vmatpush1.bf16.msra.mxu0 %v2171
        %2269 = vmatprep.subr.bf16.mxu0 %v2178
        %2270 = vmatpush1.bf16.msra.mxu0 %v2177
        %2271 = vmatprep.subr.bf16.mxu0 %v2184
        %2272 = vmatpush1.bf16.msra.mxu0 %v2183
        %2273 = vmatprep.subr.bf16.mxu0 %v2190
        %2274 = vmatpush1.bf16.msra.mxu0 %v2189
        %2275 = vmatprep.subr.bf16.mxu0 %v2196
        %2276 = vmatpush1.bf16.msra.mxu0 %v2195
        %2277 = vmatprep.subr.bf16.mxu0 %v2202
        %2278 = vmatpush1.bf16.msra.mxu0 %v2201
        %2279 = vmatprep.subr.bf16.mxu0 %v2208
        %2280 = vmatpush1.bf16.msra.mxu0 %v2207
        %2281 = vmatprep.subr.bf16.mxu0 %v2214
        %2282 = vmatpush1.bf16.msra.mxu0 %v2213
        %2283 = vmatprep.subr.bf16.mxu0 %v2220
        %2284 = vmatpush1.bf16.msra.mxu0 %v2219
        %2285 = vmatprep.subr.bf16.mxu0 %v2226
        %2286 = vmatpush1.bf16.msra.mxu0 %v2225
        %2287 = vmatprep.subr.bf16.mxu0 %v2232
        %2288 = vmatpush1.bf16.msra.mxu0 %v2231
        %2289 = vmatprep.subr.bf16.mxu0 %v2238
        %2290 = vmatpush1.bf16.msra.mxu0 %v2237
        %2291 = vmatprep.subr.bf16.mxu0 %v2244
        %2292 = vmatpush1.bf16.msra.mxu0 %v2243
        %2293 = vmatprep.subr.bf16.mxu0 %v2250
        %2294 = vmatpush1.bf16.msra.mxu0 %v2249
        %2295 = vmatprep.subr.bf16.mxu0 %v2256
        %2296 = vmatpush1.bf16.msra.mxu0 %v2255
        %2297 = vmatprep.subr.bf16.mxu0 %v2262
        %2298 = vmatpush1.bf16.msra.mxu0 %v2261
        %2299 = vmatprep.mubr.bf16.mxu0 %v2122
        %2300 = vmatmul.mubr.bf16.gmra.mrb[0].mxu0 %v2121
        %v2301 = vpop.f32.mrb[0].mxu0
        %v2302 = vadd.f32 0.0, %v2301
        %v2303 = vpop.f32.mrb[0].mxu0
        %v2304 = vadd.f32 0.0, %v2303
        %v2305 = vpop.f32.mrb[0].mxu0
        %v2306 = vpop.f32.mrb[0].mxu0
        %2307 = vdwg.mxu0
        %2308 = vmatprep.subr.bf16.mxu0 %v2174
        %2309 = vmatpush1.bf16.msra.mxu0 %v2173
        %2310 = vmatprep.subr.bf16.mxu0 %v2180
        %2311 = vmatpush1.bf16.msra.mxu0 %v2179
        %2312 = vmatprep.subr.bf16.mxu0 %v2186
        %2313 = vmatpush1.bf16.msra.mxu0 %v2185
        %2314 = vmatprep.subr.bf16.mxu0 %v2192
        %2315 = vmatpush1.bf16.msra.mxu0 %v2191
        %2316 = vmatprep.subr.bf16.mxu0 %v2198
        %2317 = vmatpush1.bf16.msra.mxu0 %v2197
        %2318 = vmatprep.subr.bf16.mxu0 %v2204
        %2319 = vmatpush1.bf16.msra.mxu0 %v2203
        %2320 = vmatprep.subr.bf16.mxu0 %v2210
        %2321 = vmatpush1.bf16.msra.mxu0 %v2209
        %2322 = vmatprep.subr.bf16.mxu0 %v2216
        %2323 = vmatpush1.bf16.msra.mxu0 %v2215
        %2324 = vmatprep.subr.bf16.mxu0 %v2222
        %2325 = vmatpush1.bf16.msra.mxu0 %v2221
        %2326 = vmatprep.subr.bf16.mxu0 %v2228
        %2327 = vmatpush1.bf16.msra.mxu0 %v2227
        %2328 = vmatprep.subr.bf16.mxu0 %v2234
        %2329 = vmatpush1.bf16.msra.mxu0 %v2233
        %2330 = vmatprep.subr.bf16.mxu0 %v2240
        %2331 = vmatpush1.bf16.msra.mxu0 %v2239
        %2332 = vmatprep.subr.bf16.mxu0 %v2246
        %2333 = vmatpush1.bf16.msra.mxu0 %v2245
        %2334 = vmatprep.subr.bf16.mxu0 %v2252
        %2335 = vmatpush1.bf16.msra.mxu0 %v2251
        %2336 = vmatprep.subr.bf16.mxu0 %v2258
        %2337 = vmatpush1.bf16.msra.mxu0 %v2257
        %2338 = vmatprep.subr.bf16.mxu0 %v2264
        %2339 = vmatpush1.bf16.msra.mxu0 %v2263
        %2340 = vmatprep.mubr.bf16.mxu0 %v2122
        %2341 = vmatmul.mubr.bf16.gmra.mrb[0].mxu0 %v2121
        %v2342 = vpop.f32.mrb[0].mxu0
        %v2343 = vadd.f32 0.0, %v2342
        %v2344 = vpop.f32.mrb[0].mxu0
        %v2345 = vadd.f32 0.0, %v2344
        %v2346 = vpop.f32.mrb[0].mxu0
        %v2347 = vpop.f32.mrb[0].mxu0
        %2348 = vdwg.mxu0
        %2349 = vmatprep.subr.bf16.mxu0 %v2176
        %2350 = vmatpush1.bf16.msra.mxu0 %v2175
        %2351 = vmatprep.subr.bf16.mxu0 %v2182
        %2352 = vmatpush1.bf16.msra.mxu0 %v2181
        %2353 = vmatprep.subr.bf16.mxu0 %v2188
        %2354 = vmatpush1.bf16.msra.mxu0 %v2187
        %2355 = vmatprep.subr.bf16.mxu0 %v2194
        %2356 = vmatpush1.bf16.msra.mxu0 %v2193
        %2357 = vmatprep.subr.bf16.mxu0 %v2200
        %2358 = vmatpush1.bf16.msra.mxu0 %v2199
        %2359 = vmatprep.subr.bf16.mxu0 %v2206
        %2360 = vmatpush1.bf16.msra.mxu0 %v2205
        %2361 = vmatprep.subr.bf16.mxu0 %v2212
        %2362 = vmatpush1.bf16.msra.mxu0 %v2211
        %2363 = vmatprep.subr.bf16.mxu0 %v2218
        %2364 = vmatpush1.bf16.msra.mxu0 %v2217
        %2365 = vmatprep.subr.bf16.mxu0 %v2224
        %2366 = vmatpush1.bf16.msra.mxu0 %v2223
        %2367 = vmatprep.subr.bf16.mxu0 %v2230
        %2368 = vmatpush1.bf16.msra.mxu0 %v2229
        %2369 = vmatprep.subr.bf16.mxu0 %v2236
        %2370 = vmatpush1.bf16.msra.mxu0 %v2235
        %2371 = vmatprep.subr.bf16.mxu0 %v2242
        %2372 = vmatpush1.bf16.msra.mxu0 %v2241
        %2373 = vmatprep.subr.bf16.mxu0 %v2248
        %2374 = vmatpush1.bf16.msra.mxu0 %v2247
        %2375 = vmatprep.subr.bf16.mxu0 %v2254
        %2376 = vmatpush1.bf16.msra.mxu0 %v2253
        %2377 = vmatprep.subr.bf16.mxu0 %v2260
        %2378 = vmatpush1.bf16.msra.mxu0 %v2259
        %2379 = vmatprep.subr.bf16.mxu0 %v2266
        %2380 = vmatpush1.bf16.msra.mxu0 %v2265
        %2381 = vmatprep.mubr.bf16.mxu0 %v2122
        %2382 = vmatmul.mubr.bf16.gmra.mrb[0].mxu0 %v2121
        %v2383 = vpop.f32.mrb[0].mxu0
        %v2384 = vadd.f32 0.0, %v2383
        %v2385 = vpop.f32.mrb[0].mxu0
        %v2386 = vadd.f32 0.0, %v2385
        %v2387 = vpop.f32.mrb[0].mxu0
        %v2388 = vpop.f32.mrb[0].mxu0
        %2389 = vdwg.mxu0
        %v2390 = vadd.f32 %v2115, %v2302
        %v2391 = vadd.f32 %v2116, %v2304
        %v2392 = vadd.f32 %v2117, %v2343
        %v2393 = vadd.f32 %v2118, %v2345
        %v2394 = vadd.f32 %v2119, %v2384
        %v2395 = vadd.f32 %v2120, %v2386
        %2396 = vst [vmem:[#allocation2] sm:$0xff] %v2390
        %2397 = vst [vmem:[#allocation2 + $0x8] sm:$0xff] %v2391
        %2398 = vst [vmem:[#allocation2 + $0x10] sm:$0xff] %v2392
        %2399 = vst [vmem:[#allocation2 + $0x18] sm:$0xff] %v2393
        %2400 = vst [vmem:[#allocation2 + $0x20] sm:$0xff] %v2394
        %2401 = vst [vmem:[#allocation2 + $0x28] sm:$0xff] %v2395
        %p2402 = scmp.eq.s32.totalorder %s47, 3
        // Predicated region
        $region173: #{linear_net_forward.1} parent=95 // pred_check
          %p2403 = pneg %p2402
        $region174: #{linear_net_forward.1} parent=95 // pred_check_branch
          %2405 = sbr.rel (%p2403) target = $region176
        $region175: #{linear_net_forward.1} parent=95 // pred_region
          %v2406 = vld [vmem:[#allocation2] sm:$0xff]
          %v2407 = vld [vmem:[#allocation2 + $0x8] sm:$0xff]
          %v2408 = vld [vmem:[#allocation2 + $0x10] sm:$0xff]
          %v2409 = vld [vmem:[#allocation2 + $0x18] sm:$0xff]
          %v2410 = vld [vmem:[#allocation2 + $0x20] sm:$0xff]
          %v2411 = vld [vmem:[#allocation2 + $0x28] sm:$0xff]
          %v2412 = vld [vmem:[#allocation11] sm:$0x3f]
          %v2414 = vlaneseq
          %v2415 = vshrl.u32 %v2414, 7
          %v2416 = vsub.s32 0, %v2415
          %v2417 = vrot.slane %v2412, %v2416
          %v2418 = vlaneseq
          %v2419 = vshrl.u32 %v2418, 7
          %v2420 = vsub.s32 1, %v2419
          %v2421 = vrot.slane %v2412, %v2420
          %v2422 = vlaneseq
          %v2423 = vshrl.u32 %v2422, 7
          %v2424 = vsub.s32 2, %v2423
          %v2425 = vrot.slane %v2412, %v2424
          %v2426 = vlaneseq
          %v2427 = vshrl.u32 %v2426, 7
          %v2428 = vsub.s32 3, %v2427
          %v2429 = vrot.slane %v2412, %v2428
          %v2430 = vlaneseq
          %v2431 = vshrl.u32 %v2430, 7
          %v2432 = vsub.s32 4, %v2431
          %v2433 = vrot.slane %v2412, %v2432
          %v2434 = vlaneseq
          %v2435 = vshrl.u32 %v2434, 7
          %v2436 = vsub.s32 5, %v2435
          %v2437 = vrot.slane %v2412, %v2436
          %v2444 = vmul.f32 %v2406, %v2417
          %v2445 = vmul.f32 %v2407, %v2421
          %v2446 = vmul.f32 %v2408, %v2425
          %v2447 = vmul.f32 %v2409, %v2429
          %v2448 = vmul.f32 %v2410, %v2433
          %v2449 = vmul.f32 %v2411, %v2437
          %v2450 = vld [vmem:[#allocation12] sm:$0x3f]
          %v2452 = vlaneseq
          %v2453 = vshrl.u32 %v2452, 7
          %v2454 = vsub.s32 0, %v2453
          %v2455 = vrot.slane %v2450, %v2454
          %v2456 = vlaneseq
          %v2457 = vshrl.u32 %v2456, 7
          %v2458 = vsub.s32 1, %v2457
          %v2459 = vrot.slane %v2450, %v2458
          %v2460 = vlaneseq
          %v2461 = vshrl.u32 %v2460, 7
          %v2462 = vsub.s32 2, %v2461
          %v2463 = vrot.slane %v2450, %v2462
          %v2464 = vlaneseq
          %v2465 = vshrl.u32 %v2464, 7
          %v2466 = vsub.s32 3, %v2465
          %v2467 = vrot.slane %v2450, %v2466
          %v2468 = vlaneseq
          %v2469 = vshrl.u32 %v2468, 7
          %v2470 = vsub.s32 4, %v2469
          %v2471 = vrot.slane %v2450, %v2470
          %v2472 = vlaneseq
          %v2473 = vshrl.u32 %v2472, 7
          %v2474 = vsub.s32 5, %v2473
          %v2475 = vrot.slane %v2450, %v2474
          %v2482 = vadd.f32 %v2444, %v2455
          %v2483 = vadd.f32 %v2445, %v2459
          %v2484 = vadd.f32 %v2446, %v2463
          %v2485 = vadd.f32 %v2447, %v2467
          %v2486 = vadd.f32 %v2448, %v2471
          %v2487 = vadd.f32 %v2449, %v2475
          %v2488 = vmax.f32 %v2482, 0.0
          %v2489 = vmax.f32 %v2483, 0.0
          %v2490 = vmax.f32 %v2484, 0.0
          %v2491 = vmax.f32 %v2485, 0.0
          %v2492 = vmax.f32 %v2486, 0.0
          %v2493 = vmax.f32 %v2487, 0.0
          %v2494 = vpack.c.bf16 %v2488, %v2488
          %v2495 = vpack.c.bf16 %v2489, %v2489
          %v2496 = vpack.c.bf16 %v2490, %v2490
          %v2497 = vpack.c.bf16 %v2491, %v2491
          %v2498 = vpack.c.bf16 %v2492, %v2492
          %v2499 = vpack.c.bf16 %v2493, %v2493
          %v2500 = vld [vmem:[#allocation14] sm:$0xff]
          %v2501 = vld [vmem:[#allocation14 + $0x8] sm:$0xff]
          %v2502 = vld [vmem:[#allocation14 + $0x10] sm:$0xff]
          %v2503 = vld [vmem:[#allocation14 + $0x18] sm:$0xff]
          %v2504 = vld [vmem:[#allocation14 + $0x20] sm:$0xff]
          %v2505 = vld [vmem:[#allocation14 + $0x28] sm:$0xff]
          %v2506 = vld [vmem:[#allocation14 + $0x30] sm:$0xff]
          %v2507 = vld [vmem:[#allocation14 + $0x38] sm:$0xff]
          %v2508 = vld [vmem:[#allocation14 + $0x40] sm:$0xff]
          %v2509 = vld [vmem:[#allocation14 + $0x48] sm:$0xff]
          %v2510 = vld [vmem:[#allocation14 + $0x50] sm:$0xff]
          %v2511 = vld [vmem:[#allocation14 + $0x58] sm:$0xff]
          %v2512 = vld [vmem:[#allocation14 + $0x60] sm:$0xff]
          %v2513 = vld [vmem:[#allocation14 + $0x68] sm:$0xff]
          %v2514 = vld [vmem:[#allocation14 + $0x70] sm:$0xff]
          %v2515 = vld [vmem:[#allocation14 + $0x78] sm:$0xff]
          %v2516 = vld [vmem:[#allocation14 + $0x80] sm:$0xff]
          %v2517 = vld [vmem:[#allocation14 + $0x88] sm:$0xff]
          %v2518 = vld [vmem:[#allocation14 + $0x90] sm:$0xff]
          %v2519 = vld [vmem:[#allocation14 + $0x98] sm:$0xff]
          %v2520 = vld [vmem:[#allocation14 + $0xa0] sm:$0xff]
          %v2521 = vld [vmem:[#allocation14 + $0xa8] sm:$0xff]
          %v2522 = vld [vmem:[#allocation14 + $0xb0] sm:$0xff]
          %v2523 = vld [vmem:[#allocation14 + $0xb8] sm:$0xff]
          %v2524 = vld [vmem:[#allocation14 + $0xc0] sm:$0xff]
          %v2525 = vld [vmem:[#allocation14 + $0xc8] sm:$0xff]
          %v2526 = vld [vmem:[#allocation14 + $0xd0] sm:$0xff]
          %v2527 = vld [vmem:[#allocation14 + $0xd8] sm:$0xff]
          %v2528 = vld [vmem:[#allocation14 + $0xe0] sm:$0xff]
          %v2529 = vld [vmem:[#allocation14 + $0xe8] sm:$0xff]
          %v2530 = vld [vmem:[#allocation14 + $0xf0] sm:$0xff]
          %v2531 = vld [vmem:[#allocation14 + $0xf8] sm:$0xff]
          %v2532 = vld [vmem:[#allocation14 + $0x100] sm:$0xff]
          %v2533 = vld [vmem:[#allocation14 + $0x108] sm:$0xff]
          %v2534 = vld [vmem:[#allocation14 + $0x110] sm:$0xff]
          %v2535 = vld [vmem:[#allocation14 + $0x118] sm:$0xff]
          %v2536 = vld [vmem:[#allocation14 + $0x120] sm:$0xff]
          %v2537 = vld [vmem:[#allocation14 + $0x128] sm:$0xff]
          %v2538 = vld [vmem:[#allocation14 + $0x130] sm:$0xff]
          %v2539 = vld [vmem:[#allocation14 + $0x138] sm:$0xff]
          %v2540 = vld [vmem:[#allocation14 + $0x140] sm:$0xff]
          %v2541 = vld [vmem:[#allocation14 + $0x148] sm:$0xff]
          %v2542 = vld [vmem:[#allocation14 + $0x150] sm:$0xff]
          %v2543 = vld [vmem:[#allocation14 + $0x158] sm:$0xff]
          %v2544 = vld [vmem:[#allocation14 + $0x160] sm:$0xff]
          %v2545 = vld [vmem:[#allocation14 + $0x168] sm:$0xff]
          %v2546 = vld [vmem:[#allocation14 + $0x170] sm:$0xff]
          %v2547 = vld [vmem:[#allocation14 + $0x178] sm:$0xff]
          %v2548 = vld [vmem:[#allocation14 + $0x180] sm:$0xff]
          %v2549 = vld [vmem:[#allocation14 + $0x188] sm:$0xff]
          %v2550 = vld [vmem:[#allocation14 + $0x190] sm:$0xff]
          %v2551 = vld [vmem:[#allocation14 + $0x198] sm:$0xff]
          %v2552 = vld [vmem:[#allocation14 + $0x1a0] sm:$0xff]
          %v2553 = vld [vmem:[#allocation14 + $0x1a8] sm:$0xff]
          %v2554 = vld [vmem:[#allocation14 + $0x1b0] sm:$0xff]
          %v2555 = vld [vmem:[#allocation14 + $0x1b8] sm:$0xff]
          %v2556 = vld [vmem:[#allocation14 + $0x1c0] sm:$0xff]
          %v2557 = vld [vmem:[#allocation14 + $0x1c8] sm:$0xff]
          %v2558 = vld [vmem:[#allocation14 + $0x1d0] sm:$0xff]
          %v2559 = vld [vmem:[#allocation14 + $0x1d8] sm:$0xff]
          %v2560 = vld [vmem:[#allocation14 + $0x1e0] sm:$0xff]
          %v2561 = vld [vmem:[#allocation14 + $0x1e8] sm:$0xff]
          %v2562 = vld [vmem:[#allocation14 + $0x1f0] sm:$0xff]
          %v2563 = vld [vmem:[#allocation14 + $0x1f8] sm:$0xff]
          %v2564 = vld [vmem:[#allocation14 + $0x200] sm:$0xff]
          %v2565 = vld [vmem:[#allocation14 + $0x208] sm:$0xff]
          %v2566 = vld [vmem:[#allocation14 + $0x210] sm:$0xff]
          %v2567 = vld [vmem:[#allocation14 + $0x218] sm:$0xff]
          %v2568 = vld [vmem:[#allocation14 + $0x220] sm:$0xff]
          %v2569 = vld [vmem:[#allocation14 + $0x228] sm:$0xff]
          %v2570 = vld [vmem:[#allocation14 + $0x230] sm:$0xff]
          %v2571 = vld [vmem:[#allocation14 + $0x238] sm:$0xff]
          %v2572 = vld [vmem:[#allocation14 + $0x240] sm:$0xff]
          %v2573 = vld [vmem:[#allocation14 + $0x248] sm:$0xff]
          %v2574 = vld [vmem:[#allocation14 + $0x250] sm:$0xff]
          %v2575 = vld [vmem:[#allocation14 + $0x258] sm:$0xff]
          %v2576 = vld [vmem:[#allocation14 + $0x260] sm:$0xff]
          %v2577 = vld [vmem:[#allocation14 + $0x268] sm:$0xff]
          %v2578 = vld [vmem:[#allocation14 + $0x270] sm:$0xff]
          %v2579 = vld [vmem:[#allocation14 + $0x278] sm:$0xff]
          %v2580 = vld [vmem:[#allocation14 + $0x280] sm:$0xff]
          %v2581 = vld [vmem:[#allocation14 + $0x288] sm:$0xff]
          %v2582 = vld [vmem:[#allocation14 + $0x290] sm:$0xff]
          %v2583 = vld [vmem:[#allocation14 + $0x298] sm:$0xff]
          %v2584 = vld [vmem:[#allocation14 + $0x2a0] sm:$0xff]
          %v2585 = vld [vmem:[#allocation14 + $0x2a8] sm:$0xff]
          %v2586 = vld [vmem:[#allocation14 + $0x2b0] sm:$0xff]
          %v2587 = vld [vmem:[#allocation14 + $0x2b8] sm:$0xff]
          %v2588 = vld [vmem:[#allocation14 + $0x2c0] sm:$0xff]
          %v2589 = vld [vmem:[#allocation14 + $0x2c8] sm:$0xff]
          %v2590 = vld [vmem:[#allocation14 + $0x2d0] sm:$0xff]
          %v2591 = vld [vmem:[#allocation14 + $0x2d8] sm:$0xff]
          %v2592 = vld [vmem:[#allocation14 + $0x2e0] sm:$0xff]
          %v2593 = vld [vmem:[#allocation14 + $0x2e8] sm:$0xff]
          %v2594 = vld [vmem:[#allocation14 + $0x2f0] sm:$0xff]
          %v2595 = vld [vmem:[#allocation14 + $0x2f8] sm:$0xff]
          %v2596 = vunpack.c.l.s8.bf16 %v2500
          %v2597 = vunpack.c.l.s8.bf16 %v2501
          %v2598 = vunpack.c.l.s8.bf16 %v2502
          %v2599 = vunpack.c.l.s8.bf16 %v2503
          %v2600 = vunpack.c.h.s8.bf16 %v2500
          %v2601 = vunpack.c.h.s8.bf16 %v2501
          %v2602 = vunpack.c.h.s8.bf16 %v2502
          %v2603 = vunpack.c.h.s8.bf16 %v2503
          %v2604 = vunpack.c.l.s8.bf16 %v2504
          %v2605 = vunpack.c.l.s8.bf16 %v2505
          %v2606 = vunpack.c.l.s8.bf16 %v2506
          %v2607 = vunpack.c.l.s8.bf16 %v2507
          %v2608 = vunpack.c.h.s8.bf16 %v2504
          %v2609 = vunpack.c.h.s8.bf16 %v2505
          %v2610 = vunpack.c.h.s8.bf16 %v2506
          %v2611 = vunpack.c.h.s8.bf16 %v2507
          %v2612 = vunpack.c.l.s8.bf16 %v2508
          %v2613 = vunpack.c.l.s8.bf16 %v2509
          %v2614 = vunpack.c.l.s8.bf16 %v2510
          %v2615 = vunpack.c.l.s8.bf16 %v2511
          %v2616 = vunpack.c.h.s8.bf16 %v2508
          %v2617 = vunpack.c.h.s8.bf16 %v2509
          %v2618 = vunpack.c.h.s8.bf16 %v2510
          %v2619 = vunpack.c.h.s8.bf16 %v2511
          %v2620 = vunpack.c.l.s8.bf16 %v2512
          %v2621 = vunpack.c.l.s8.bf16 %v2513
          %v2622 = vunpack.c.l.s8.bf16 %v2514
          %v2623 = vunpack.c.l.s8.bf16 %v2515
          %v2624 = vunpack.c.h.s8.bf16 %v2512
          %v2625 = vunpack.c.h.s8.bf16 %v2513
          %v2626 = vunpack.c.h.s8.bf16 %v2514
          %v2627 = vunpack.c.h.s8.bf16 %v2515
          %v2628 = vunpack.c.l.s8.bf16 %v2516
          %v2629 = vunpack.c.l.s8.bf16 %v2517
          %v2630 = vunpack.c.l.s8.bf16 %v2518
          %v2631 = vunpack.c.l.s8.bf16 %v2519
          %v2632 = vunpack.c.h.s8.bf16 %v2516
          %v2633 = vunpack.c.h.s8.bf16 %v2517
          %v2634 = vunpack.c.h.s8.bf16 %v2518
          %v2635 = vunpack.c.h.s8.bf16 %v2519
          %v2636 = vunpack.c.l.s8.bf16 %v2520
          %v2637 = vunpack.c.l.s8.bf16 %v2521
          %v2638 = vunpack.c.l.s8.bf16 %v2522
          %v2639 = vunpack.c.l.s8.bf16 %v2523
          %v2640 = vunpack.c.h.s8.bf16 %v2520
          %v2641 = vunpack.c.h.s8.bf16 %v2521
          %v2642 = vunpack.c.h.s8.bf16 %v2522
          %v2643 = vunpack.c.h.s8.bf16 %v2523
          %v2644 = vunpack.c.l.s8.bf16 %v2524
          %v2645 = vunpack.c.l.s8.bf16 %v2525
          %v2646 = vunpack.c.l.s8.bf16 %v2526
          %v2647 = vunpack.c.l.s8.bf16 %v2527
          %v2648 = vunpack.c.h.s8.bf16 %v2524
          %v2649 = vunpack.c.h.s8.bf16 %v2525
          %v2650 = vunpack.c.h.s8.bf16 %v2526
          %v2651 = vunpack.c.h.s8.bf16 %v2527
          %v2652 = vunpack.c.l.s8.bf16 %v2528
          %v2653 = vunpack.c.l.s8.bf16 %v2529
          %v2654 = vunpack.c.l.s8.bf16 %v2530
          %v2655 = vunpack.c.l.s8.bf16 %v2531
          %v2656 = vunpack.c.h.s8.bf16 %v2528
          %v2657 = vunpack.c.h.s8.bf16 %v2529
          %v2658 = vunpack.c.h.s8.bf16 %v2530
          %v2659 = vunpack.c.h.s8.bf16 %v2531
          %v2660 = vunpack.c.l.s8.bf16 %v2532
          %v2661 = vunpack.c.l.s8.bf16 %v2533
          %v2662 = vunpack.c.l.s8.bf16 %v2534
          %v2663 = vunpack.c.l.s8.bf16 %v2535
          %v2664 = vunpack.c.h.s8.bf16 %v2532
          %v2665 = vunpack.c.h.s8.bf16 %v2533
          %v2666 = vunpack.c.h.s8.bf16 %v2534
          %v2667 = vunpack.c.h.s8.bf16 %v2535
          %v2668 = vunpack.c.l.s8.bf16 %v2536
          %v2669 = vunpack.c.l.s8.bf16 %v2537
          %v2670 = vunpack.c.l.s8.bf16 %v2538
          %v2671 = vunpack.c.l.s8.bf16 %v2539
          %v2672 = vunpack.c.h.s8.bf16 %v2536
          %v2673 = vunpack.c.h.s8.bf16 %v2537
          %v2674 = vunpack.c.h.s8.bf16 %v2538
          %v2675 = vunpack.c.h.s8.bf16 %v2539
          %v2676 = vunpack.c.l.s8.bf16 %v2540
          %v2677 = vunpack.c.l.s8.bf16 %v2541
          %v2678 = vunpack.c.l.s8.bf16 %v2542
          %v2679 = vunpack.c.l.s8.bf16 %v2543
          %v2680 = vunpack.c.h.s8.bf16 %v2540
          %v2681 = vunpack.c.h.s8.bf16 %v2541
          %v2682 = vunpack.c.h.s8.bf16 %v2542
          %v2683 = vunpack.c.h.s8.bf16 %v2543
          %v2684 = vunpack.c.l.s8.bf16 %v2544
          %v2685 = vunpack.c.l.s8.bf16 %v2545
          %v2686 = vunpack.c.l.s8.bf16 %v2546
          %v2687 = vunpack.c.l.s8.bf16 %v2547
          %v2688 = vunpack.c.h.s8.bf16 %v2544
          %v2689 = vunpack.c.h.s8.bf16 %v2545
          %v2690 = vunpack.c.h.s8.bf16 %v2546
          %v2691 = vunpack.c.h.s8.bf16 %v2547
          %v2692 = vunpack.c.l.s8.bf16 %v2548
          %v2693 = vunpack.c.l.s8.bf16 %v2549
          %v2694 = vunpack.c.l.s8.bf16 %v2550
          %v2695 = vunpack.c.l.s8.bf16 %v2551
          %v2696 = vunpack.c.h.s8.bf16 %v2548
          %v2697 = vunpack.c.h.s8.bf16 %v2549
          %v2698 = vunpack.c.h.s8.bf16 %v2550
          %v2699 = vunpack.c.h.s8.bf16 %v2551
          %v2700 = vunpack.c.l.s8.bf16 %v2552
          %v2701 = vunpack.c.l.s8.bf16 %v2553
          %v2702 = vunpack.c.l.s8.bf16 %v2554
          %v2703 = vunpack.c.l.s8.bf16 %v2555
          %v2704 = vunpack.c.h.s8.bf16 %v2552
          %v2705 = vunpack.c.h.s8.bf16 %v2553
          %v2706 = vunpack.c.h.s8.bf16 %v2554
          %v2707 = vunpack.c.h.s8.bf16 %v2555
          %v2708 = vunpack.c.l.s8.bf16 %v2556
          %v2709 = vunpack.c.l.s8.bf16 %v2557
          %v2710 = vunpack.c.l.s8.bf16 %v2558
          %v2711 = vunpack.c.l.s8.bf16 %v2559
          %v2712 = vunpack.c.h.s8.bf16 %v2556
          %v2713 = vunpack.c.h.s8.bf16 %v2557
          %v2714 = vunpack.c.h.s8.bf16 %v2558
          %v2715 = vunpack.c.h.s8.bf16 %v2559
          %v2716 = vunpack.c.l.s8.bf16 %v2560
          %v2717 = vunpack.c.l.s8.bf16 %v2561
          %v2718 = vunpack.c.l.s8.bf16 %v2562
          %v2719 = vunpack.c.l.s8.bf16 %v2563
          %v2720 = vunpack.c.h.s8.bf16 %v2560
          %v2721 = vunpack.c.h.s8.bf16 %v2561
          %v2722 = vunpack.c.h.s8.bf16 %v2562
          %v2723 = vunpack.c.h.s8.bf16 %v2563
          %v2724 = vunpack.c.l.s8.bf16 %v2564
          %v2725 = vunpack.c.l.s8.bf16 %v2565
          %v2726 = vunpack.c.l.s8.bf16 %v2566
          %v2727 = vunpack.c.l.s8.bf16 %v2567
          %v2728 = vunpack.c.h.s8.bf16 %v2564
          %v2729 = vunpack.c.h.s8.bf16 %v2565
          %v2730 = vunpack.c.h.s8.bf16 %v2566
          %v2731 = vunpack.c.h.s8.bf16 %v2567
          %v2732 = vunpack.c.l.s8.bf16 %v2568
          %v2733 = vunpack.c.l.s8.bf16 %v2569
          %v2734 = vunpack.c.l.s8.bf16 %v2570
          %v2735 = vunpack.c.l.s8.bf16 %v2571
          %v2736 = vunpack.c.h.s8.bf16 %v2568
          %v2737 = vunpack.c.h.s8.bf16 %v2569
          %v2738 = vunpack.c.h.s8.bf16 %v2570
          %v2739 = vunpack.c.h.s8.bf16 %v2571
          %v2740 = vunpack.c.l.s8.bf16 %v2572
          %v2741 = vunpack.c.l.s8.bf16 %v2573
          %v2742 = vunpack.c.l.s8.bf16 %v2574
          %v2743 = vunpack.c.l.s8.bf16 %v2575
          %v2744 = vunpack.c.h.s8.bf16 %v2572
          %v2745 = vunpack.c.h.s8.bf16 %v2573
          %v2746 = vunpack.c.h.s8.bf16 %v2574
          %v2747 = vunpack.c.h.s8.bf16 %v2575
          %v2748 = vunpack.c.l.s8.bf16 %v2576
          %v2749 = vunpack.c.l.s8.bf16 %v2577
          %v2750 = vunpack.c.l.s8.bf16 %v2578
          %v2751 = vunpack.c.l.s8.bf16 %v2579
          %v2752 = vunpack.c.h.s8.bf16 %v2576
          %v2753 = vunpack.c.h.s8.bf16 %v2577
          %v2754 = vunpack.c.h.s8.bf16 %v2578
          %v2755 = vunpack.c.h.s8.bf16 %v2579
          %v2756 = vunpack.c.l.s8.bf16 %v2580
          %v2757 = vunpack.c.l.s8.bf16 %v2581
          %v2758 = vunpack.c.l.s8.bf16 %v2582
          %v2759 = vunpack.c.l.s8.bf16 %v2583
          %v2760 = vunpack.c.h.s8.bf16 %v2580
          %v2761 = vunpack.c.h.s8.bf16 %v2581
          %v2762 = vunpack.c.h.s8.bf16 %v2582
          %v2763 = vunpack.c.h.s8.bf16 %v2583
          %v2764 = vunpack.c.l.s8.bf16 %v2584
          %v2765 = vunpack.c.l.s8.bf16 %v2585
          %v2766 = vunpack.c.l.s8.bf16 %v2586
          %v2767 = vunpack.c.l.s8.bf16 %v2587
          %v2768 = vunpack.c.h.s8.bf16 %v2584
          %v2769 = vunpack.c.h.s8.bf16 %v2585
          %v2770 = vunpack.c.h.s8.bf16 %v2586
          %v2771 = vunpack.c.h.s8.bf16 %v2587
          %v2772 = vunpack.c.l.s8.bf16 %v2588
          %v2773 = vunpack.c.l.s8.bf16 %v2589
          %v2774 = vunpack.c.l.s8.bf16 %v2590
          %v2775 = vunpack.c.l.s8.bf16 %v2591
          %v2776 = vunpack.c.h.s8.bf16 %v2588
          %v2777 = vunpack.c.h.s8.bf16 %v2589
          %v2778 = vunpack.c.h.s8.bf16 %v2590
          %v2779 = vunpack.c.h.s8.bf16 %v2591
          %v2780 = vunpack.c.l.s8.bf16 %v2592
          %v2781 = vunpack.c.l.s8.bf16 %v2593
          %v2782 = vunpack.c.l.s8.bf16 %v2594
          %v2783 = vunpack.c.l.s8.bf16 %v2595
          %v2784 = vunpack.c.h.s8.bf16 %v2592
          %v2785 = vunpack.c.h.s8.bf16 %v2593
          %v2786 = vunpack.c.h.s8.bf16 %v2594
          %v2787 = vunpack.c.h.s8.bf16 %v2595
          %2788 = vmatprep.subr.bf16.mxu0 %v2597
          %2789 = vmatpush1.bf16.msra.mxu0 %v2596
          %2790 = vmatprep.subr.bf16.mxu0 %v2601
          %2791 = vmatpush1.bf16.msra.mxu0 %v2600
          %2792 = vmatprep.subr.bf16.mxu0 %v2605
          %2793 = vmatpush1.bf16.msra.mxu0 %v2604
          %2794 = vmatprep.subr.bf16.mxu0 %v2609
          %2795 = vmatpush1.bf16.msra.mxu0 %v2608
          %2796 = vmatprep.subr.bf16.mxu0 %v2613
          %2797 = vmatpush1.bf16.msra.mxu0 %v2612
          %2798 = vmatprep.subr.bf16.mxu0 %v2617
          %2799 = vmatpush1.bf16.msra.mxu0 %v2616
          %2800 = vmatprep.subr.bf16.mxu0 %v2621
          %2801 = vmatpush1.bf16.msra.mxu0 %v2620
          %2802 = vmatprep.subr.bf16.mxu0 %v2625
          %2803 = vmatpush1.bf16.msra.mxu0 %v2624
          %2804 = vmatprep.subr.bf16.mxu0 %v2629
          %2805 = vmatpush1.bf16.msra.mxu0 %v2628
          %2806 = vmatprep.subr.bf16.mxu0 %v2633
          %2807 = vmatpush1.bf16.msra.mxu0 %v2632
          %2808 = vmatprep.subr.bf16.mxu0 %v2637
          %2809 = vmatpush1.bf16.msra.mxu0 %v2636
          %2810 = vmatprep.subr.bf16.mxu0 %v2641
          %2811 = vmatpush1.bf16.msra.mxu0 %v2640
          %2812 = vmatprep.subr.bf16.mxu0 %v2645
          %2813 = vmatpush1.bf16.msra.mxu0 %v2644
          %2814 = vmatprep.subr.bf16.mxu0 %v2649
          %2815 = vmatpush1.bf16.msra.mxu0 %v2648
          %2816 = vmatprep.subr.bf16.mxu0 %v2653
          %2817 = vmatpush1.bf16.msra.mxu0 %v2652
          %2818 = vmatprep.subr.bf16.mxu0 %v2657
          %2819 = vmatpush1.bf16.msra.mxu0 %v2656
          %2820 = vmatprep.mubr.bf16.mxu0 %v2495
          %2821 = vmatmul.mubr.bf16.gmra.mrb[0].mxu0 %v2494
          %v2822 = vpop.f32.mrb[0].mxu0
          %v2823 = vadd.f32 0.0, %v2822
          %v2824 = vpop.f32.mrb[0].mxu0
          %v2825 = vadd.f32 0.0, %v2824
          %v2826 = vpop.f32.mrb[0].mxu0
          %v2827 = vpop.f32.mrb[0].mxu0
          %2828 = vdwg.mxu0
          %2829 = vmatprep.subr.bf16.mxu0 %v2661
          %2830 = vmatpush1.bf16.msra.mxu0 %v2660
          %2831 = vmatprep.subr.bf16.mxu0 %v2665
          %2832 = vmatpush1.bf16.msra.mxu0 %v2664
          %2833 = vmatprep.subr.bf16.mxu0 %v2669
          %2834 = vmatpush1.bf16.msra.mxu0 %v2668
          %2835 = vmatprep.subr.bf16.mxu0 %v2673
          %2836 = vmatpush1.bf16.msra.mxu0 %v2672
          %2837 = vmatprep.subr.bf16.mxu0 %v2677
          %2838 = vmatpush1.bf16.msra.mxu0 %v2676
          %2839 = vmatprep.subr.bf16.mxu0 %v2681
          %2840 = vmatpush1.bf16.msra.mxu0 %v2680
          %2841 = vmatprep.subr.bf16.mxu0 %v2685
          %2842 = vmatpush1.bf16.msra.mxu0 %v2684
          %2843 = vmatprep.subr.bf16.mxu0 %v2689
          %2844 = vmatpush1.bf16.msra.mxu0 %v2688
          %2845 = vmatprep.subr.bf16.mxu0 %v2693
          %2846 = vmatpush1.bf16.msra.mxu0 %v2692
          %2847 = vmatprep.subr.bf16.mxu0 %v2697
          %2848 = vmatpush1.bf16.msra.mxu0 %v2696
          %2849 = vmatprep.subr.bf16.mxu0 %v2701
          %2850 = vmatpush1.bf16.msra.mxu0 %v2700
          %2851 = vmatprep.subr.bf16.mxu0 %v2705
          %2852 = vmatpush1.bf16.msra.mxu0 %v2704
          %2853 = vmatprep.subr.bf16.mxu0 %v2709
          %2854 = vmatpush1.bf16.msra.mxu0 %v2708
          %2855 = vmatprep.subr.bf16.mxu0 %v2713
          %2856 = vmatpush1.bf16.msra.mxu0 %v2712
          %2857 = vmatprep.subr.bf16.mxu0 %v2717
          %2858 = vmatpush1.bf16.msra.mxu0 %v2716
          %2859 = vmatprep.subr.bf16.mxu0 %v2721
          %2860 = vmatpush1.bf16.msra.mxu0 %v2720
          %2861 = vmatprep.mubr.bf16.mxu0 %v2497
          %2862 = vmatmul.mubr.bf16.gmra.mrb[0].mxu0 %v2496
          %v2863 = vpop.f32.mrb[0].mxu0
          %v2864 = vadd.f32 %v2823, %v2863
          %v2865 = vpop.f32.mrb[0].mxu0
          %v2866 = vadd.f32 %v2825, %v2865
          %v2867 = vpop.f32.mrb[0].mxu0
          %v2868 = vpop.f32.mrb[0].mxu0
          %2869 = vdwg.mxu0
          %2870 = vmatprep.subr.bf16.mxu0 %v2725
          %2871 = vmatpush1.bf16.msra.mxu0 %v2724
          %2872 = vmatprep.subr.bf16.mxu0 %v2729
          %2873 = vmatpush1.bf16.msra.mxu0 %v2728
          %2874 = vmatprep.subr.bf16.mxu0 %v2733
          %2875 = vmatpush1.bf16.msra.mxu0 %v2732
          %2876 = vmatprep.subr.bf16.mxu0 %v2737
          %2877 = vmatpush1.bf16.msra.mxu0 %v2736
          %2878 = vmatprep.subr.bf16.mxu0 %v2741
          %2879 = vmatpush1.bf16.msra.mxu0 %v2740
          %2880 = vmatprep.subr.bf16.mxu0 %v2745
          %2881 = vmatpush1.bf16.msra.mxu0 %v2744
          %2882 = vmatprep.subr.bf16.mxu0 %v2749
          %2883 = vmatpush1.bf16.msra.mxu0 %v2748
          %2884 = vmatprep.subr.bf16.mxu0 %v2753
          %2885 = vmatpush1.bf16.msra.mxu0 %v2752
          %2886 = vmatprep.subr.bf16.mxu0 %v2757
          %2887 = vmatpush1.bf16.msra.mxu0 %v2756
          %2888 = vmatprep.subr.bf16.mxu0 %v2761
          %2889 = vmatpush1.bf16.msra.mxu0 %v2760
          %2890 = vmatprep.subr.bf16.mxu0 %v2765
          %2891 = vmatpush1.bf16.msra.mxu0 %v2764
          %2892 = vmatprep.subr.bf16.mxu0 %v2769
          %2893 = vmatpush1.bf16.msra.mxu0 %v2768
          %2894 = vmatprep.subr.bf16.mxu0 %v2773
          %2895 = vmatpush1.bf16.msra.mxu0 %v2772
          %2896 = vmatprep.subr.bf16.mxu0 %v2777
          %2897 = vmatpush1.bf16.msra.mxu0 %v2776
          %2898 = vmatprep.subr.bf16.mxu0 %v2781
          %2899 = vmatpush1.bf16.msra.mxu0 %v2780
          %2900 = vmatprep.subr.bf16.mxu0 %v2785
          %2901 = vmatpush1.bf16.msra.mxu0 %v2784
          %2902 = vmatprep.mubr.bf16.mxu0 %v2499
          %2903 = vmatmul.mubr.bf16.gmra.mrb[0].mxu0 %v2498
          %v2904 = vpop.f32.mrb[0].mxu0
          %v2905 = vadd.f32 %v2864, %v2904
          %v2906 = vpop.f32.mrb[0].mxu0
          %v2907 = vadd.f32 %v2866, %v2906
          %v2908 = vpop.f32.mrb[0].mxu0
          %v2909 = vpop.f32.mrb[0].mxu0
          %2910 = vdwg.mxu0
          %2911 = vmatprep.subr.bf16.mxu0 %v2599
          %2912 = vmatpush1.bf16.msra.mxu0 %v2598
          %2913 = vmatprep.subr.bf16.mxu0 %v2603
          %2914 = vmatpush1.bf16.msra.mxu0 %v2602
          %2915 = vmatprep.subr.bf16.mxu0 %v2607
          %2916 = vmatpush1.bf16.msra.mxu0 %v2606
          %2917 = vmatprep.subr.bf16.mxu0 %v2611
          %2918 = vmatpush1.bf16.msra.mxu0 %v2610
          %2919 = vmatprep.subr.bf16.mxu0 %v2615
          %2920 = vmatpush1.bf16.msra.mxu0 %v2614
          %2921 = vmatprep.subr.bf16.mxu0 %v2619
          %2922 = vmatpush1.bf16.msra.mxu0 %v2618
          %2923 = vmatprep.subr.bf16.mxu0 %v2623
          %2924 = vmatpush1.bf16.msra.mxu0 %v2622
          %2925 = vmatprep.subr.bf16.mxu0 %v2627
          %2926 = vmatpush1.bf16.msra.mxu0 %v2626
          %2927 = vmatprep.subr.bf16.mxu0 %v2631
          %2928 = vmatpush1.bf16.msra.mxu0 %v2630
          %2929 = vmatprep.subr.bf16.mxu0 %v2635
          %2930 = vmatpush1.bf16.msra.mxu0 %v2634
          %2931 = vmatprep.subr.bf16.mxu0 %v2639
          %2932 = vmatpush1.bf16.msra.mxu0 %v2638
          %2933 = vmatprep.subr.bf16.mxu0 %v2643
          %2934 = vmatpush1.bf16.msra.mxu0 %v2642
          %2935 = vmatprep.subr.bf16.mxu0 %v2647
          %2936 = vmatpush1.bf16.msra.mxu0 %v2646
          %2937 = vmatprep.subr.bf16.mxu0 %v2651
          %2938 = vmatpush1.bf16.msra.mxu0 %v2650
          %2939 = vmatprep.subr.bf16.mxu0 %v2655
          %2940 = vmatpush1.bf16.msra.mxu0 %v2654
          %2941 = vmatprep.subr.bf16.mxu0 %v2659
          %2942 = vmatpush1.bf16.msra.mxu0 %v2658
          %2943 = vmatprep.mubr.bf16.mxu0 %v2495
          %2944 = vmatmul.mubr.bf16.gmra.mrb[0].mxu0 %v2494
          %v2945 = vpop.f32.mrb[0].mxu0
          %v2946 = vadd.f32 0.0, %v2945
          %v2947 = vpop.f32.mrb[0].mxu0
          %v2948 = vadd.f32 0.0, %v2947
          %v2949 = vpop.f32.mrb[0].mxu0
          %v2950 = vpop.f32.mrb[0].mxu0
          %2951 = vdwg.mxu0
          %2952 = vmatprep.subr.bf16.mxu0 %v2663
          %2953 = vmatpush1.bf16.msra.mxu0 %v2662
          %2954 = vmatprep.subr.bf16.mxu0 %v2667
          %2955 = vmatpush1.bf16.msra.mxu0 %v2666
          %2956 = vmatprep.subr.bf16.mxu0 %v2671
          %2957 = vmatpush1.bf16.msra.mxu0 %v2670
          %2958 = vmatprep.subr.bf16.mxu0 %v2675
          %2959 = vmatpush1.bf16.msra.mxu0 %v2674
          %2960 = vmatprep.subr.bf16.mxu0 %v2679
          %2961 = vmatpush1.bf16.msra.mxu0 %v2678
          %2962 = vmatprep.subr.bf16.mxu0 %v2683
          %2963 = vmatpush1.bf16.msra.mxu0 %v2682
          %2964 = vmatprep.subr.bf16.mxu0 %v2687
          %2965 = vmatpush1.bf16.msra.mxu0 %v2686
          %2966 = vmatprep.subr.bf16.mxu0 %v2691
          %2967 = vmatpush1.bf16.msra.mxu0 %v2690
          %2968 = vmatprep.subr.bf16.mxu0 %v2695
          %2969 = vmatpush1.bf16.msra.mxu0 %v2694
          %2970 = vmatprep.subr.bf16.mxu0 %v2699
          %2971 = vmatpush1.bf16.msra.mxu0 %v2698
          %2972 = vmatprep.subr.bf16.mxu0 %v2703
          %2973 = vmatpush1.bf16.msra.mxu0 %v2702
          %2974 = vmatprep.subr.bf16.mxu0 %v2707
          %2975 = vmatpush1.bf16.msra.mxu0 %v2706
          %2976 = vmatprep.subr.bf16.mxu0 %v2711
          %2977 = vmatpush1.bf16.msra.mxu0 %v2710
          %2978 = vmatprep.subr.bf16.mxu0 %v2715
          %2979 = vmatpush1.bf16.msra.mxu0 %v2714
          %2980 = vmatprep.subr.bf16.mxu0 %v2719
          %2981 = vmatpush1.bf16.msra.mxu0 %v2718
          %2982 = vmatprep.subr.bf16.mxu0 %v2723
          %2983 = vmatpush1.bf16.msra.mxu0 %v2722
          %2984 = vmatprep.mubr.bf16.mxu0 %v2497
          %2985 = vmatmul.mubr.bf16.gmra.mrb[0].mxu0 %v2496
          %v2986 = vpop.f32.mrb[0].mxu0
          %v2987 = vadd.f32 %v2946, %v2986
          %v2988 = vpop.f32.mrb[0].mxu0
          %v2989 = vadd.f32 %v2948, %v2988
          %v2990 = vpop.f32.mrb[0].mxu0
          %v2991 = vpop.f32.mrb[0].mxu0
          %2992 = vdwg.mxu0
          %2993 = vmatprep.subr.bf16.mxu0 %v2727
          %2994 = vmatpush1.bf16.msra.mxu0 %v2726
          %2995 = vmatprep.subr.bf16.mxu0 %v2731
          %2996 = vmatpush1.bf16.msra.mxu0 %v2730
          %2997 = vmatprep.subr.bf16.mxu0 %v2735
          %2998 = vmatpush1.bf16.msra.mxu0 %v2734
          %2999 = vmatprep.subr.bf16.mxu0 %v2739
          %3000 = vmatpush1.bf16.msra.mxu0 %v2738
          %3001 = vmatprep.subr.bf16.mxu0 %v2743
          %3002 = vmatpush1.bf16.msra.mxu0 %v2742
          %3003 = vmatprep.subr.bf16.mxu0 %v2747
          %3004 = vmatpush1.bf16.msra.mxu0 %v2746
          %3005 = vmatprep.subr.bf16.mxu0 %v2751
          %3006 = vmatpush1.bf16.msra.mxu0 %v2750
          %3007 = vmatprep.subr.bf16.mxu0 %v2755
          %3008 = vmatpush1.bf16.msra.mxu0 %v2754
          %3009 = vmatprep.subr.bf16.mxu0 %v2759
          %3010 = vmatpush1.bf16.msra.mxu0 %v2758
          %3011 = vmatprep.subr.bf16.mxu0 %v2763
          %3012 = vmatpush1.bf16.msra.mxu0 %v2762
          %3013 = vmatprep.subr.bf16.mxu0 %v2767
          %3014 = vmatpush1.bf16.msra.mxu0 %v2766
          %3015 = vmatprep.subr.bf16.mxu0 %v2771
          %3016 = vmatpush1.bf16.msra.mxu0 %v2770
          %3017 = vmatprep.subr.bf16.mxu0 %v2775
          %3018 = vmatpush1.bf16.msra.mxu0 %v2774
          %3019 = vmatprep.subr.bf16.mxu0 %v2779
          %3020 = vmatpush1.bf16.msra.mxu0 %v2778
          %3021 = vmatprep.subr.bf16.mxu0 %v2783
          %3022 = vmatpush1.bf16.msra.mxu0 %v2782
          %3023 = vmatprep.subr.bf16.mxu0 %v2787
          %3024 = vmatpush1.bf16.msra.mxu0 %v2786
          %3025 = vmatprep.mubr.bf16.mxu0 %v2499
          %3026 = vmatmul.mubr.bf16.gmra.mrb[0].mxu0 %v2498
          %v3027 = vpop.f32.mrb[0].mxu0
          %v3028 = vadd.f32 %v2987, %v3027
          %v3029 = vpop.f32.mrb[0].mxu0
          %v3030 = vadd.f32 %v2989, %v3029
          %v3031 = vpop.f32.mrb[0].mxu0
          %v3032 = vpop.f32.mrb[0].mxu0
          %3033 = vdwg.mxu0
          %v3034 = vld [vmem:[#allocation15] sm:$0xf]
          %v3036 = vlaneseq
          %v3037 = vshrl.u32 %v3036, 7
          %v3038 = vsub.s32 0, %v3037
          %v3039 = vrot.slane %v3034, %v3038
          %v3040 = vlaneseq
          %v3041 = vshrl.u32 %v3040, 7
          %v3042 = vsub.s32 1, %v3041
          %v3043 = vrot.slane %v3034, %v3042
          %v3044 = vlaneseq
          %v3045 = vshrl.u32 %v3044, 7
          %v3046 = vsub.s32 2, %v3045
          %v3047 = vrot.slane %v3034, %v3046
          %v3048 = vlaneseq
          %v3049 = vshrl.u32 %v3048, 7
          %v3050 = vsub.s32 3, %v3049
          %v3051 = vrot.slane %v3034, %v3050
          %v3056 = vmul.f32 %v2905, %v3039
          %v3057 = vmul.f32 %v2907, %v3043
          %v3058 = vmul.f32 %v3028, %v3047
          %v3059 = vmul.f32 %v3030, %v3051
          %v3060 = vld [vmem:[#allocation17] sm:$0xf]
          %v3062 = vlaneseq
          %v3063 = vshrl.u32 %v3062, 7
          %v3064 = vsub.s32 0, %v3063
          %v3065 = vrot.slane %v3060, %v3064
          %v3066 = vlaneseq
          %v3067 = vshrl.u32 %v3066, 7
          %v3068 = vsub.s32 1, %v3067
          %v3069 = vrot.slane %v3060, %v3068
          %v3070 = vlaneseq
          %v3071 = vshrl.u32 %v3070, 7
          %v3072 = vsub.s32 2, %v3071
          %v3073 = vrot.slane %v3060, %v3072
          %v3074 = vlaneseq
          %v3075 = vshrl.u32 %v3074, 7
          %v3076 = vsub.s32 3, %v3075
          %v3077 = vrot.slane %v3060, %v3076
          %v3082 = vadd.f32 %v3056, %v3065
          %v3083 = vadd.f32 %v3057, %v3069
          %v3084 = vadd.f32 %v3058, %v3073
          %v3085 = vadd.f32 %v3059, %v3077
          %v3086 = vmax.f32 %v3082, 0.0
          %v3087 = vmax.f32 %v3083, 0.0
          %v3088 = vmax.f32 %v3084, 0.0
          %v3089 = vmax.f32 %v3085, 0.0
          %v3090 = vpack.c.bf16 %v3086, %v3086
          %v3091 = vpack.c.bf16 %v3087, %v3087
          %v3092 = vpack.c.bf16 %v3088, %v3088
          %v3093 = vpack.c.bf16 %v3089, %v3089
          %v3094 = vld [vmem:[#allocation18] sm:$0xff]
          %v3095 = vld [vmem:[#allocation18 + $0x8] sm:$0xff]
          %v3096 = vld [vmem:[#allocation18 + $0x10] sm:$0xff]
          %v3097 = vld [vmem:[#allocation18 + $0x18] sm:$0xff]
          %v3098 = vld [vmem:[#allocation18 + $0x20] sm:$0xff]
          %v3099 = vld [vmem:[#allocation18 + $0x28] sm:$0xff]
          %v3100 = vld [vmem:[#allocation18 + $0x30] sm:$0xff]
          %v3101 = vld [vmem:[#allocation18 + $0x38] sm:$0xff]
          %v3102 = vld [vmem:[#allocation18 + $0x40] sm:$0xff]
          %v3103 = vld [vmem:[#allocation18 + $0x48] sm:$0xff]
          %v3104 = vld [vmem:[#allocation18 + $0x50] sm:$0xff]
          %v3105 = vld [vmem:[#allocation18 + $0x58] sm:$0xff]
          %v3106 = vld [vmem:[#allocation18 + $0x60] sm:$0xff]
          %v3107 = vld [vmem:[#allocation18 + $0x68] sm:$0xff]
          %v3108 = vld [vmem:[#allocation18 + $0x70] sm:$0xff]
          %v3109 = vld [vmem:[#allocation18 + $0x78] sm:$0xff]
          %v3110 = vld [vmem:[#allocation18 + $0x80] sm:$0xff]
          %v3111 = vld [vmem:[#allocation18 + $0x88] sm:$0xff]
          %v3112 = vld [vmem:[#allocation18 + $0x90] sm:$0xff]
          %v3113 = vld [vmem:[#allocation18 + $0x98] sm:$0xff]
          %v3114 = vld [vmem:[#allocation18 + $0xa0] sm:$0xff]
          %v3115 = vld [vmem:[#allocation18 + $0xa8] sm:$0xff]
          %v3116 = vld [vmem:[#allocation18 + $0xb0] sm:$0xff]
          %v3117 = vld [vmem:[#allocation18 + $0xb8] sm:$0xff]
          %v3118 = vld [vmem:[#allocation18 + $0xc0] sm:$0xff]
          %v3119 = vld [vmem:[#allocation18 + $0xc8] sm:$0xff]
          %v3120 = vld [vmem:[#allocation18 + $0xd0] sm:$0xff]
          %v3121 = vld [vmem:[#allocation18 + $0xd8] sm:$0xff]
          %v3122 = vld [vmem:[#allocation18 + $0xe0] sm:$0xff]
          %v3123 = vld [vmem:[#allocation18 + $0xe8] sm:$0xff]
          %v3124 = vld [vmem:[#allocation18 + $0xf0] sm:$0xff]
          %v3125 = vld [vmem:[#allocation18 + $0xf8] sm:$0xff]
          %v3126 = vld [vmem:[#allocation18 + $0x100] sm:$0xff]
          %v3127 = vld [vmem:[#allocation18 + $0x108] sm:$0xff]
          %v3128 = vld [vmem:[#allocation18 + $0x110] sm:$0xff]
          %v3129 = vld [vmem:[#allocation18 + $0x118] sm:$0xff]
          %v3130 = vld [vmem:[#allocation18 + $0x120] sm:$0xff]
          %v3131 = vld [vmem:[#allocation18 + $0x128] sm:$0xff]
          %v3132 = vld [vmem:[#allocation18 + $0x130] sm:$0xff]
          %v3133 = vld [vmem:[#allocation18 + $0x138] sm:$0xff]
          %v3134 = vld [vmem:[#allocation18 + $0x140] sm:$0xff]
          %v3135 = vld [vmem:[#allocation18 + $0x148] sm:$0xff]
          %v3136 = vld [vmem:[#allocation18 + $0x150] sm:$0xff]
          %v3137 = vld [vmem:[#allocation18 + $0x158] sm:$0xff]
          %v3138 = vld [vmem:[#allocation18 + $0x160] sm:$0xff]
          %v3139 = vld [vmem:[#allocation18 + $0x168] sm:$0xff]
          %v3140 = vld [vmem:[#allocation18 + $0x170] sm:$0xff]
          %v3141 = vld [vmem:[#allocation18 + $0x178] sm:$0xff]
          %v3142 = vunpack.c.l.s8.bf16 %v3094
          %v3143 = vunpack.c.l.s8.bf16 %v3095
          %v3144 = vunpack.c.l.s8.bf16 %v3096
          %v3145 = vunpack.c.h.s8.bf16 %v3094
          %v3146 = vunpack.c.h.s8.bf16 %v3095
          %v3147 = vunpack.c.h.s8.bf16 %v3096
          %v3148 = vunpack.c.l.s8.bf16 %v3097
          %v3149 = vunpack.c.l.s8.bf16 %v3098
          %v3150 = vunpack.c.l.s8.bf16 %v3099
          %v3151 = vunpack.c.h.s8.bf16 %v3097
          %v3152 = vunpack.c.h.s8.bf16 %v3098
          %v3153 = vunpack.c.h.s8.bf16 %v3099
          %v3154 = vunpack.c.l.s8.bf16 %v3100
          %v3155 = vunpack.c.l.s8.bf16 %v3101
          %v3156 = vunpack.c.l.s8.bf16 %v3102
          %v3157 = vunpack.c.h.s8.bf16 %v3100
          %v3158 = vunpack.c.h.s8.bf16 %v3101
          %v3159 = vunpack.c.h.s8.bf16 %v3102
          %v3160 = vunpack.c.l.s8.bf16 %v3103
          %v3161 = vunpack.c.l.s8.bf16 %v3104
          %v3162 = vunpack.c.l.s8.bf16 %v3105
          %v3163 = vunpack.c.h.s8.bf16 %v3103
          %v3164 = vunpack.c.h.s8.bf16 %v3104
          %v3165 = vunpack.c.h.s8.bf16 %v3105
          %v3166 = vunpack.c.l.s8.bf16 %v3106
          %v3167 = vunpack.c.l.s8.bf16 %v3107
          %v3168 = vunpack.c.l.s8.bf16 %v3108
          %v3169 = vunpack.c.h.s8.bf16 %v3106
          %v3170 = vunpack.c.h.s8.bf16 %v3107
          %v3171 = vunpack.c.h.s8.bf16 %v3108
          %v3172 = vunpack.c.l.s8.bf16 %v3109
          %v3173 = vunpack.c.l.s8.bf16 %v3110
          %v3174 = vunpack.c.l.s8.bf16 %v3111
          %v3175 = vunpack.c.h.s8.bf16 %v3109
          %v3176 = vunpack.c.h.s8.bf16 %v3110
          %v3177 = vunpack.c.h.s8.bf16 %v3111
          %v3178 = vunpack.c.l.s8.bf16 %v3112
          %v3179 = vunpack.c.l.s8.bf16 %v3113
          %v3180 = vunpack.c.l.s8.bf16 %v3114
          %v3181 = vunpack.c.h.s8.bf16 %v3112
          %v3182 = vunpack.c.h.s8.bf16 %v3113
          %v3183 = vunpack.c.h.s8.bf16 %v3114
          %v3184 = vunpack.c.l.s8.bf16 %v3115
          %v3185 = vunpack.c.l.s8.bf16 %v3116
          %v3186 = vunpack.c.l.s8.bf16 %v3117
          %v3187 = vunpack.c.h.s8.bf16 %v3115
          %v3188 = vunpack.c.h.s8.bf16 %v3116
          %v3189 = vunpack.c.h.s8.bf16 %v3117
          %v3190 = vunpack.c.l.s8.bf16 %v3118
          %v3191 = vunpack.c.l.s8.bf16 %v3119
          %v3192 = vunpack.c.l.s8.bf16 %v3120
          %v3193 = vunpack.c.h.s8.bf16 %v3118
          %v3194 = vunpack.c.h.s8.bf16 %v3119
          %v3195 = vunpack.c.h.s8.bf16 %v3120
          %v3196 = vunpack.c.l.s8.bf16 %v3121
          %v3197 = vunpack.c.l.s8.bf16 %v3122
          %v3198 = vunpack.c.l.s8.bf16 %v3123
          %v3199 = vunpack.c.h.s8.bf16 %v3121
          %v3200 = vunpack.c.h.s8.bf16 %v3122
          %v3201 = vunpack.c.h.s8.bf16 %v3123
          %v3202 = vunpack.c.l.s8.bf16 %v3124
          %v3203 = vunpack.c.l.s8.bf16 %v3125
          %v3204 = vunpack.c.l.s8.bf16 %v3126
          %v3205 = vunpack.c.h.s8.bf16 %v3124
          %v3206 = vunpack.c.h.s8.bf16 %v3125
          %v3207 = vunpack.c.h.s8.bf16 %v3126
          %v3208 = vunpack.c.l.s8.bf16 %v3127
          %v3209 = vunpack.c.l.s8.bf16 %v3128
          %v3210 = vunpack.c.l.s8.bf16 %v3129
          %v3211 = vunpack.c.h.s8.bf16 %v3127
          %v3212 = vunpack.c.h.s8.bf16 %v3128
          %v3213 = vunpack.c.h.s8.bf16 %v3129
          %v3214 = vunpack.c.l.s8.bf16 %v3130
          %v3215 = vunpack.c.l.s8.bf16 %v3131
          %v3216 = vunpack.c.l.s8.bf16 %v3132
          %v3217 = vunpack.c.h.s8.bf16 %v3130
          %v3218 = vunpack.c.h.s8.bf16 %v3131
          %v3219 = vunpack.c.h.s8.bf16 %v3132
          %v3220 = vunpack.c.l.s8.bf16 %v3133
          %v3221 = vunpack.c.l.s8.bf16 %v3134
          %v3222 = vunpack.c.l.s8.bf16 %v3135
          %v3223 = vunpack.c.h.s8.bf16 %v3133
          %v3224 = vunpack.c.h.s8.bf16 %v3134
          %v3225 = vunpack.c.h.s8.bf16 %v3135
          %v3226 = vunpack.c.l.s8.bf16 %v3136
          %v3227 = vunpack.c.l.s8.bf16 %v3137
          %v3228 = vunpack.c.l.s8.bf16 %v3138
          %v3229 = vunpack.c.h.s8.bf16 %v3136
          %v3230 = vunpack.c.h.s8.bf16 %v3137
          %v3231 = vunpack.c.h.s8.bf16 %v3138
          %v3232 = vunpack.c.l.s8.bf16 %v3139
          %v3233 = vunpack.c.l.s8.bf16 %v3140
          %v3234 = vunpack.c.l.s8.bf16 %v3141
          %v3235 = vunpack.c.h.s8.bf16 %v3139
          %v3236 = vunpack.c.h.s8.bf16 %v3140
          %v3237 = vunpack.c.h.s8.bf16 %v3141
          %3238 = vmatprep.subr.bf16.mxu0 %v3143
          %3239 = vmatpush1.bf16.msra.mxu0 %v3142
          %3240 = vmatprep.subr.bf16.mxu0 %v3146
          %3241 = vmatpush1.bf16.msra.mxu0 %v3145
          %3242 = vmatprep.subr.bf16.mxu0 %v3149
          %3243 = vmatpush1.bf16.msra.mxu0 %v3148
          %3244 = vmatprep.subr.bf16.mxu0 %v3152
          %3245 = vmatpush1.bf16.msra.mxu0 %v3151
          %3246 = vmatprep.subr.bf16.mxu0 %v3155
          %3247 = vmatpush1.bf16.msra.mxu0 %v3154
          %3248 = vmatprep.subr.bf16.mxu0 %v3158
          %3249 = vmatpush1.bf16.msra.mxu0 %v3157
          %3250 = vmatprep.subr.bf16.mxu0 %v3161
          %3251 = vmatpush1.bf16.msra.mxu0 %v3160
          %3252 = vmatprep.subr.bf16.mxu0 %v3164
          %3253 = vmatpush1.bf16.msra.mxu0 %v3163
          %3254 = vmatprep.subr.bf16.mxu0 %v3167
          %3255 = vmatpush1.bf16.msra.mxu0 %v3166
          %3256 = vmatprep.subr.bf16.mxu0 %v3170
          %3257 = vmatpush1.bf16.msra.mxu0 %v3169
          %3258 = vmatprep.subr.bf16.mxu0 %v3173
          %3259 = vmatpush1.bf16.msra.mxu0 %v3172
          %3260 = vmatprep.subr.bf16.mxu0 %v3176
          %3261 = vmatpush1.bf16.msra.mxu0 %v3175
          %3262 = vmatprep.subr.bf16.mxu0 %v3179
          %3263 = vmatpush1.bf16.msra.mxu0 %v3178
          %3264 = vmatprep.subr.bf16.mxu0 %v3182
          %3265 = vmatpush1.bf16.msra.mxu0 %v3181
          %3266 = vmatprep.subr.bf16.mxu0 %v3185
          %3267 = vmatpush1.bf16.msra.mxu0 %v3184
          %3268 = vmatprep.subr.bf16.mxu0 %v3188
          %3269 = vmatpush1.bf16.msra.mxu0 %v3187
          %3270 = vmatprep.mubr.bf16.mxu0 %v3091
          %3271 = vmatmul.mubr.bf16.gmra.mrb[0].mxu0 %v3090
          %v3272 = vpop.f32.mrb[0].mxu0
          %v3273 = vadd.f32 0.0, %v3272
          %v3274 = vpop.f32.mrb[0].mxu0
          %v3275 = vadd.f32 0.0, %v3274
          %v3276 = vpop.f32.mrb[0].mxu0
          %v3277 = vpop.f32.mrb[0].mxu0
          %3278 = vdwg.mxu0
          %3279 = vmatprep.subr.bf16.mxu0 %v3191
          %3280 = vmatpush1.bf16.msra.mxu0 %v3190
          %3281 = vmatprep.subr.bf16.mxu0 %v3194
          %3282 = vmatpush1.bf16.msra.mxu0 %v3193
          %3283 = vmatprep.subr.bf16.mxu0 %v3197
          %3284 = vmatpush1.bf16.msra.mxu0 %v3196
          %3285 = vmatprep.subr.bf16.mxu0 %v3200
          %3286 = vmatpush1.bf16.msra.mxu0 %v3199
          %3287 = vmatprep.subr.bf16.mxu0 %v3203
          %3288 = vmatpush1.bf16.msra.mxu0 %v3202
          %3289 = vmatprep.subr.bf16.mxu0 %v3206
          %3290 = vmatpush1.bf16.msra.mxu0 %v3205
          %3291 = vmatprep.subr.bf16.mxu0 %v3209
          %3292 = vmatpush1.bf16.msra.mxu0 %v3208
          %3293 = vmatprep.subr.bf16.mxu0 %v3212
          %3294 = vmatpush1.bf16.msra.mxu0 %v3211
          %3295 = vmatprep.subr.bf16.mxu0 %v3215
          %3296 = vmatpush1.bf16.msra.mxu0 %v3214
          %3297 = vmatprep.subr.bf16.mxu0 %v3218
          %3298 = vmatpush1.bf16.msra.mxu0 %v3217
          %3299 = vmatprep.subr.bf16.mxu0 %v3221
          %3300 = vmatpush1.bf16.msra.mxu0 %v3220
          %3301 = vmatprep.subr.bf16.mxu0 %v3224
          %3302 = vmatpush1.bf16.msra.mxu0 %v3223
          %3303 = vmatprep.subr.bf16.mxu0 %v3227
          %3304 = vmatpush1.bf16.msra.mxu0 %v3226
          %3305 = vmatprep.subr.bf16.mxu0 %v3230
          %3306 = vmatpush1.bf16.msra.mxu0 %v3229
          %3307 = vmatprep.subr.bf16.mxu0 %v3233
          %3308 = vmatpush1.bf16.msra.mxu0 %v3232
          %3309 = vmatprep.subr.bf16.mxu0 %v3236
          %3310 = vmatpush1.bf16.msra.mxu0 %v3235
          %3311 = vmatprep.mubr.bf16.mxu0 %v3093
          %3312 = vmatmul.mubr.bf16.gmra.mrb[0].mxu0 %v3092
          %v3313 = vpop.f32.mrb[0].mxu0
          %v3314 = vadd.f32 %v3273, %v3313
          %v3315 = vpop.f32.mrb[0].mxu0
          %v3316 = vadd.f32 %v3275, %v3315
          %v3317 = vpop.f32.mrb[0].mxu0
          %v3318 = vpop.f32.mrb[0].mxu0
          %3319 = vdwg.mxu0
          %3320 = vmatprep.subr.bf16.mxu0 0
          %3321 = vmatpush1.bf16.msra.mxu0 %v3144
          %3322 = vmatprep.subr.bf16.mxu0 0
          %3323 = vmatpush1.bf16.msra.mxu0 %v3147
          %3324 = vmatprep.subr.bf16.mxu0 0
          %3325 = vmatpush1.bf16.msra.mxu0 %v3150
          %3326 = vmatprep.subr.bf16.mxu0 0
          %3327 = vmatpush1.bf16.msra.mxu0 %v3153
          %3328 = vmatprep.subr.bf16.mxu0 0
          %3329 = vmatpush1.bf16.msra.mxu0 %v3156
          %3330 = vmatprep.subr.bf16.mxu0 0
          %3331 = vmatpush1.bf16.msra.mxu0 %v3159
          %3332 = vmatprep.subr.bf16.mxu0 0
          %3333 = vmatpush1.bf16.msra.mxu0 %v3162
          %3334 = vmatprep.subr.bf16.mxu0 0
          %3335 = vmatpush1.bf16.msra.mxu0 %v3165
          %3336 = vmatprep.subr.bf16.mxu0 0
          %3337 = vmatpush1.bf16.msra.mxu0 %v3168
          %3338 = vmatprep.subr.bf16.mxu0 0
          %3339 = vmatpush1.bf16.msra.mxu0 %v3171
          %3340 = vmatprep.subr.bf16.mxu0 0
          %3341 = vmatpush1.bf16.msra.mxu0 %v3174
          %3342 = vmatprep.subr.bf16.mxu0 0
          %3343 = vmatpush1.bf16.msra.mxu0 %v3177
          %3344 = vmatprep.subr.bf16.mxu0 0
          %3345 = vmatpush1.bf16.msra.mxu0 %v3180
          %3346 = vmatprep.subr.bf16.mxu0 0
          %3347 = vmatpush1.bf16.msra.mxu0 %v3183
          %3348 = vmatprep.subr.bf16.mxu0 0
          %3349 = vmatpush1.bf16.msra.mxu0 %v3186
          %3350 = vmatprep.subr.bf16.mxu0 0
          %3351 = vmatpush1.bf16.msra.mxu0 %v3189
          %3352 = vmatprep.mubr.bf16.mxu0 %v3091
          %3353 = vmatmul.mubr.bf16.gmra.mrb[0].mxu0 %v3090
          %v3354 = vpop.f32.mrb[0].mxu0
          %v3355 = vadd.f32 0.0, %v3354
          %v3356 = vpop.f32.mrb[0].mxu0
          %v3357 = vpop.f32.mrb[0].mxu0
          %v3358 = vpop.f32.mrb[0].mxu0
          %3359 = vdwg.mxu0
          %3360 = vmatprep.subr.bf16.mxu0 0
          %3361 = vmatpush1.bf16.msra.mxu0 %v3192
          %3362 = vmatprep.subr.bf16.mxu0 0
          %3363 = vmatpush1.bf16.msra.mxu0 %v3195
          %3364 = vmatprep.subr.bf16.mxu0 0
          %3365 = vmatpush1.bf16.msra.mxu0 %v3198
          %3366 = vmatprep.subr.bf16.mxu0 0
          %3367 = vmatpush1.bf16.msra.mxu0 %v3201
          %3368 = vmatprep.subr.bf16.mxu0 0
          %3369 = vmatpush1.bf16.msra.mxu0 %v3204
          %3370 = vmatprep.subr.bf16.mxu0 0
          %3371 = vmatpush1.bf16.msra.mxu0 %v3207
          %3372 = vmatprep.subr.bf16.mxu0 0
          %3373 = vmatpush1.bf16.msra.mxu0 %v3210
          %3374 = vmatprep.subr.bf16.mxu0 0
          %3375 = vmatpush1.bf16.msra.mxu0 %v3213
          %3376 = vmatprep.subr.bf16.mxu0 0
          %3377 = vmatpush1.bf16.msra.mxu0 %v3216
          %3378 = vmatprep.subr.bf16.mxu0 0
          %3379 = vmatpush1.bf16.msra.mxu0 %v3219
          %3380 = vmatprep.subr.bf16.mxu0 0
          %3381 = vmatpush1.bf16.msra.mxu0 %v3222
          %3382 = vmatprep.subr.bf16.mxu0 0
          %3383 = vmatpush1.bf16.msra.mxu0 %v3225
          %3384 = vmatprep.subr.bf16.mxu0 0
          %3385 = vmatpush1.bf16.msra.mxu0 %v3228
          %3386 = vmatprep.subr.bf16.mxu0 0
          %3387 = vmatpush1.bf16.msra.mxu0 %v3231
          %3388 = vmatprep.subr.bf16.mxu0 0
          %3389 = vmatpush1.bf16.msra.mxu0 %v3234
          %3390 = vmatprep.subr.bf16.mxu0 0
          %3391 = vmatpush1.bf16.msra.mxu0 %v3237
          %3392 = vmatprep.mubr.bf16.mxu0 %v3093
          %3393 = vmatmul.mubr.bf16.gmra.mrb[0].mxu0 %v3092
          %v3394 = vpop.f32.mrb[0].mxu0
          %v3395 = vadd.f32 %v3355, %v3394
          %v3396 = vpop.f32.mrb[0].mxu0
          %v3397 = vpop.f32.mrb[0].mxu0
          %v3398 = vpop.f32.mrb[0].mxu0
          %3399 = vdwg.mxu0
          %v3400 = vld [vmem:[#allocation20] sm:$0x7]
          %v3402 = vlaneseq
          %v3403 = vshrl.u32 %v3402, 7
          %v3404 = vsub.s32 0, %v3403
          %v3405 = vrot.slane %v3400, %v3404
          %v3406 = vlaneseq
          %v3407 = vshrl.u32 %v3406, 7
          %v3408 = vsub.s32 1, %v3407
          %v3409 = vrot.slane %v3400, %v3408
          %v3410 = vlaneseq
          %v3411 = vshrl.u32 %v3410, 7
          %v3412 = vsub.s32 2, %v3411
          %v3413 = vrot.slane %v3400, %v3412
          %v3417 = vmul.f32 %v3314, %v3405
          %v3418 = vmul.f32 %v3316, %v3409
          %v3419 = vmul.f32 %v3395, %v3413
          %v3420 = vld [vmem:[#allocation21] sm:$0x7]
          %v3422 = vlaneseq
          %v3423 = vshrl.u32 %v3422, 7
          %v3424 = vsub.s32 0, %v3423
          %v3425 = vrot.slane %v3420, %v3424
          %v3426 = vlaneseq
          %v3427 = vshrl.u32 %v3426, 7
          %v3428 = vsub.s32 1, %v3427
          %v3429 = vrot.slane %v3420, %v3428
          %v3430 = vlaneseq
          %v3431 = vshrl.u32 %v3430, 7
          %v3432 = vsub.s32 2, %v3431
          %v3433 = vrot.slane %v3420, %v3432
          %v3437 = vadd.f32 %v3417, %v3425
          %v3438 = vadd.f32 %v3418, %v3429
          %v3439 = vadd.f32 %v3419, %v3433
          %v3440 = vmax.f32 %v3437, 0.0
          %v3441 = vmax.f32 %v3438, 0.0
          %v3442 = vmax.f32 %v3439, 0.0
          %v3443 = vpack.c.bf16 %v3440, %v3440
          %v3444 = vpack.c.bf16 %v3441, %v3441
          %v3445 = vpack.c.bf16 %v3442, %v3442
          %v3446 = vld [vmem:[#allocation23] sm:$0xff]
          %v3447 = vld [vmem:[#allocation23 + $0x8] sm:$0xff]
          %v3448 = vld [vmem:[#allocation23 + $0x10] sm:$0xff]
          %v3449 = vld [vmem:[#allocation23 + $0x18] sm:$0xff]
          %v3450 = vld [vmem:[#allocation23 + $0x20] sm:$0xff]
          %v3451 = vld [vmem:[#allocation23 + $0x28] sm:$0xff]
          %v3452 = vld [vmem:[#allocation23 + $0x30] sm:$0xff]
          %v3453 = vld [vmem:[#allocation23 + $0x38] sm:$0xff]
          %v3454 = vld [vmem:[#allocation23 + $0x40] sm:$0xff]
          %v3455 = vld [vmem:[#allocation23 + $0x48] sm:$0xff]
          %v3456 = vld [vmem:[#allocation23 + $0x50] sm:$0xff]
          %v3457 = vld [vmem:[#allocation23 + $0x58] sm:$0xff]
          %v3458 = vld [vmem:[#allocation23 + $0x60] sm:$0xff]
          %v3459 = vld [vmem:[#allocation23 + $0x68] sm:$0xff]
          %v3460 = vld [vmem:[#allocation23 + $0x70] sm:$0xff]
          %v3461 = vld [vmem:[#allocation23 + $0x78] sm:$0xff]
          %v3462 = vld [vmem:[#allocation23 + $0x80] sm:$0xff]
          %v3463 = vld [vmem:[#allocation23 + $0x88] sm:$0xff]
          %v3464 = vld [vmem:[#allocation23 + $0x90] sm:$0xff]
          %v3465 = vld [vmem:[#allocation23 + $0x98] sm:$0xff]
          %v3466 = vld [vmem:[#allocation23 + $0xa0] sm:$0xff]
          %v3467 = vld [vmem:[#allocation23 + $0xa8] sm:$0xff]
          %v3468 = vld [vmem:[#allocation23 + $0xb0] sm:$0xff]
          %v3469 = vld [vmem:[#allocation23 + $0xb8] sm:$0xff]
          %v3470 = vunpack.c.l.s8.bf16 %v3446
          %v3471 = vunpack.c.l.s8.bf16 %v3447
          %v3472 = vunpack.c.h.s8.bf16 %v3446
          %v3473 = vunpack.c.h.s8.bf16 %v3447
          %v3474 = vunpack.c.l.s8.bf16 %v3448
          %v3475 = vunpack.c.l.s8.bf16 %v3449
          %v3476 = vunpack.c.h.s8.bf16 %v3448
          %v3477 = vunpack.c.h.s8.bf16 %v3449
          %v3478 = vunpack.c.l.s8.bf16 %v3450
          %v3479 = vunpack.c.l.s8.bf16 %v3451
          %v3480 = vunpack.c.h.s8.bf16 %v3450
          %v3481 = vunpack.c.h.s8.bf16 %v3451
          %v3482 = vunpack.c.l.s8.bf16 %v3452
          %v3483 = vunpack.c.l.s8.bf16 %v3453
          %v3484 = vunpack.c.h.s8.bf16 %v3452
          %v3485 = vunpack.c.h.s8.bf16 %v3453
          %v3486 = vunpack.c.l.s8.bf16 %v3454
          %v3487 = vunpack.c.l.s8.bf16 %v3455
          %v3488 = vunpack.c.h.s8.bf16 %v3454
          %v3489 = vunpack.c.h.s8.bf16 %v3455
          %v3490 = vunpack.c.l.s8.bf16 %v3456
          %v3491 = vunpack.c.l.s8.bf16 %v3457
          %v3492 = vunpack.c.h.s8.bf16 %v3456
          %v3493 = vunpack.c.h.s8.bf16 %v3457
          %v3494 = vunpack.c.l.s8.bf16 %v3458
          %v3495 = vunpack.c.l.s8.bf16 %v3459
          %v3496 = vunpack.c.h.s8.bf16 %v3458
          %v3497 = vunpack.c.h.s8.bf16 %v3459
          %v3498 = vunpack.c.l.s8.bf16 %v3460
          %v3499 = vunpack.c.l.s8.bf16 %v3461
          %v3500 = vunpack.c.h.s8.bf16 %v3460
          %v3501 = vunpack.c.h.s8.bf16 %v3461
          %v3502 = vunpack.c.l.s8.bf16 %v3462
          %v3503 = vunpack.c.l.s8.bf16 %v3463
          %v3504 = vunpack.c.h.s8.bf16 %v3462
          %v3505 = vunpack.c.h.s8.bf16 %v3463
          %v3506 = vunpack.c.l.s8.bf16 %v3464
          %v3507 = vunpack.c.l.s8.bf16 %v3465
          %v3508 = vunpack.c.h.s8.bf16 %v3464
          %v3509 = vunpack.c.h.s8.bf16 %v3465
          %v3510 = vunpack.c.l.s8.bf16 %v3466
          %v3511 = vunpack.c.l.s8.bf16 %v3467
          %v3512 = vunpack.c.h.s8.bf16 %v3466
          %v3513 = vunpack.c.h.s8.bf16 %v3467
          %v3514 = vunpack.c.l.s8.bf16 %v3468
          %v3515 = vunpack.c.l.s8.bf16 %v3469
          %v3516 = vunpack.c.h.s8.bf16 %v3468
          %v3517 = vunpack.c.h.s8.bf16 %v3469
          %3518 = vmatprep.subr.bf16.mxu0 %v3471
          %3519 = vmatpush1.bf16.msra.mxu0 %v3470
          %3520 = vmatprep.subr.bf16.mxu0 %v3473
          %3521 = vmatpush1.bf16.msra.mxu0 %v3472
          %3522 = vmatprep.subr.bf16.mxu0 %v3475
          %3523 = vmatpush1.bf16.msra.mxu0 %v3474
          %3524 = vmatprep.subr.bf16.mxu0 %v3477
          %3525 = vmatpush1.bf16.msra.mxu0 %v3476
          %3526 = vmatprep.subr.bf16.mxu0 %v3479
          %3527 = vmatpush1.bf16.msra.mxu0 %v3478
          %3528 = vmatprep.subr.bf16.mxu0 %v3481
          %3529 = vmatpush1.bf16.msra.mxu0 %v3480
          %3530 = vmatprep.subr.bf16.mxu0 %v3483
          %3531 = vmatpush1.bf16.msra.mxu0 %v3482
          %3532 = vmatprep.subr.bf16.mxu0 %v3485
          %3533 = vmatpush1.bf16.msra.mxu0 %v3484
          %3534 = vmatprep.subr.bf16.mxu0 %v3487
          %3535 = vmatpush1.bf16.msra.mxu0 %v3486
          %3536 = vmatprep.subr.bf16.mxu0 %v3489
          %3537 = vmatpush1.bf16.msra.mxu0 %v3488
          %3538 = vmatprep.subr.bf16.mxu0 %v3491
          %3539 = vmatpush1.bf16.msra.mxu0 %v3490
          %3540 = vmatprep.subr.bf16.mxu0 %v3493
          %3541 = vmatpush1.bf16.msra.mxu0 %v3492
          %3542 = vmatprep.subr.bf16.mxu0 %v3495
          %3543 = vmatpush1.bf16.msra.mxu0 %v3494
          %3544 = vmatprep.subr.bf16.mxu0 %v3497
          %3545 = vmatpush1.bf16.msra.mxu0 %v3496
          %3546 = vmatprep.subr.bf16.mxu0 %v3499
          %3547 = vmatpush1.bf16.msra.mxu0 %v3498
          %3548 = vmatprep.subr.bf16.mxu0 %v3501
          %3549 = vmatpush1.bf16.msra.mxu0 %v3500
          %3550 = vmatprep.mubr.bf16.mxu0 %v3444
          %3551 = vmatmul.mubr.bf16.gmra.mrb[0].mxu0 %v3443
          %v3552 = vpop.f32.mrb[0].mxu0
          %v3553 = vadd.f32 0.0, %v3552
          %v3554 = vpop.f32.mrb[0].mxu0
          %v3555 = vadd.f32 0.0, %v3554
          %v3556 = vpop.f32.mrb[0].mxu0
          %v3557 = vpop.f32.mrb[0].mxu0
          %3558 = vdwg.mxu0
          %3559 = vmatprep.subr.bf16.mxu0 %v3503
          %3560 = vmatpush1.bf16.msra.mxu0 %v3502
          %3561 = vmatprep.subr.bf16.mxu0 %v3505
          %3562 = vmatpush1.bf16.msra.mxu0 %v3504
          %3563 = vmatprep.subr.bf16.mxu0 %v3507
          %3564 = vmatpush1.bf16.msra.mxu0 %v3506
          %3565 = vmatprep.subr.bf16.mxu0 %v3509
          %3566 = vmatpush1.bf16.msra.mxu0 %v3508
          %3567 = vmatprep.subr.bf16.mxu0 %v3511
          %3568 = vmatpush1.bf16.msra.mxu0 %v3510
          %3569 = vmatprep.subr.bf16.mxu0 %v3513
          %3570 = vmatpush1.bf16.msra.mxu0 %v3512
          %3571 = vmatprep.subr.bf16.mxu0 %v3515
          %3572 = vmatpush1.bf16.msra.mxu0 %v3514
          %3573 = vmatprep.subr.bf16.mxu0 %v3517
          %3574 = vmatpush1.bf16.msra.mxu0 %v3516
          %3575 = vmatprep.subr.bf16.mxu0 0
          %3576 = vmatpush1.bf16.msra.mxu0 0
          %3577 = vmatprep.subr.bf16.mxu0 0
          %3578 = vmatpush1.bf16.msra.mxu0 0
          %3579 = vmatprep.subr.bf16.mxu0 0
          %3580 = vmatpush1.bf16.msra.mxu0 0
          %3581 = vmatprep.subr.bf16.mxu0 0
          %3582 = vmatpush1.bf16.msra.mxu0 0
          %3583 = vmatprep.subr.bf16.mxu0 0
          %3584 = vmatpush1.bf16.msra.mxu0 0
          %3585 = vmatprep.subr.bf16.mxu0 0
          %3586 = vmatpush1.bf16.msra.mxu0 0
          %3587 = vmatprep.subr.bf16.mxu0 0
          %3588 = vmatpush1.bf16.msra.mxu0 0
          %3589 = vmatprep.subr.bf16.mxu0 0
          %3590 = vmatpush1.bf16.msra.mxu0 0
          %3591 = vmatprep.mubr.bf16.mxu0 0
          %3592 = vmatmul.mubr.bf16.gmra.mrb[0].mxu0 %v3445
          %v3593 = vpop.f32.mrb[0].mxu0
          %v3594 = vadd.f32 %v3553, %v3593
          %v3595 = vpop.f32.mrb[0].mxu0
          %v3596 = vadd.f32 %v3555, %v3595
          %v3597 = vpop.f32.mrb[0].mxu0
          %v3598 = vpop.f32.mrb[0].mxu0
          %3599 = vdwg.mxu0
          %v3600 = vld [vmem:[#allocation24] sm:$0x3]
          %v3602 = vlaneseq
          %v3603 = vshrl.u32 %v3602, 7
          %v3604 = vsub.s32 0, %v3603
          %v3605 = vrot.slane %v3600, %v3604
          %v3606 = vlaneseq
          %v3607 = vshrl.u32 %v3606, 7
          %v3608 = vsub.s32 1, %v3607
          %v3609 = vrot.slane %v3600, %v3608
          %v3612 = vmul.f32 %v3594, %v3605
          %v3613 = vmul.f32 %v3596, %v3609
          %v3614 = vld [vmem:[#allocation26] sm:$0x3]
          %v3616 = vlaneseq
          %v3617 = vshrl.u32 %v3616, 7
          %v3618 = vsub.s32 0, %v3617
          %v3619 = vrot.slane %v3614, %v3618
          %v3620 = vlaneseq
          %v3621 = vshrl.u32 %v3620, 7
          %v3622 = vsub.s32 1, %v3621
          %v3623 = vrot.slane %v3614, %v3622
          %v3626 = vadd.f32 %v3612, %v3619
          %v3627 = vadd.f32 %v3613, %v3623
          %v3628 = vmax.f32 %v3626, 0.0
          %v3629 = vmax.f32 %v3627, 0.0
          %v3630 = vpack.c.bf16 %v3628, %v3628
          %v3631 = vpack.c.bf16 %v3629, %v3629
          %v3632 = vld [vmem:[#allocation27] sm:$0xff]
          %v3633 = vld [vmem:[#allocation27 + $0x8] sm:$0xff]
          %v3634 = vld [vmem:[#allocation27 + $0x10] sm:$0xff]
          %v3635 = vld [vmem:[#allocation27 + $0x18] sm:$0xff]
          %v3636 = vld [vmem:[#allocation27 + $0x20] sm:$0xff]
          %v3637 = vld [vmem:[#allocation27 + $0x28] sm:$0xff]
          %v3638 = vld [vmem:[#allocation27 + $0x30] sm:$0xff]
          %v3639 = vld [vmem:[#allocation27 + $0x38] sm:$0xff]
          %v3640 = vunpack.c.l.s8.bf16 %v3632
          %v3641 = vunpack.c.h.s8.bf16 %v3632
          %v3642 = vunpack.c.l.s8.bf16 %v3633
          %v3643 = vunpack.c.h.s8.bf16 %v3633
          %v3644 = vunpack.c.l.s8.bf16 %v3634
          %v3645 = vunpack.c.h.s8.bf16 %v3634
          %v3646 = vunpack.c.l.s8.bf16 %v3635
          %v3647 = vunpack.c.h.s8.bf16 %v3635
          %v3648 = vunpack.c.l.s8.bf16 %v3636
          %v3649 = vunpack.c.h.s8.bf16 %v3636
          %v3650 = vunpack.c.l.s8.bf16 %v3637
          %v3651 = vunpack.c.h.s8.bf16 %v3637
          %v3652 = vunpack.c.l.s8.bf16 %v3638
          %v3653 = vunpack.c.h.s8.bf16 %v3638
          %v3654 = vunpack.c.l.s8.bf16 %v3639
          %v3655 = vunpack.c.h.s8.bf16 %v3639
          %3656 = vmatprep.subr.bf16.mxu0 0
          %3657 = vmatpush1.bf16.msra.mxu0 %v3640
          %3658 = vmatprep.subr.bf16.mxu0 0
          %3659 = vmatpush1.bf16.msra.mxu0 %v3641
          %3660 = vmatprep.subr.bf16.mxu0 0
          %3661 = vmatpush1.bf16.msra.mxu0 %v3642
          %3662 = vmatprep.subr.bf16.mxu0 0
          %3663 = vmatpush1.bf16.msra.mxu0 %v3643
          %3664 = vmatprep.subr.bf16.mxu0 0
          %3665 = vmatpush1.bf16.msra.mxu0 %v3644
          %3666 = vmatprep.subr.bf16.mxu0 0
          %3667 = vmatpush1.bf16.msra.mxu0 %v3645
          %3668 = vmatprep.subr.bf16.mxu0 0
          %3669 = vmatpush1.bf16.msra.mxu0 %v3646
          %3670 = vmatprep.subr.bf16.mxu0 0
          %3671 = vmatpush1.bf16.msra.mxu0 %v3647
          %3672 = vmatprep.subr.bf16.mxu0 0
          %3673 = vmatpush1.bf16.msra.mxu0 %v3648
          %3674 = vmatprep.subr.bf16.mxu0 0
          %3675 = vmatpush1.bf16.msra.mxu0 %v3649
          %3676 = vmatprep.subr.bf16.mxu0 0
          %3677 = vmatpush1.bf16.msra.mxu0 %v3650
          %3678 = vmatprep.subr.bf16.mxu0 0
          %3679 = vmatpush1.bf16.msra.mxu0 %v3651
          %3680 = vmatprep.subr.bf16.mxu0 0
          %3681 = vmatpush1.bf16.msra.mxu0 %v3652
          %3682 = vmatprep.subr.bf16.mxu0 0
          %3683 = vmatpush1.bf16.msra.mxu0 %v3653
          %3684 = vmatprep.subr.bf16.mxu0 0
          %3685 = vmatpush1.bf16.msra.mxu0 %v3654
          %3686 = vmatprep.subr.bf16.mxu0 0
          %3687 = vmatpush1.bf16.msra.mxu0 %v3655
          %3688 = vmatprep.mubr.bf16.mxu0 %v3631
          %3689 = vmatmul.mubr.bf16.gmra.mrb[0].mxu0 %v3630
          %v3690 = vpop.f32.mrb[0].mxu0
          %v3691 = vadd.f32 0.0, %v3690
          %v3692 = vpop.f32.mrb[0].mxu0
          %v3693 = vpop.f32.mrb[0].mxu0
          %v3694 = vpop.f32.mrb[0].mxu0
          %3695 = vdwg.mxu0
          %v3696 = vld [vmem:[#allocation29] sm:$0x1]
          %v3698 = vlaneseq
          %v3699 = vshrl.u32 %v3698, 7
          %v3700 = vsub.s32 0, %v3699
          %v3701 = vrot.slane %v3696, %v3700
          %v3703 = vmul.f32 %v3691, %v3701
          %v3704 = vld [vmem:[#allocation30] sm:$0x1]
          %v3706 = vlaneseq
          %v3707 = vshrl.u32 %v3706, 7
          %v3708 = vsub.s32 0, %v3707
          %v3709 = vrot.slane %v3704, %v3708
          %v3711 = vadd.f32 %v3703, %v3709
          %3712 = vst [vmem:[#allocation32] sm:$0xff] %v3711
        $region176: #{linear_net_forward.1} parent=95 // pred_fallthru
          _
        // Predicated region
        $region177: #{linear_net_forward.1} parent=95 // pred_check
          %p3713 = pneg %p479
        $region178: #{linear_net_forward.1} parent=95 // pred_check_branch
          %3715 = sbr.rel (%p3713) target = $region180
        $region179: #{linear_net_forward.1} parent=95 // pred_region
          %s3717 = ssub.s32 128, 128
          %3718 = vsyncadd [#allocation5], %s3717
          %s3720 = sshll.u32 [#allocation32], 4
          %s3721 = int_to_ptr.vmem [resolvable:$true] %s3720
          %3723 = dma.vmem_to_hbm [thread:$0]  %s3721, 128, %s19, [#allocation5]
        $region180: #{linear_net_forward.1} parent=95 // pred_fallthru
          _
        // Predicated region
        $region181: #{linear_net_forward.1} parent=95 // pred_check
          %p3724 = pneg %p479
        $region182: #{linear_net_forward.1} parent=95 // pred_check_branch
          %3726 = sbr.rel (%p3724) target = $region184
        $region183: #{linear_net_forward.1} parent=95 // pred_region
          %3727 = dma.done [#allocation5], 128
        $region184: #{linear_net_forward.1} parent=95 // pred_fallthru
          _
      $region96: #{linear_net_forward.1} parent=5 // pred_fallthru
        _
      %p3728 = scmp.le.s32.totalorder 2, %s42
      // Predicated region
      $region185: #{linear_net_forward.1} parent=5 // pred_check
        %p3729 = pneg %p3728
      $region186: #{linear_net_forward.1} parent=5 // pred_check_branch
        %3731 = sbr.rel (%p3729) target = $region188
      $region187: #{linear_net_forward.1} parent=5 // pred_region
        %s3732 = ssub.s32 %s42, 2
      $region188: #{linear_net_forward.1} parent=5 // pred_fallthru
        _
    $region6: #{linear_net_forward.1} parent=1 // loop_footer
      %s46 = sadd.s32 1, %s42
    $region7: #{linear_net_forward.1} parent=1 // loop_footer_branch
      %41 = sbr.rel target = $region3
    $region8: #{linear_net_forward.1} parent=1 // loop_exit
      _
    %3733 = vsyncpa [#allocation4], 1
    %s3734 = scalar_lea.sflag [#allocation4], 1
    %3735 = vsyncpa %s3734, 1
    %3736 = vsyncpa [#allocation7], 1
    %s3737 = scalar_lea.sflag [#allocation7], 1
    %3738 = vsyncpa %s3737, 1
    %3739 = vsyncpa [#allocation10], 1
    %s3740 = scalar_lea.sflag [#allocation10], 1
    %3741 = vsyncpa %s3740, 1
    %3742 = vsyncpa [#allocation13], 1
    %3743 = vsyncpa [#allocation16], 1
    %3744 = vsyncpa [#allocation19], 1
    %3745 = vsyncpa [#allocation22], 1
    %3746 = vsyncpa [#allocation25], 1
    %3747 = vsyncpa [#allocation28], 1
    %3748 = vsyncpa [#allocation31], 1
    %3749 = vsyncpa [#allocation5], 1
    %s3750 = scalar_lea.sflag [#allocation5], 1
    %3751 = vsyncpa %s3750, 1

</llo_original>
